<compile_context>
chip_gen: v7x
topology: tpu7x:2x2x1
jax: 0.10.0
libtpu: 0.0.40
codegen_flags: <defaults>
</compile_context>

<pallas_src>
import functools

import numpy as np
import jax
import jax.numpy as jnp
from jax.experimental import pallas as pl
from jax.experimental.pallas import tpu as pltpu


# ---------------- host-side constant builders (trace-time numpy) ----------------

def _shift_matrix(batch, t, d):
    """(B*T, B*T) 0/1 matrix with (S @ x)[b*T + t0] = x[b*T + t0 + d] (0 outside batch)."""
    n = batch * t
    m = np.zeros((n, n), np.float32)
    for b in range(batch):
        for t0 in range(t):
            src = t0 + d
            if 0 <= src < t:
                m[b * t + t0, b * t + src] = 1.0
    return m


def _upsample_matrix(batch, t, scale):
    """(B*scale*T, B*T) nearest-neighbour upsample along T, per batch, flat layout."""
    m = np.zeros((batch * scale * t, batch * t), np.float32)
    for b in range(batch):
        for t0 in range(t):
            for k in range(scale):
                m[b * scale * t + t0 * scale + k, b * t + t0] = 1.0
    return m


# ---------------- fused Pallas kernel ----------------

def _tcfpn_fused_kernel(*refs, n_stages):
    out_ref = refs[-1]
    it = iter(refs[:-1])
    nxt = lambda: next(it)

    dot = lambda a, b: jnp.dot(a, b, preferred_element_type=jnp.float32)

    def conv_same(x, w_ref, b_ref, shifts):
        # y[t] = sum_k x[t + k - p] @ w[k]  ("same" padding, odd K); shifted reads
        # realized as matmuls with per-batch shift matrices (batch-boundary zeros).
        k_taps = w_ref.shape[0]
        p = (k_taps - 1) // 2
        acc = dot(x, w_ref[p])
        si = 0
        for k in range(k_taps):
            if k == p:
                continue
            acc = acc + dot(dot(shifts[si][...], x), w_ref[k])
            si += 1
        return acc + b_ref[0]

    def relu_pool(y):
        n, c = y.shape
        y = jnp.maximum(y, 0.0)
        return jnp.max(y.reshape(n // 2, 2, c), axis=1)      # MaxPool1d(2)

    def head(x, lw_ref, lb_ref):
        logits = dot(x, lw_ref[...]) + lb_ref[0]
        m = jnp.max(logits, axis=-1, keepdims=True)
        e = jnp.exp(logits - m)
        return e * pl.reciprocal(jnp.sum(e, axis=-1, keepdims=True), approx=True)

    x = nxt()[...]                                           # (B*T, Cin)

    # ---- encoders: (BN-folded) conv -> ReLU -> MaxPool(2)
    enc_out, enc_shifts = [], []
    for _ in range(n_stages):
        w_ref, b_ref = nxt(), nxt()
        shifts = [nxt() for _ in range(w_ref.shape[0] - 1)]
        enc_shifts.append(shifts)
        x = relu_pool(conv_same(x, w_ref, b_ref, shifts))
        enc_out.append(x)

    # ---- mid: 1x1 conv; head = linear + softmax, upsampled x 2**n_stages
    m_w, m_b, m_lw, m_lb, u_mid = nxt(), nxt(), nxt(), nxt(), nxt()
    x = dot(x, m_w[...]) + m_b[0]
    acc = dot(u_mid[...], head(x, m_lw, m_lb))               # running mean accumulator

    # ---- decoders
    for j in range(n_stages):
        u_in = nxt()
        x = dot(u_in[...], x)                                # nearest upsample x2
        if j != n_stages - 1:                                # last decoder: aux is None
            aw, ab = nxt(), nxt()
            x = x + dot(enc_out[1 - j], aw[...]) + ab[0]     # 1x1 aux conv + add
        cw, cb, lw, lb = nxt(), nxt(), nxt(), nxt()
        x = conv_same(x, cw, cb, enc_shifts[n_stages - 1 - j])
        h = head(x, lw, lb)
        if j != n_stages - 1:
            h = dot(nxt()[...], h)                           # head upsample 2**(n-1-j)
        acc = acc + h

    out_ref[...] = acc * 0.25                                # mean over 4 heads


# ---------------- wrapper ----------------

def tcfpn_forward(params, img, au):
    enc_ps = params["encoders"]
    n_stages = len(enc_ps)
    assert n_stages == 3, "TCFPN forward wiring assumes 3 encoder/decoder stages"
    k_taps = enc_ps[0]["w"].shape[0]
    assert k_taps % 2 == 1, "'same' padding only matches PyTorch for odd kernel_size"
    p = (k_taps - 1) // 2
    eps = 1e-5

    b_sz, t_len, _ = img.shape
    assert t_len % (2 ** n_stages) == 0

    x0 = jnp.concatenate([img, au], axis=-1).astype(jnp.float32)
    x0 = x0.reshape(b_sz * t_len, -1)

    args = [x0]
    t_cur = t_len
    for ep in enc_ps:
        # fold eval-mode BatchNorm into the conv weights/bias
        s = ep["gamma"] * jax.lax.rsqrt(ep["var"] + eps)
        w_eff = ep["w"] * s[None, None, :]
        b_eff = (ep["b"] - ep["mean"]) * s + ep["beta"]
        shifts = [jnp.asarray(_shift_matrix(b_sz, t_cur, k - p))
                  for k in range(k_taps) if k != p]
        args += [w_eff, b_eff.reshape(1, -1)] + shifts
        t_cur //= 2                                          # MaxPool1d(2)

    pm = params["mid"]
    args += [pm["w"], pm["b"].reshape(1, -1), pm["lw"], pm["lb"].reshape(1, -1),
             jnp.asarray(_upsample_matrix(b_sz, t_cur, 2 ** n_stages))]

    for j, dp in enumerate(params["decoders"]):
        args.append(jnp.asarray(_upsample_matrix(b_sz, t_cur, 2)))   # input upsample x2
        t_cur *= 2
        if j != n_stages - 1:
            args += [dp["aw"], dp["ab"].reshape(1, -1)]
        args += [dp["w"], dp["b"].reshape(1, -1), dp["lw"], dp["lb"].reshape(1, -1)]
        scale = 2 ** (n_stages - 1 - j)
        if scale > 1:
            args.append(jnp.asarray(_upsample_matrix(b_sz, t_cur, scale)))

    num_classes = params["decoders"][0]["lw"].shape[-1]
    vmem = pl.BlockSpec(memory_space=pltpu.MemorySpace.VMEM)
    out = pl.pallas_call(
        functools.partial(_tcfpn_fused_kernel, n_stages=n_stages),
        out_shape=jax.ShapeDtypeStruct((b_sz * t_len, num_classes), jnp.float32),
        in_specs=[vmem] * len(args),
        out_specs=vmem,
    )(*args)
    return out.reshape(b_sz, t_len, num_classes)


# ---------------- parameter init ----------------

def init_params(key, in_channels, layers, num_classes, kernel_size):
    assert num_classes == 15, "Mid_TCFPN linear is hard-coded to 15 classes"
    keys = iter(jax.random.split(key, 64))
    nrm = lambda shape, s=0.1: s * jax.random.normal(next(keys), shape, jnp.float32)

    params = {"encoders": [], "decoders": []}
    cin = in_channels
    for cout in layers:
        params["encoders"].append(dict(
            w=nrm((kernel_size, cin, cout)),
            b=nrm((cout,)),
            gamma=1.0 + nrm((cout,)),
            beta=nrm((cout,)),
            mean=nrm((cout,)),
            var=1.0 + jnp.abs(nrm((cout,))),
        ))
        cin = cout

    c0 = layers[0]
    params["mid"] = dict(
        w=nrm((layers[-1], c0)), b=nrm((c0,)),
        lw=nrm((c0, 15)), lb=nrm((15,)),
    )

    n_dec = len(layers)
    for j in range(n_dec):                       # forward (ed_modules) order, i = L-1-j
        d = dict(
            w=nrm((kernel_size, c0, c0)), b=nrm((c0,)),
            lw=nrm((c0, num_classes)), lb=nrm((num_classes,)),
        )
        if j != n_dec - 1:                       # 3rd decoder gets aux=None in forward
            aux_in = layers[n_dec - 2 - j]       # == layers[i-1]
            d["aw"] = nrm((aux_in, c0))
            d["ab"] = nrm((c0,))
        params["decoders"].append(d)
    return params


if __name__ == "__main__":
    key = jax.random.PRNGKey(0)
    k_img, k_au, k_p = jax.random.split(key, 3)

    B, T = 2, 16
    c_img, c_au = 6, 2
    layers = [8, 16, 32]
    num_classes = 15          # must be 15 so decoder heads stack with the Mid head
    kernel_size = 3

    img = jax.random.normal(k_img, (B, T, c_img), jnp.float32)
    au = jax.random.normal(k_au, (B, T, c_au), jnp.float32)
    params = init_params(k_p, c_img + c_au, layers, num_classes, kernel_size)

    out = jax.jit(tcfpn_forward)(params, img, au)
    jax.block_until_ready(out)
    assert out.shape == (B, T, num_classes), out.shape
    assert bool(jnp.all(jnp.isfinite(out)))
    print("KERNEL_OK")
</pallas_src>

<mosaic_0001>
module attributes {stable_mosaic.version = 11 : i64} {
  func.func @_tcfpn_fused_kernel(%arg0: memref<32x8xf32, #tpu.memory_space<vmem>>, %arg1: memref<3x8x8xf32, #tpu.memory_space<vmem>>, %arg2: memref<1x8xf32, #tpu.memory_space<vmem>>, %arg3: memref<32x32xf32, #tpu.memory_space<vmem>>, %arg4: memref<32x32xf32, #tpu.memory_space<vmem>>, %arg5: memref<3x8x16xf32, #tpu.memory_space<vmem>>, %arg6: memref<1x16xf32, #tpu.memory_space<vmem>>, %arg7: memref<16x16xf32, #tpu.memory_space<vmem>>, %arg8: memref<16x16xf32, #tpu.memory_space<vmem>>, %arg9: memref<3x16x32xf32, #tpu.memory_space<vmem>>, %arg10: memref<1x32xf32, #tpu.memory_space<vmem>>, %arg11: memref<8x8xf32, #tpu.memory_space<vmem>>, %arg12: memref<8x8xf32, #tpu.memory_space<vmem>>, %arg13: memref<32x8xf32, #tpu.memory_space<vmem>>, %arg14: memref<1x8xf32, #tpu.memory_space<vmem>>, %arg15: memref<8x15xf32, #tpu.memory_space<vmem>>, %arg16: memref<1x15xf32, #tpu.memory_space<vmem>>, %arg17: memref<32x4xf32, #tpu.memory_space<vmem>>, %arg18: memref<8x4xf32, #tpu.memory_space<vmem>>, %arg19: memref<16x8xf32, #tpu.memory_space<vmem>>, %arg20: memref<1x8xf32, #tpu.memory_space<vmem>>, %arg21: memref<3x8x8xf32, #tpu.memory_space<vmem>>, %arg22: memref<1x8xf32, #tpu.memory_space<vmem>>, %arg23: memref<8x15xf32, #tpu.memory_space<vmem>>, %arg24: memref<1x15xf32, #tpu.memory_space<vmem>>, %arg25: memref<32x8xf32, #tpu.memory_space<vmem>>, %arg26: memref<16x8xf32, #tpu.memory_space<vmem>>, %arg27: memref<8x8xf32, #tpu.memory_space<vmem>>, %arg28: memref<1x8xf32, #tpu.memory_space<vmem>>, %arg29: memref<3x8x8xf32, #tpu.memory_space<vmem>>, %arg30: memref<1x8xf32, #tpu.memory_space<vmem>>, %arg31: memref<8x15xf32, #tpu.memory_space<vmem>>, %arg32: memref<1x15xf32, #tpu.memory_space<vmem>>, %arg33: memref<32x16xf32, #tpu.memory_space<vmem>>, %arg34: memref<32x16xf32, #tpu.memory_space<vmem>>, %arg35: memref<3x8x8xf32, #tpu.memory_space<vmem>>, %arg36: memref<1x8xf32, #tpu.memory_space<vmem>>, %arg37: memref<8x15xf32, #tpu.memory_space<vmem>>, %arg38: memref<1x15xf32, #tpu.memory_space<vmem>>, %arg39: memref<32x15xf32, #tpu.memory_space<vmem>>) attributes {dimension_semantics = [], scalar_prefetch = 0 : i64, scratch_operands = 0 : i64, tpu.core_type = #tpu.core_type<tc>} {
    %c0 = arith.constant 0 : index
    %c0_0 = arith.constant 0 : index
    %0 = vector.load %arg0[%c0, %c0_0] : memref<32x8xf32, #tpu.memory_space<vmem>>, vector<32x8xf32>
    %c1 = arith.constant 1 : index
    %c0_1 = arith.constant 0 : index
    %c0_2 = arith.constant 0 : index
    %1 = vector.load %arg1[%c1, %c0_1, %c0_2] : memref<3x8x8xf32, #tpu.memory_space<vmem>>, vector<1x8x8xf32>
    %2 = vector.shape_cast %1 : vector<1x8x8xf32> to vector<8x8xf32>
    %cst = arith.constant dense<0.000000e+00> : vector<32x8xf32>
    %3 = tpu.matmul %0, %2, %cst {dimension_numbers = #tpu.dot_dimension_numbers<[1], [0], [0], [1], [0, 0, 1, 1], [], []>} : vector<32x8xf32>, vector<8x8xf32>, vector<32x8xf32> -> vector<32x8xf32>
    %c0_3 = arith.constant 0 : index
    %c0_4 = arith.constant 0 : index
    %4 = vector.load %arg3[%c0_3, %c0_4] : memref<32x32xf32, #tpu.memory_space<vmem>>, vector<32x32xf32>
    %cst_5 = arith.constant dense<0.000000e+00> : vector<32x8xf32>
    %5 = tpu.matmul %4, %0, %cst_5 {dimension_numbers = #tpu.dot_dimension_numbers<[1], [0], [0], [1], [0, 0, 1, 1], [], []>} : vector<32x32xf32>, vector<32x8xf32>, vector<32x8xf32> -> vector<32x8xf32>
    %c0_6 = arith.constant 0 : index
    %c0_7 = arith.constant 0 : index
    %c0_8 = arith.constant 0 : index
    %6 = vector.load %arg1[%c0_6, %c0_7, %c0_8] : memref<3x8x8xf32, #tpu.memory_space<vmem>>, vector<1x8x8xf32>
    %7 = vector.shape_cast %6 : vector<1x8x8xf32> to vector<8x8xf32>
    %cst_9 = arith.constant dense<0.000000e+00> : vector<32x8xf32>
    %8 = tpu.matmul %5, %7, %cst_9 {dimension_numbers = #tpu.dot_dimension_numbers<[1], [0], [0], [1], [0, 0, 1, 1], [], []>} : vector<32x8xf32>, vector<8x8xf32>, vector<32x8xf32> -> vector<32x8xf32>
    %9 = arith.addf %3, %8 : vector<32x8xf32>
    %c0_10 = arith.constant 0 : index
    %c0_11 = arith.constant 0 : index
    %10 = vector.load %arg4[%c0_10, %c0_11] : memref<32x32xf32, #tpu.memory_space<vmem>>, vector<32x32xf32>
    %cst_12 = arith.constant dense<0.000000e+00> : vector<32x8xf32>
    %11 = tpu.matmul %10, %0, %cst_12 {dimension_numbers = #tpu.dot_dimension_numbers<[1], [0], [0], [1], [0, 0, 1, 1], [], []>} : vector<32x32xf32>, vector<32x8xf32>, vector<32x8xf32> -> vector<32x8xf32>
    %c2 = arith.constant 2 : index
    %c0_13 = arith.constant 0 : index
    %c0_14 = arith.constant 0 : index
    %12 = vector.load %arg1[%c2, %c0_13, %c0_14] : memref<3x8x8xf32, #tpu.memory_space<vmem>>, vector<1x8x8xf32>
    %13 = vector.shape_cast %12 : vector<1x8x8xf32> to vector<8x8xf32>
    %cst_15 = arith.constant dense<0.000000e+00> : vector<32x8xf32>
    %14 = tpu.matmul %11, %13, %cst_15 {dimension_numbers = #tpu.dot_dimension_numbers<[1], [0], [0], [1], [0, 0, 1, 1], [], []>} : vector<32x8xf32>, vector<8x8xf32>, vector<32x8xf32> -> vector<32x8xf32>
    %15 = arith.addf %9, %14 : vector<32x8xf32>
    %c0_16 = arith.constant 0 : index
    %c0_17 = arith.constant 0 : index
    %16 = vector.load %arg2[%c0_16, %c0_17] : memref<1x8xf32, #tpu.memory_space<vmem>>, vector<1x8xf32>
    %17 = vector.shape_cast %16 : vector<1x8xf32> to vector<8xf32>
    %18 = vector.shape_cast %17 : vector<8xf32> to vector<1x8xf32>
    %19 = vector.broadcast %18 : vector<1x8xf32> to vector<32x8xf32>
    %20 = arith.addf %15, %19 : vector<32x8xf32>
    %cst_18 = arith.constant 0.000000e+00 : f32
    %21 = vector.broadcast %cst_18 : f32 to vector<32x8xf32>
    %22 = arith.maximumf %20, %21 : vector<32x8xf32>
    %23 = vector.shape_cast %22 : vector<32x8xf32> to vector<16x2x8xf32>
    %cst_19 = arith.constant dense<0xFF800000> : vector<16x8xf32>
    %24 = vector.multi_reduction <maximumf>, %23, %cst_19 [1] : vector<16x2x8xf32> to vector<16x8xf32>
    %c1_20 = arith.constant 1 : index
    %c0_21 = arith.constant 0 : index
    %c0_22 = arith.constant 0 : index
    %25 = vector.load %arg5[%c1_20, %c0_21, %c0_22] : memref<3x8x16xf32, #tpu.memory_space<vmem>>, vector<1x8x16xf32>
    %26 = vector.shape_cast %25 : vector<1x8x16xf32> to vector<8x16xf32>
    %cst_23 = arith.constant dense<0.000000e+00> : vector<16x16xf32>
    %27 = tpu.matmul %24, %26, %cst_23 {dimension_numbers = #tpu.dot_dimension_numbers<[1], [0], [0], [1], [0, 0, 1, 1], [], []>} : vector<16x8xf32>, vector<8x16xf32>, vector<16x16xf32> -> vector<16x16xf32>
    %c0_24 = arith.constant 0 : index
    %c0_25 = arith.constant 0 : index
    %28 = vector.load %arg7[%c0_24, %c0_25] : memref<16x16xf32, #tpu.memory_space<vmem>>, vector<16x16xf32>
    %cst_26 = arith.constant dense<0.000000e+00> : vector<16x8xf32>
    %29 = tpu.matmul %28, %24, %cst_26 {dimension_numbers = #tpu.dot_dimension_numbers<[1], [0], [0], [1], [0, 0, 1, 1], [], []>} : vector<16x16xf32>, vector<16x8xf32>, vector<16x8xf32> -> vector<16x8xf32>
    %c0_27 = arith.constant 0 : index
    %c0_28 = arith.constant 0 : index
    %c0_29 = arith.constant 0 : index
    %30 = vector.load %arg5[%c0_27, %c0_28, %c0_29] : memref<3x8x16xf32, #tpu.memory_space<vmem>>, vector<1x8x16xf32>
    %31 = vector.shape_cast %30 : vector<1x8x16xf32> to vector<8x16xf32>
    %cst_30 = arith.constant dense<0.000000e+00> : vector<16x16xf32>
    %32 = tpu.matmul %29, %31, %cst_30 {dimension_numbers = #tpu.dot_dimension_numbers<[1], [0], [0], [1], [0, 0, 1, 1], [], []>} : vector<16x8xf32>, vector<8x16xf32>, vector<16x16xf32> -> vector<16x16xf32>
    %33 = arith.addf %27, %32 : vector<16x16xf32>
    %c0_31 = arith.constant 0 : index
    %c0_32 = arith.constant 0 : index
    %34 = vector.load %arg8[%c0_31, %c0_32] : memref<16x16xf32, #tpu.memory_space<vmem>>, vector<16x16xf32>
    %cst_33 = arith.constant dense<0.000000e+00> : vector<16x8xf32>
    %35 = tpu.matmul %34, %24, %cst_33 {dimension_numbers = #tpu.dot_dimension_numbers<[1], [0], [0], [1], [0, 0, 1, 1], [], []>} : vector<16x16xf32>, vector<16x8xf32>, vector<16x8xf32> -> vector<16x8xf32>
    %c2_34 = arith.constant 2 : index
    %c0_35 = arith.constant 0 : index
    %c0_36 = arith.constant 0 : index
    %36 = vector.load %arg5[%c2_34, %c0_35, %c0_36] : memref<3x8x16xf32, #tpu.memory_space<vmem>>, vector<1x8x16xf32>
    %37 = vector.shape_cast %36 : vector<1x8x16xf32> to vector<8x16xf32>
    %cst_37 = arith.constant dense<0.000000e+00> : vector<16x16xf32>
    %38 = tpu.matmul %35, %37, %cst_37 {dimension_numbers = #tpu.dot_dimension_numbers<[1], [0], [0], [1], [0, 0, 1, 1], [], []>} : vector<16x8xf32>, vector<8x16xf32>, vector<16x16xf32> -> vector<16x16xf32>
    %39 = arith.addf %33, %38 : vector<16x16xf32>
    %c0_38 = arith.constant 0 : index
    %c0_39 = arith.constant 0 : index
    %40 = vector.load %arg6[%c0_38, %c0_39] : memref<1x16xf32, #tpu.memory_space<vmem>>, vector<1x16xf32>
    %41 = vector.shape_cast %40 : vector<1x16xf32> to vector<16xf32>
    %42 = vector.shape_cast %41 : vector<16xf32> to vector<1x16xf32>
    %43 = vector.broadcast %42 : vector<1x16xf32> to vector<16x16xf32>
    %44 = arith.addf %39, %43 : vector<16x16xf32>
    %cst_40 = arith.constant 0.000000e+00 : f32
    %45 = vector.broadcast %cst_40 : f32 to vector<16x16xf32>
    %46 = arith.maximumf %44, %45 : vector<16x16xf32>
    %47 = vector.shape_cast %46 : vector<16x16xf32> to vector<8x2x16xf32>
    %cst_41 = arith.constant dense<0xFF800000> : vector<8x16xf32>
    %48 = vector.multi_reduction <maximumf>, %47, %cst_41 [1] : vector<8x2x16xf32> to vector<8x16xf32>
    %c1_42 = arith.constant 1 : index
    %c0_43 = arith.constant 0 : index
    %c0_44 = arith.constant 0 : index
    %49 = vector.load %arg9[%c1_42, %c0_43, %c0_44] : memref<3x16x32xf32, #tpu.memory_space<vmem>>, vector<1x16x32xf32>
    %50 = vector.shape_cast %49 : vector<1x16x32xf32> to vector<16x32xf32>
    %cst_45 = arith.constant dense<0.000000e+00> : vector<8x32xf32>
    %51 = tpu.matmul %48, %50, %cst_45 {dimension_numbers = #tpu.dot_dimension_numbers<[1], [0], [0], [1], [0, 0, 1, 1], [], []>} : vector<8x16xf32>, vector<16x32xf32>, vector<8x32xf32> -> vector<8x32xf32>
    %c0_46 = arith.constant 0 : index
    %c0_47 = arith.constant 0 : index
    %52 = vector.load %arg11[%c0_46, %c0_47] : memref<8x8xf32, #tpu.memory_space<vmem>>, vector<8x8xf32>
    %cst_48 = arith.constant dense<0.000000e+00> : vector<8x16xf32>
    %53 = tpu.matmul %52, %48, %cst_48 {dimension_numbers = #tpu.dot_dimension_numbers<[1], [0], [0], [1], [0, 0, 1, 1], [], []>} : vector<8x8xf32>, vector<8x16xf32>, vector<8x16xf32> -> vector<8x16xf32>
    %c0_49 = arith.constant 0 : index
    %c0_50 = arith.constant 0 : index
    %c0_51 = arith.constant 0 : index
    %54 = vector.load %arg9[%c0_49, %c0_50, %c0_51] : memref<3x16x32xf32, #tpu.memory_space<vmem>>, vector<1x16x32xf32>
    %55 = vector.shape_cast %54 : vector<1x16x32xf32> to vector<16x32xf32>
    %cst_52 = arith.constant dense<0.000000e+00> : vector<8x32xf32>
    %56 = tpu.matmul %53, %55, %cst_52 {dimension_numbers = #tpu.dot_dimension_numbers<[1], [0], [0], [1], [0, 0, 1, 1], [], []>} : vector<8x16xf32>, vector<16x32xf32>, vector<8x32xf32> -> vector<8x32xf32>
    %57 = arith.addf %51, %56 : vector<8x32xf32>
    %c0_53 = arith.constant 0 : index
    %c0_54 = arith.constant 0 : index
    %58 = vector.load %arg12[%c0_53, %c0_54] : memref<8x8xf32, #tpu.memory_space<vmem>>, vector<8x8xf32>
    %cst_55 = arith.constant dense<0.000000e+00> : vector<8x16xf32>
    %59 = tpu.matmul %58, %48, %cst_55 {dimension_numbers = #tpu.dot_dimension_numbers<[1], [0], [0], [1], [0, 0, 1, 1], [], []>} : vector<8x8xf32>, vector<8x16xf32>, vector<8x16xf32> -> vector<8x16xf32>
    %c2_56 = arith.constant 2 : index
    %c0_57 = arith.constant 0 : index
    %c0_58 = arith.constant 0 : index
    %60 = vector.load %arg9[%c2_56, %c0_57, %c0_58] : memref<3x16x32xf32, #tpu.memory_space<vmem>>, vector<1x16x32xf32>
    %61 = vector.shape_cast %60 : vector<1x16x32xf32> to vector<16x32xf32>
    %cst_59 = arith.constant dense<0.000000e+00> : vector<8x32xf32>
    %62 = tpu.matmul %59, %61, %cst_59 {dimension_numbers = #tpu.dot_dimension_numbers<[1], [0], [0], [1], [0, 0, 1, 1], [], []>} : vector<8x16xf32>, vector<16x32xf32>, vector<8x32xf32> -> vector<8x32xf32>
    %63 = arith.addf %57, %62 : vector<8x32xf32>
    %c0_60 = arith.constant 0 : index
    %c0_61 = arith.constant 0 : index
    %64 = vector.load %arg10[%c0_60, %c0_61] : memref<1x32xf32, #tpu.memory_space<vmem>>, vector<1x32xf32>
    %65 = vector.shape_cast %64 : vector<1x32xf32> to vector<32xf32>
    %66 = vector.shape_cast %65 : vector<32xf32> to vector<1x32xf32>
    %67 = vector.broadcast %66 : vector<1x32xf32> to vector<8x32xf32>
    %68 = arith.addf %63, %67 : vector<8x32xf32>
    %cst_62 = arith.constant 0.000000e+00 : f32
    %69 = vector.broadcast %cst_62 : f32 to vector<8x32xf32>
    %70 = arith.maximumf %68, %69 : vector<8x32xf32>
    %71 = vector.shape_cast %70 : vector<8x32xf32> to vector<4x2x32xf32>
    %cst_63 = arith.constant dense<0xFF800000> : vector<4x32xf32>
    %72 = vector.multi_reduction <maximumf>, %71, %cst_63 [1] : vector<4x2x32xf32> to vector<4x32xf32>
    %c0_64 = arith.constant 0 : index
    %c0_65 = arith.constant 0 : index
    %73 = vector.load %arg13[%c0_64, %c0_65] : memref<32x8xf32, #tpu.memory_space<vmem>>, vector<32x8xf32>
    %cst_66 = arith.constant dense<0.000000e+00> : vector<4x8xf32>
    %74 = tpu.matmul %72, %73, %cst_66 {dimension_numbers = #tpu.dot_dimension_numbers<[1], [0], [0], [1], [0, 0, 1, 1], [], []>} : vector<4x32xf32>, vector<32x8xf32>, vector<4x8xf32> -> vector<4x8xf32>
    %c0_67 = arith.constant 0 : index
    %c0_68 = arith.constant 0 : index
    %75 = vector.load %arg14[%c0_67, %c0_68] : memref<1x8xf32, #tpu.memory_space<vmem>>, vector<1x8xf32>
    %76 = vector.shape_cast %75 : vector<1x8xf32> to vector<8xf32>
    %77 = vector.shape_cast %76 : vector<8xf32> to vector<1x8xf32>
    %78 = vector.broadcast %77 : vector<1x8xf32> to vector<4x8xf32>
    %79 = arith.addf %74, %78 : vector<4x8xf32>
    %c0_69 = arith.constant 0 : index
    %c0_70 = arith.constant 0 : index
    %80 = vector.load %arg17[%c0_69, %c0_70] : memref<32x4xf32, #tpu.memory_space<vmem>>, vector<32x4xf32>
    %c0_71 = arith.constant 0 : index
    %c0_72 = arith.constant 0 : index
    %81 = vector.load %arg15[%c0_71, %c0_72] : memref<8x15xf32, #tpu.memory_space<vmem>>, vector<8x15xf32>
    %cst_73 = arith.constant dense<0.000000e+00> : vector<4x15xf32>
    %82 = tpu.matmul %79, %81, %cst_73 {dimension_numbers = #tpu.dot_dimension_numbers<[1], [0], [0], [1], [0, 0, 1, 1], [], []>} : vector<4x8xf32>, vector<8x15xf32>, vector<4x15xf32> -> vector<4x15xf32>
    %c0_74 = arith.constant 0 : index
    %c0_75 = arith.constant 0 : index
    %83 = vector.load %arg16[%c0_74, %c0_75] : memref<1x15xf32, #tpu.memory_space<vmem>>, vector<1x15xf32>
    %84 = vector.shape_cast %83 : vector<1x15xf32> to vector<15xf32>
    %85 = vector.shape_cast %84 : vector<15xf32> to vector<1x15xf32>
    %86 = vector.broadcast %85 : vector<1x15xf32> to vector<4x15xf32>
    %87 = arith.addf %82, %86 : vector<4x15xf32>
    %cst_76 = arith.constant dense<0xFF800000> : vector<4xf32>
    %88 = vector.multi_reduction <maximumf>, %87, %cst_76 [1] : vector<4x15xf32> to vector<4xf32>
    %89 = vector.shape_cast %88 : vector<4xf32> to vector<4x1xf32>
    %90 = vector.broadcast %89 : vector<4x1xf32> to vector<4x15xf32>
    %91 = arith.subf %87, %90 : vector<4x15xf32>
    %92 = math.exp %91 : vector<4x15xf32>
    %cst_77 = arith.constant dense<0.000000e+00> : vector<4xf32>
    %93 = vector.multi_reduction <add>, %92, %cst_77 [1] : vector<4x15xf32> to vector<4xf32>
    %94 = vector.shape_cast %93 : vector<4xf32> to vector<4x1xf32>
    %95 = tpu.reciprocal %94 {approx = true} : vector<4x1xf32> -> vector<4x1xf32>
    %96 = vector.broadcast %95 : vector<4x1xf32> to vector<4x15xf32>
    %97 = arith.mulf %92, %96 : vector<4x15xf32>
    %cst_78 = arith.constant dense<0.000000e+00> : vector<32x15xf32>
    %98 = tpu.matmul %80, %97, %cst_78 {dimension_numbers = #tpu.dot_dimension_numbers<[1], [0], [0], [1], [0, 0, 1, 1], [], []>} : vector<32x4xf32>, vector<4x15xf32>, vector<32x15xf32> -> vector<32x15xf32>
    %c0_79 = arith.constant 0 : index
    %c0_80 = arith.constant 0 : index
    %99 = vector.load %arg18[%c0_79, %c0_80] : memref<8x4xf32, #tpu.memory_space<vmem>>, vector<8x4xf32>
    %cst_81 = arith.constant dense<0.000000e+00> : vector<8x8xf32>
    %100 = tpu.matmul %99, %79, %cst_81 {dimension_numbers = #tpu.dot_dimension_numbers<[1], [0], [0], [1], [0, 0, 1, 1], [], []>} : vector<8x4xf32>, vector<4x8xf32>, vector<8x8xf32> -> vector<8x8xf32>
    %c0_82 = arith.constant 0 : index
    %c0_83 = arith.constant 0 : index
    %101 = vector.load %arg19[%c0_82, %c0_83] : memref<16x8xf32, #tpu.memory_space<vmem>>, vector<16x8xf32>
    %cst_84 = arith.constant dense<0.000000e+00> : vector<8x8xf32>
    %102 = tpu.matmul %48, %101, %cst_84 {dimension_numbers = #tpu.dot_dimension_numbers<[1], [0], [0], [1], [0, 0, 1, 1], [], []>} : vector<8x16xf32>, vector<16x8xf32>, vector<8x8xf32> -> vector<8x8xf32>
    %103 = arith.addf %100, %102 : vector<8x8xf32>
    %c0_85 = arith.constant 0 : index
    %c0_86 = arith.constant 0 : index
    %104 = vector.load %arg20[%c0_85, %c0_86] : memref<1x8xf32, #tpu.memory_space<vmem>>, vector<1x8xf32>
    %105 = vector.shape_cast %104 : vector<1x8xf32> to vector<8xf32>
    %106 = vector.shape_cast %105 : vector<8xf32> to vector<1x8xf32>
    %107 = vector.broadcast %106 : vector<1x8xf32> to vector<8x8xf32>
    %108 = arith.addf %103, %107 : vector<8x8xf32>
    %c1_87 = arith.constant 1 : index
    %c0_88 = arith.constant 0 : index
    %c0_89 = arith.constant 0 : index
    %109 = vector.load %arg21[%c1_87, %c0_88, %c0_89] : memref<3x8x8xf32, #tpu.memory_space<vmem>>, vector<1x8x8xf32>
    %110 = vector.shape_cast %109 : vector<1x8x8xf32> to vector<8x8xf32>
    %cst_90 = arith.constant dense<0.000000e+00> : vector<8x8xf32>
    %111 = tpu.matmul %108, %110, %cst_90 {dimension_numbers = #tpu.dot_dimension_numbers<[1], [0], [0], [1], [0, 0, 1, 1], [], []>} : vector<8x8xf32>, vector<8x8xf32>, vector<8x8xf32> -> vector<8x8xf32>
    %c0_91 = arith.constant 0 : index
    %c0_92 = arith.constant 0 : index
    %112 = vector.load %arg11[%c0_91, %c0_92] : memref<8x8xf32, #tpu.memory_space<vmem>>, vector<8x8xf32>
    %cst_93 = arith.constant dense<0.000000e+00> : vector<8x8xf32>
    %113 = tpu.matmul %112, %108, %cst_93 {dimension_numbers = #tpu.dot_dimension_numbers<[1], [0], [0], [1], [0, 0, 1, 1], [], []>} : vector<8x8xf32>, vector<8x8xf32>, vector<8x8xf32> -> vector<8x8xf32>
    %c0_94 = arith.constant 0 : index
    %c0_95 = arith.constant 0 : index
    %c0_96 = arith.constant 0 : index
    %114 = vector.load %arg21[%c0_94, %c0_95, %c0_96] : memref<3x8x8xf32, #tpu.memory_space<vmem>>, vector<1x8x8xf32>
    %115 = vector.shape_cast %114 : vector<1x8x8xf32> to vector<8x8xf32>
    %cst_97 = arith.constant dense<0.000000e+00> : vector<8x8xf32>
    %116 = tpu.matmul %113, %115, %cst_97 {dimension_numbers = #tpu.dot_dimension_numbers<[1], [0], [0], [1], [0, 0, 1, 1], [], []>} : vector<8x8xf32>, vector<8x8xf32>, vector<8x8xf32> -> vector<8x8xf32>
    %117 = arith.addf %111, %116 : vector<8x8xf32>
    %c0_98 = arith.constant 0 : index
    %c0_99 = arith.constant 0 : index
    %118 = vector.load %arg12[%c0_98, %c0_99] : memref<8x8xf32, #tpu.memory_space<vmem>>, vector<8x8xf32>
    %cst_100 = arith.constant dense<0.000000e+00> : vector<8x8xf32>
    %119 = tpu.matmul %118, %108, %cst_100 {dimension_numbers = #tpu.dot_dimension_numbers<[1], [0], [0], [1], [0, 0, 1, 1], [], []>} : vector<8x8xf32>, vector<8x8xf32>, vector<8x8xf32> -> vector<8x8xf32>
    %c2_101 = arith.constant 2 : index
    %c0_102 = arith.constant 0 : index
    %c0_103 = arith.constant 0 : index
    %120 = vector.load %arg21[%c2_101, %c0_102, %c0_103] : memref<3x8x8xf32, #tpu.memory_space<vmem>>, vector<1x8x8xf32>
    %121 = vector.shape_cast %120 : vector<1x8x8xf32> to vector<8x8xf32>
    %cst_104 = arith.constant dense<0.000000e+00> : vector<8x8xf32>
    %122 = tpu.matmul %119, %121, %cst_104 {dimension_numbers = #tpu.dot_dimension_numbers<[1], [0], [0], [1], [0, 0, 1, 1], [], []>} : vector<8x8xf32>, vector<8x8xf32>, vector<8x8xf32> -> vector<8x8xf32>
    %123 = arith.addf %117, %122 : vector<8x8xf32>
    %c0_105 = arith.constant 0 : index
    %c0_106 = arith.constant 0 : index
    %124 = vector.load %arg22[%c0_105, %c0_106] : memref<1x8xf32, #tpu.memory_space<vmem>>, vector<1x8xf32>
    %125 = vector.shape_cast %124 : vector<1x8xf32> to vector<8xf32>
    %126 = vector.shape_cast %125 : vector<8xf32> to vector<1x8xf32>
    %127 = vector.broadcast %126 : vector<1x8xf32> to vector<8x8xf32>
    %128 = arith.addf %123, %127 : vector<8x8xf32>
    %c0_107 = arith.constant 0 : index
    %c0_108 = arith.constant 0 : index
    %129 = vector.load %arg23[%c0_107, %c0_108] : memref<8x15xf32, #tpu.memory_space<vmem>>, vector<8x15xf32>
    %cst_109 = arith.constant dense<0.000000e+00> : vector<8x15xf32>
    %130 = tpu.matmul %128, %129, %cst_109 {dimension_numbers = #tpu.dot_dimension_numbers<[1], [0], [0], [1], [0, 0, 1, 1], [], []>} : vector<8x8xf32>, vector<8x15xf32>, vector<8x15xf32> -> vector<8x15xf32>
    %c0_110 = arith.constant 0 : index
    %c0_111 = arith.constant 0 : index
    %131 = vector.load %arg24[%c0_110, %c0_111] : memref<1x15xf32, #tpu.memory_space<vmem>>, vector<1x15xf32>
    %132 = vector.shape_cast %131 : vector<1x15xf32> to vector<15xf32>
    %133 = vector.shape_cast %132 : vector<15xf32> to vector<1x15xf32>
    %134 = vector.broadcast %133 : vector<1x15xf32> to vector<8x15xf32>
    %135 = arith.addf %130, %134 : vector<8x15xf32>
    %cst_112 = arith.constant dense<0xFF800000> : vector<8xf32>
    %136 = vector.multi_reduction <maximumf>, %135, %cst_112 [1] : vector<8x15xf32> to vector<8xf32>
    %137 = vector.shape_cast %136 : vector<8xf32> to vector<8x1xf32>
    %138 = vector.broadcast %137 : vector<8x1xf32> to vector<8x15xf32>
    %139 = arith.subf %135, %138 : vector<8x15xf32>
    %140 = math.exp %139 : vector<8x15xf32>
    %cst_113 = arith.constant dense<0.000000e+00> : vector<8xf32>
    %141 = vector.multi_reduction <add>, %140, %cst_113 [1] : vector<8x15xf32> to vector<8xf32>
    %142 = vector.shape_cast %141 : vector<8xf32> to vector<8x1xf32>
    %143 = tpu.reciprocal %142 {approx = true} : vector<8x1xf32> -> vector<8x1xf32>
    %144 = vector.broadcast %143 : vector<8x1xf32> to vector<8x15xf32>
    %145 = arith.mulf %140, %144 : vector<8x15xf32>
    %c0_114 = arith.constant 0 : index
    %c0_115 = arith.constant 0 : index
    %146 = vector.load %arg25[%c0_114, %c0_115] : memref<32x8xf32, #tpu.memory_space<vmem>>, vector<32x8xf32>
    %cst_116 = arith.constant dense<0.000000e+00> : vector<32x15xf32>
    %147 = tpu.matmul %146, %145, %cst_116 {dimension_numbers = #tpu.dot_dimension_numbers<[1], [0], [0], [1], [0, 0, 1, 1], [], []>} : vector<32x8xf32>, vector<8x15xf32>, vector<32x15xf32> -> vector<32x15xf32>
    %148 = arith.addf %98, %147 : vector<32x15xf32>
    %c0_117 = arith.constant 0 : index
    %c0_118 = arith.constant 0 : index
    %149 = vector.load %arg26[%c0_117, %c0_118] : memref<16x8xf32, #tpu.memory_space<vmem>>, vector<16x8xf32>
    %cst_119 = arith.constant dense<0.000000e+00> : vector<16x8xf32>
    %150 = tpu.matmul %149, %128, %cst_119 {dimension_numbers = #tpu.dot_dimension_numbers<[1], [0], [0], [1], [0, 0, 1, 1], [], []>} : vector<16x8xf32>, vector<8x8xf32>, vector<16x8xf32> -> vector<16x8xf32>
    %c0_120 = arith.constant 0 : index
    %c0_121 = arith.constant 0 : index
    %151 = vector.load %arg27[%c0_120, %c0_121] : memref<8x8xf32, #tpu.memory_space<vmem>>, vector<8x8xf32>
    %cst_122 = arith.constant dense<0.000000e+00> : vector<16x8xf32>
    %152 = tpu.matmul %24, %151, %cst_122 {dimension_numbers = #tpu.dot_dimension_numbers<[1], [0], [0], [1], [0, 0, 1, 1], [], []>} : vector<16x8xf32>, vector<8x8xf32>, vector<16x8xf32> -> vector<16x8xf32>
    %153 = arith.addf %150, %152 : vector<16x8xf32>
    %c0_123 = arith.constant 0 : index
    %c0_124 = arith.constant 0 : index
    %154 = vector.load %arg28[%c0_123, %c0_124] : memref<1x8xf32, #tpu.memory_space<vmem>>, vector<1x8xf32>
    %155 = vector.shape_cast %154 : vector<1x8xf32> to vector<8xf32>
    %156 = vector.shape_cast %155 : vector<8xf32> to vector<1x8xf32>
    %157 = vector.broadcast %156 : vector<1x8xf32> to vector<16x8xf32>
    %158 = arith.addf %153, %157 : vector<16x8xf32>
    %c1_125 = arith.constant 1 : index
    %c0_126 = arith.constant 0 : index
    %c0_127 = arith.constant 0 : index
    %159 = vector.load %arg29[%c1_125, %c0_126, %c0_127] : memref<3x8x8xf32, #tpu.memory_space<vmem>>, vector<1x8x8xf32>
    %160 = vector.shape_cast %159 : vector<1x8x8xf32> to vector<8x8xf32>
    %cst_128 = arith.constant dense<0.000000e+00> : vector<16x8xf32>
    %161 = tpu.matmul %158, %160, %cst_128 {dimension_numbers = #tpu.dot_dimension_numbers<[1], [0], [0], [1], [0, 0, 1, 1], [], []>} : vector<16x8xf32>, vector<8x8xf32>, vector<16x8xf32> -> vector<16x8xf32>
    %c0_129 = arith.constant 0 : index
    %c0_130 = arith.constant 0 : index
    %162 = vector.load %arg7[%c0_129, %c0_130] : memref<16x16xf32, #tpu.memory_space<vmem>>, vector<16x16xf32>
    %cst_131 = arith.constant dense<0.000000e+00> : vector<16x8xf32>
    %163 = tpu.matmul %162, %158, %cst_131 {dimension_numbers = #tpu.dot_dimension_numbers<[1], [0], [0], [1], [0, 0, 1, 1], [], []>} : vector<16x16xf32>, vector<16x8xf32>, vector<16x8xf32> -> vector<16x8xf32>
    %c0_132 = arith.constant 0 : index
    %c0_133 = arith.constant 0 : index
    %c0_134 = arith.constant 0 : index
    %164 = vector.load %arg29[%c0_132, %c0_133, %c0_134] : memref<3x8x8xf32, #tpu.memory_space<vmem>>, vector<1x8x8xf32>
    %165 = vector.shape_cast %164 : vector<1x8x8xf32> to vector<8x8xf32>
    %cst_135 = arith.constant dense<0.000000e+00> : vector<16x8xf32>
    %166 = tpu.matmul %163, %165, %cst_135 {dimension_numbers = #tpu.dot_dimension_numbers<[1], [0], [0], [1], [0, 0, 1, 1], [], []>} : vector<16x8xf32>, vector<8x8xf32>, vector<16x8xf32> -> vector<16x8xf32>
    %167 = arith.addf %161, %166 : vector<16x8xf32>
    %c0_136 = arith.constant 0 : index
    %c0_137 = arith.constant 0 : index
    %168 = vector.load %arg8[%c0_136, %c0_137] : memref<16x16xf32, #tpu.memory_space<vmem>>, vector<16x16xf32>
    %cst_138 = arith.constant dense<0.000000e+00> : vector<16x8xf32>
    %169 = tpu.matmul %168, %158, %cst_138 {dimension_numbers = #tpu.dot_dimension_numbers<[1], [0], [0], [1], [0, 0, 1, 1], [], []>} : vector<16x16xf32>, vector<16x8xf32>, vector<16x8xf32> -> vector<16x8xf32>
    %c2_139 = arith.constant 2 : index
    %c0_140 = arith.constant 0 : index
    %c0_141 = arith.constant 0 : index
    %170 = vector.load %arg29[%c2_139, %c0_140, %c0_141] : memref<3x8x8xf32, #tpu.memory_space<vmem>>, vector<1x8x8xf32>
    %171 = vector.shape_cast %170 : vector<1x8x8xf32> to vector<8x8xf32>
    %cst_142 = arith.constant dense<0.000000e+00> : vector<16x8xf32>
    %172 = tpu.matmul %169, %171, %cst_142 {dimension_numbers = #tpu.dot_dimension_numbers<[1], [0], [0], [1], [0, 0, 1, 1], [], []>} : vector<16x8xf32>, vector<8x8xf32>, vector<16x8xf32> -> vector<16x8xf32>
    %173 = arith.addf %167, %172 : vector<16x8xf32>
    %c0_143 = arith.constant 0 : index
    %c0_144 = arith.constant 0 : index
    %174 = vector.load %arg30[%c0_143, %c0_144] : memref<1x8xf32, #tpu.memory_space<vmem>>, vector<1x8xf32>
    %175 = vector.shape_cast %174 : vector<1x8xf32> to vector<8xf32>
    %176 = vector.shape_cast %175 : vector<8xf32> to vector<1x8xf32>
    %177 = vector.broadcast %176 : vector<1x8xf32> to vector<16x8xf32>
    %178 = arith.addf %173, %177 : vector<16x8xf32>
    %c0_145 = arith.constant 0 : index
    %c0_146 = arith.constant 0 : index
    %179 = vector.load %arg31[%c0_145, %c0_146] : memref<8x15xf32, #tpu.memory_space<vmem>>, vector<8x15xf32>
    %cst_147 = arith.constant dense<0.000000e+00> : vector<16x15xf32>
    %180 = tpu.matmul %178, %179, %cst_147 {dimension_numbers = #tpu.dot_dimension_numbers<[1], [0], [0], [1], [0, 0, 1, 1], [], []>} : vector<16x8xf32>, vector<8x15xf32>, vector<16x15xf32> -> vector<16x15xf32>
    %c0_148 = arith.constant 0 : index
    %c0_149 = arith.constant 0 : index
    %181 = vector.load %arg32[%c0_148, %c0_149] : memref<1x15xf32, #tpu.memory_space<vmem>>, vector<1x15xf32>
    %182 = vector.shape_cast %181 : vector<1x15xf32> to vector<15xf32>
    %183 = vector.shape_cast %182 : vector<15xf32> to vector<1x15xf32>
    %184 = vector.broadcast %183 : vector<1x15xf32> to vector<16x15xf32>
    %185 = arith.addf %180, %184 : vector<16x15xf32>
    %cst_150 = arith.constant dense<0xFF800000> : vector<16xf32>
    %186 = vector.multi_reduction <maximumf>, %185, %cst_150 [1] : vector<16x15xf32> to vector<16xf32>
    %187 = vector.shape_cast %186 : vector<16xf32> to vector<16x1xf32>
    %188 = vector.broadcast %187 : vector<16x1xf32> to vector<16x15xf32>
    %189 = arith.subf %185, %188 : vector<16x15xf32>
    %190 = math.exp %189 : vector<16x15xf32>
    %cst_151 = arith.constant dense<0.000000e+00> : vector<16xf32>
    %191 = vector.multi_reduction <add>, %190, %cst_151 [1] : vector<16x15xf32> to vector<16xf32>
    %192 = vector.shape_cast %191 : vector<16xf32> to vector<16x1xf32>
    %193 = tpu.reciprocal %192 {approx = true} : vector<16x1xf32> -> vector<16x1xf32>
    %194 = vector.broadcast %193 : vector<16x1xf32> to vector<16x15xf32>
    %195 = arith.mulf %190, %194 : vector<16x15xf32>
    %c0_152 = arith.constant 0 : index
    %c0_153 = arith.constant 0 : index
    %196 = vector.load %arg33[%c0_152, %c0_153] : memref<32x16xf32, #tpu.memory_space<vmem>>, vector<32x16xf32>
    %cst_154 = arith.constant dense<0.000000e+00> : vector<32x15xf32>
    %197 = tpu.matmul %196, %195, %cst_154 {dimension_numbers = #tpu.dot_dimension_numbers<[1], [0], [0], [1], [0, 0, 1, 1], [], []>} : vector<32x16xf32>, vector<16x15xf32>, vector<32x15xf32> -> vector<32x15xf32>
    %198 = arith.addf %148, %197 : vector<32x15xf32>
    %c0_155 = arith.constant 0 : index
    %c0_156 = arith.constant 0 : index
    %199 = vector.load %arg34[%c0_155, %c0_156] : memref<32x16xf32, #tpu.memory_space<vmem>>, vector<32x16xf32>
    %cst_157 = arith.constant dense<0.000000e+00> : vector<32x8xf32>
    %200 = tpu.matmul %199, %178, %cst_157 {dimension_numbers = #tpu.dot_dimension_numbers<[1], [0], [0], [1], [0, 0, 1, 1], [], []>} : vector<32x16xf32>, vector<16x8xf32>, vector<32x8xf32> -> vector<32x8xf32>
    %c1_158 = arith.constant 1 : index
    %c0_159 = arith.constant 0 : index
    %c0_160 = arith.constant 0 : index
    %201 = vector.load %arg35[%c1_158, %c0_159, %c0_160] : memref<3x8x8xf32, #tpu.memory_space<vmem>>, vector<1x8x8xf32>
    %202 = vector.shape_cast %201 : vector<1x8x8xf32> to vector<8x8xf32>
    %cst_161 = arith.constant dense<0.000000e+00> : vector<32x8xf32>
    %203 = tpu.matmul %200, %202, %cst_161 {dimension_numbers = #tpu.dot_dimension_numbers<[1], [0], [0], [1], [0, 0, 1, 1], [], []>} : vector<32x8xf32>, vector<8x8xf32>, vector<32x8xf32> -> vector<32x8xf32>
    %c0_162 = arith.constant 0 : index
    %c0_163 = arith.constant 0 : index
    %204 = vector.load %arg3[%c0_162, %c0_163] : memref<32x32xf32, #tpu.memory_space<vmem>>, vector<32x32xf32>
    %cst_164 = arith.constant dense<0.000000e+00> : vector<32x8xf32>
    %205 = tpu.matmul %204, %200, %cst_164 {dimension_numbers = #tpu.dot_dimension_numbers<[1], [0], [0], [1], [0, 0, 1, 1], [], []>} : vector<32x32xf32>, vector<32x8xf32>, vector<32x8xf32> -> vector<32x8xf32>
    %c0_165 = arith.constant 0 : index
    %c0_166 = arith.constant 0 : index
    %c0_167 = arith.constant 0 : index
    %206 = vector.load %arg35[%c0_165, %c0_166, %c0_167] : memref<3x8x8xf32, #tpu.memory_space<vmem>>, vector<1x8x8xf32>
    %207 = vector.shape_cast %206 : vector<1x8x8xf32> to vector<8x8xf32>
    %cst_168 = arith.constant dense<0.000000e+00> : vector<32x8xf32>
    %208 = tpu.matmul %205, %207, %cst_168 {dimension_numbers = #tpu.dot_dimension_numbers<[1], [0], [0], [1], [0, 0, 1, 1], [], []>} : vector<32x8xf32>, vector<8x8xf32>, vector<32x8xf32> -> vector<32x8xf32>
    %209 = arith.addf %203, %208 : vector<32x8xf32>
    %c0_169 = arith.constant 0 : index
    %c0_170 = arith.constant 0 : index
    %210 = vector.load %arg4[%c0_169, %c0_170] : memref<32x32xf32, #tpu.memory_space<vmem>>, vector<32x32xf32>
    %cst_171 = arith.constant dense<0.000000e+00> : vector<32x8xf32>
    %211 = tpu.matmul %210, %200, %cst_171 {dimension_numbers = #tpu.dot_dimension_numbers<[1], [0], [0], [1], [0, 0, 1, 1], [], []>} : vector<32x32xf32>, vector<32x8xf32>, vector<32x8xf32> -> vector<32x8xf32>
    %c2_172 = arith.constant 2 : index
    %c0_173 = arith.constant 0 : index
    %c0_174 = arith.constant 0 : index
    %212 = vector.load %arg35[%c2_172, %c0_173, %c0_174] : memref<3x8x8xf32, #tpu.memory_space<vmem>>, vector<1x8x8xf32>
    %213 = vector.shape_cast %212 : vector<1x8x8xf32> to vector<8x8xf32>
    %cst_175 = arith.constant dense<0.000000e+00> : vector<32x8xf32>
    %214 = tpu.matmul %211, %213, %cst_175 {dimension_numbers = #tpu.dot_dimension_numbers<[1], [0], [0], [1], [0, 0, 1, 1], [], []>} : vector<32x8xf32>, vector<8x8xf32>, vector<32x8xf32> -> vector<32x8xf32>
    %215 = arith.addf %209, %214 : vector<32x8xf32>
    %c0_176 = arith.constant 0 : index
    %c0_177 = arith.constant 0 : index
    %216 = vector.load %arg36[%c0_176, %c0_177] : memref<1x8xf32, #tpu.memory_space<vmem>>, vector<1x8xf32>
    %217 = vector.shape_cast %216 : vector<1x8xf32> to vector<8xf32>
    %218 = vector.shape_cast %217 : vector<8xf32> to vector<1x8xf32>
    %219 = vector.broadcast %218 : vector<1x8xf32> to vector<32x8xf32>
    %220 = arith.addf %215, %219 : vector<32x8xf32>
    %c0_178 = arith.constant 0 : index
    %c0_179 = arith.constant 0 : index
    %221 = vector.load %arg37[%c0_178, %c0_179] : memref<8x15xf32, #tpu.memory_space<vmem>>, vector<8x15xf32>
    %cst_180 = arith.constant dense<0.000000e+00> : vector<32x15xf32>
    %222 = tpu.matmul %220, %221, %cst_180 {dimension_numbers = #tpu.dot_dimension_numbers<[1], [0], [0], [1], [0, 0, 1, 1], [], []>} : vector<32x8xf32>, vector<8x15xf32>, vector<32x15xf32> -> vector<32x15xf32>
    %c0_181 = arith.constant 0 : index
    %c0_182 = arith.constant 0 : index
    %223 = vector.load %arg38[%c0_181, %c0_182] : memref<1x15xf32, #tpu.memory_space<vmem>>, vector<1x15xf32>
    %224 = vector.shape_cast %223 : vector<1x15xf32> to vector<15xf32>
    %225 = vector.shape_cast %224 : vector<15xf32> to vector<1x15xf32>
    %226 = vector.broadcast %225 : vector<1x15xf32> to vector<32x15xf32>
    %227 = arith.addf %222, %226 : vector<32x15xf32>
    %cst_183 = arith.constant dense<0xFF800000> : vector<32xf32>
    %228 = vector.multi_reduction <maximumf>, %227, %cst_183 [1] : vector<32x15xf32> to vector<32xf32>
    %229 = vector.shape_cast %228 : vector<32xf32> to vector<32x1xf32>
    %230 = vector.broadcast %229 : vector<32x1xf32> to vector<32x15xf32>
    %231 = arith.subf %227, %230 : vector<32x15xf32>
    %232 = math.exp %231 : vector<32x15xf32>
    %cst_184 = arith.constant dense<0.000000e+00> : vector<32xf32>
    %233 = vector.multi_reduction <add>, %232, %cst_184 [1] : vector<32x15xf32> to vector<32xf32>
    %234 = vector.shape_cast %233 : vector<32xf32> to vector<32x1xf32>
    %235 = tpu.reciprocal %234 {approx = true} : vector<32x1xf32> -> vector<32x1xf32>
    %236 = vector.broadcast %235 : vector<32x1xf32> to vector<32x15xf32>
    %237 = arith.mulf %232, %236 : vector<32x15xf32>
    %238 = arith.addf %198, %237 : vector<32x15xf32>
    %cst_185 = arith.constant 2.500000e-01 : f32
    %239 = vector.broadcast %cst_185 : f32 to vector<32x15xf32>
    %240 = arith.mulf %238, %239 : vector<32x15xf32>
    %c0_186 = arith.constant 0 : index
    %c0_187 = arith.constant 0 : index
    %241 = vector.load %arg39[%c0_186, %c0_187] : memref<32x15xf32, #tpu.memory_space<vmem>>, vector<32x15xf32>
    tpu.vector_store %arg39[%c0_186, %c0_187], %240 {strides = array<i32>} : memref<32x15xf32, #tpu.memory_space<vmem>>, vector<32x15xf32>,
    return
  }
}

</mosaic_0001>

<llo_original>
// kernel: tcfpn_forward.1
$region0: #{tcfpn_forward.1}
  #allocation0 [shape = 'u32[]', space=smem, size = 0x4, offset = 0x4, fixed_abs, tag = 'smem constant byte address 0x4 - core index']
  #allocation1 [shape = 'u32[144,128]{1,0:T(1,128)}', space=vmem, size = 0x12000, scoped, tag = 'internal scratch']
  %s0 = inlined_call_operand.smem [shape: u32[40], index: -1, kind: input, shape index: {}]
  %s1 = sld [smem:[%s0]]
  %s2 = scalar_lea.smem %s0, 1
  %s3 = sld [smem:[%s2]]
  %s4 = scalar_lea.smem %s0, 2
  %s5 = sld [smem:[%s4]]
  %s6 = scalar_lea.smem %s0, 3
  %s7 = sld [smem:[%s6]]
  %s8 = scalar_lea.smem %s0, 4
  %s9 = sld [smem:[%s8]]
  %s10 = scalar_lea.smem %s0, 5
  %s11 = sld [smem:[%s10]]
  %s12 = scalar_lea.smem %s0, 6
  %s13 = sld [smem:[%s12]]
  %s14 = scalar_lea.smem %s0, 7
  %s15 = sld [smem:[%s14]]
  %s16 = scalar_lea.smem %s0, 8
  %s17 = sld [smem:[%s16]]
  %s18 = scalar_lea.smem %s0, 9
  %s19 = sld [smem:[%s18]]
  %s20 = scalar_lea.smem %s0, 10
  %s21 = sld [smem:[%s20]]
  %s22 = scalar_lea.smem %s0, 11
  %s23 = sld [smem:[%s22]]
  %s24 = scalar_lea.smem %s0, 12
  %s25 = sld [smem:[%s24]]
  %s26 = scalar_lea.smem %s0, 13
  %s27 = sld [smem:[%s26]]
  %s28 = scalar_lea.smem %s0, 14
  %s29 = sld [smem:[%s28]]
  %s30 = scalar_lea.smem %s0, 15
  %s31 = sld [smem:[%s30]]
  %s32 = scalar_lea.smem %s0, 16
  %s33 = sld [smem:[%s32]]
  %s34 = scalar_lea.smem %s0, 17
  %s35 = sld [smem:[%s34]]
  %s36 = scalar_lea.smem %s0, 18
  %s37 = sld [smem:[%s36]]
  %s38 = scalar_lea.smem %s0, 19
  %s39 = sld [smem:[%s38]]
  %s40 = scalar_lea.smem %s0, 20
  %s41 = sld [smem:[%s40]]
  %s42 = scalar_lea.smem %s0, 21
  %s43 = sld [smem:[%s42]]
  %s44 = scalar_lea.smem %s0, 22
  %s45 = sld [smem:[%s44]]
  %s46 = scalar_lea.smem %s0, 23
  %s47 = sld [smem:[%s46]]
  %s48 = scalar_lea.smem %s0, 24
  %s49 = sld [smem:[%s48]]
  %s50 = scalar_lea.smem %s0, 25
  %s51 = sld [smem:[%s50]]
  %s52 = scalar_lea.smem %s0, 26
  %s53 = sld [smem:[%s52]]
  %s54 = scalar_lea.smem %s0, 27
  %s55 = sld [smem:[%s54]]
  %s56 = scalar_lea.smem %s0, 28
  %s57 = sld [smem:[%s56]]
  %s58 = scalar_lea.smem %s0, 29
  %s59 = sld [smem:[%s58]]
  %s60 = scalar_lea.smem %s0, 30
  %s61 = sld [smem:[%s60]]
  %s62 = scalar_lea.smem %s0, 31
  %s63 = sld [smem:[%s62]]
  %s64 = scalar_lea.smem %s0, 32
  %s65 = sld [smem:[%s64]]
  %s66 = scalar_lea.smem %s0, 33
  %s67 = sld [smem:[%s66]]
  %s68 = scalar_lea.smem %s0, 34
  %s69 = sld [smem:[%s68]]
  %s70 = scalar_lea.smem %s0, 35
  %s71 = sld [smem:[%s70]]
  %s72 = scalar_lea.smem %s0, 36
  %s73 = sld [smem:[%s72]]
  %s74 = scalar_lea.smem %s0, 37
  %s75 = sld [smem:[%s74]]
  %s76 = scalar_lea.smem %s0, 38
  %s77 = sld [smem:[%s76]]
  %s78 = scalar_lea.smem %s0, 39
  %s79 = sld [smem:[%s78]]
  %s80 = sld [smem:[#allocation0]]
  $region190: #{tcfpn_forward.1} parent=0
    _
  %s82 = ssub.s32 1, %s80
  %s83 = scalar_select 0, %s82, %s80
  $region1: #{tcfpn_forward.1} parent=0
    #allocation2 [shape = 'u8[512]{0}', space=vmem, size = 0x400, scoped, tag = 'input window, operand 20, single buffered']
    #allocation3 [shape = 's32[1]{0}', space=sflag, size = 0x4, scoped, tag = 'scoped memory for tcfpn_forward.1']
    #allocation4 [shape = 'u8[512]{0}', space=vmem, size = 0x400, scoped, tag = 'input window, operand 22, single buffered']
    #allocation5 [shape = 's32[1]{0}', space=sflag, size = 0x4, scoped, tag = 'scoped memory for tcfpn_forward.1']
    #allocation6 [shape = 'u8[512]{0}', space=vmem, size = 0x400, scoped, tag = 'input window, operand 24, single buffered']
    #allocation7 [shape = 'u8[512]{0}', space=vmem, size = 0x400, scoped, tag = 'input window, operand 28, single buffered']
    #allocation8 [shape = 's32[1]{0}', space=sflag, size = 0x4, scoped, tag = 'scoped memory for tcfpn_forward.1']
    #allocation9 [shape = 'u8[512]{0}', space=vmem, size = 0x400, scoped, tag = 'input window, operand 30, single buffered']
    #allocation10 [shape = 'u8[512]{0}', space=vmem, size = 0x400, scoped, tag = 'input window, operand 32, single buffered']
    #allocation11 [shape = 's32[1]{0}', space=sflag, size = 0x4, scoped, tag = 'scoped memory for tcfpn_forward.1']
    %84 = vsyncpa [#allocation3], 0
    %85 = vsyncpa [#allocation5], 0
    %86 = vsyncpa [#allocation8], 0
    %87 = vsyncpa [#allocation11], 0
    // Predicated region
    $region2: #{tcfpn_forward.1} parent=1 // pred_check
      _
    $region3: #{tcfpn_forward.1} parent=1 // pred_check_branch
      %89 = sbr.rel (0) target = $region5
    $region4: #{tcfpn_forward.1} parent=1 // pred_region
      _
    $region5: #{tcfpn_forward.1} parent=1 // pred_fallthru
      _
    // Predicated region
    $region6: #{tcfpn_forward.1} parent=1 // pred_check
      _
    $region7: #{tcfpn_forward.1} parent=1 // pred_check_branch
      %91 = sbr.rel (0) target = $region9
    $region8: #{tcfpn_forward.1} parent=1 // pred_region
      _
    $region9: #{tcfpn_forward.1} parent=1 // pred_fallthru
      _
    // Predicated region
    $region10: #{tcfpn_forward.1} parent=1 // pred_check
      _
    $region11: #{tcfpn_forward.1} parent=1 // pred_check_branch
      %93 = sbr.rel (0) target = $region13
    $region12: #{tcfpn_forward.1} parent=1 // pred_region
      _
    $region13: #{tcfpn_forward.1} parent=1 // pred_fallthru
      _
    // Predicated region
    $region14: #{tcfpn_forward.1} parent=1 // pred_check
      _
    $region15: #{tcfpn_forward.1} parent=1 // pred_check_branch
      %95 = sbr.rel (0) target = $region17
    $region16: #{tcfpn_forward.1} parent=1 // pred_region
      _
    $region17: #{tcfpn_forward.1} parent=1 // pred_fallthru
      _
    // Predicated region
    $region18: #{tcfpn_forward.1} parent=1 // pred_check
      _
    $region19: #{tcfpn_forward.1} parent=1 // pred_check_branch
      %97 = sbr.rel (0) target = $region21
    $region20: #{tcfpn_forward.1} parent=1 // pred_region
      _
    $region21: #{tcfpn_forward.1} parent=1 // pred_fallthru
      _
    // Predicated region
    $region22: #{tcfpn_forward.1} parent=1 // pred_check
      _
    $region23: #{tcfpn_forward.1} parent=1 // pred_check_branch
      %99 = sbr.rel (0) target = $region25
    $region24: #{tcfpn_forward.1} parent=1 // pred_region
      _
    $region25: #{tcfpn_forward.1} parent=1 // pred_fallthru
      _
    // Predicated region
    $region26: #{tcfpn_forward.1} parent=1 // pred_check
      _
    $region27: #{tcfpn_forward.1} parent=1 // pred_check_branch
      %101 = sbr.rel (0) target = $region29
    $region28: #{tcfpn_forward.1} parent=1 // pred_region
      _
    $region29: #{tcfpn_forward.1} parent=1 // pred_fallthru
      _
    // Predicated region
    $region30: #{tcfpn_forward.1} parent=1 // pred_check
      _
    $region31: #{tcfpn_forward.1} parent=1 // pred_check_branch
      %103 = sbr.rel (0) target = $region33
    $region32: #{tcfpn_forward.1} parent=1 // pred_region
      _
    $region33: #{tcfpn_forward.1} parent=1 // pred_fallthru
      _
    // Predicated region
    $region34: #{tcfpn_forward.1} parent=1 // pred_check
      _
    $region35: #{tcfpn_forward.1} parent=1 // pred_check_branch
      %105 = sbr.rel (0) target = $region37
    $region36: #{tcfpn_forward.1} parent=1 // pred_region
      _
    $region37: #{tcfpn_forward.1} parent=1 // pred_fallthru
      _
    // Predicated region
    $region38: #{tcfpn_forward.1} parent=1 // pred_check
      _
    $region39: #{tcfpn_forward.1} parent=1 // pred_check_branch
      %107 = sbr.rel (0) target = $region41
    $region40: #{tcfpn_forward.1} parent=1 // pred_region
      _
    $region41: #{tcfpn_forward.1} parent=1 // pred_fallthru
      _
    // Predicated region
    $region42: #{tcfpn_forward.1} parent=1 // pred_check
      _
    $region43: #{tcfpn_forward.1} parent=1 // pred_check_branch
      %109 = sbr.rel (0) target = $region45
    $region44: #{tcfpn_forward.1} parent=1 // pred_region
      _
    $region45: #{tcfpn_forward.1} parent=1 // pred_fallthru
      _
    // Predicated region
    $region46: #{tcfpn_forward.1} parent=1 // pred_check
      _
    $region47: #{tcfpn_forward.1} parent=1 // pred_check_branch
      %111 = sbr.rel (0) target = $region49
    $region48: #{tcfpn_forward.1} parent=1 // pred_region
      _
    $region49: #{tcfpn_forward.1} parent=1 // pred_fallthru
      _
    // Predicated region
    $region50: #{tcfpn_forward.1} parent=1 // pred_check
      _
    $region51: #{tcfpn_forward.1} parent=1 // pred_check_branch
      %113 = sbr.rel (0) target = $region53
    $region52: #{tcfpn_forward.1} parent=1 // pred_region
      _
    $region53: #{tcfpn_forward.1} parent=1 // pred_fallthru
      _
    // Predicated region
    $region54: #{tcfpn_forward.1} parent=1 // pred_check
      _
    $region55: #{tcfpn_forward.1} parent=1 // pred_check_branch
      %115 = sbr.rel (0) target = $region57
    $region56: #{tcfpn_forward.1} parent=1 // pred_region
      _
    $region57: #{tcfpn_forward.1} parent=1 // pred_fallthru
      _
    // Predicated region
    $region58: #{tcfpn_forward.1} parent=1 // pred_check
      _
    $region59: #{tcfpn_forward.1} parent=1 // pred_check_branch
      %117 = sbr.rel (0) target = $region61
    $region60: #{tcfpn_forward.1} parent=1 // pred_region
      _
    $region61: #{tcfpn_forward.1} parent=1 // pred_fallthru
      _
    // Predicated region
    $region62: #{tcfpn_forward.1} parent=1 // pred_check
      _
    $region63: #{tcfpn_forward.1} parent=1 // pred_check_branch
      %119 = sbr.rel (0) target = $region65
    $region64: #{tcfpn_forward.1} parent=1 // pred_region
      _
    $region65: #{tcfpn_forward.1} parent=1 // pred_fallthru
      _
    // Predicated region
    $region66: #{tcfpn_forward.1} parent=1 // pred_check
      _
    $region67: #{tcfpn_forward.1} parent=1 // pred_check_branch
      %121 = sbr.rel (0) target = $region69
    $region68: #{tcfpn_forward.1} parent=1 // pred_region
      _
    $region69: #{tcfpn_forward.1} parent=1 // pred_fallthru
      _
    // Predicated region
    $region70: #{tcfpn_forward.1} parent=1 // pred_check
      _
    $region71: #{tcfpn_forward.1} parent=1 // pred_check_branch
      %123 = sbr.rel (0) target = $region73
    $region72: #{tcfpn_forward.1} parent=1 // pred_region
      _
    $region73: #{tcfpn_forward.1} parent=1 // pred_fallthru
      _
    // Predicated region
    $region74: #{tcfpn_forward.1} parent=1 // pred_check
      _
    $region75: #{tcfpn_forward.1} parent=1 // pred_check_branch
      %125 = sbr.rel (0) target = $region77
    $region76: #{tcfpn_forward.1} parent=1 // pred_region
      _
    $region77: #{tcfpn_forward.1} parent=1 // pred_fallthru
      _
    // Predicated region
    $region78: #{tcfpn_forward.1} parent=1 // pred_check
      _
    $region79: #{tcfpn_forward.1} parent=1 // pred_check_branch
      %127 = sbr.rel (0) target = $region81
    $region80: #{tcfpn_forward.1} parent=1 // pred_region
      _
    $region81: #{tcfpn_forward.1} parent=1 // pred_fallthru
      _
    // Predicated region
    $region82: #{tcfpn_forward.1} parent=1 // pred_check
      _
    $region83: #{tcfpn_forward.1} parent=1 // pred_check_branch
      %129 = sbr.rel (0) target = $region85
    $region84: #{tcfpn_forward.1} parent=1 // pred_region
      %s131 = ssub.s32 16, 16
      %132 = vsyncadd [#allocation3], %s131
      %s134 = sshll.u32 [#allocation2], 4
      %s135 = int_to_ptr.vmem [resolvable:$true] %s134
      %137 = dma.hbm_to_vmem [thread:$0]  %s41, 16, %s135, [#allocation3]
    $region85: #{tcfpn_forward.1} parent=1 // pred_fallthru
      _
    // Predicated region
    $region86: #{tcfpn_forward.1} parent=1 // pred_check
      _
    $region87: #{tcfpn_forward.1} parent=1 // pred_check_branch
      %139 = sbr.rel (0) target = $region89
    $region88: #{tcfpn_forward.1} parent=1 // pred_region
      _
    $region89: #{tcfpn_forward.1} parent=1 // pred_fallthru
      _
    // Predicated region
    $region90: #{tcfpn_forward.1} parent=1 // pred_check
      _
    $region91: #{tcfpn_forward.1} parent=1 // pred_check_branch
      %141 = sbr.rel (0) target = $region93
    $region92: #{tcfpn_forward.1} parent=1 // pred_region
      %s143 = ssub.s32 16, 16
      %144 = vsyncadd [#allocation5], %s143
      %s146 = sshll.u32 [#allocation4], 4
      %s147 = int_to_ptr.vmem [resolvable:$true] %s146
      %149 = dma.hbm_to_vmem [thread:$0]  %s45, 16, %s147, [#allocation5]
    $region93: #{tcfpn_forward.1} parent=1 // pred_fallthru
      _
    // Predicated region
    $region94: #{tcfpn_forward.1} parent=1 // pred_check
      _
    $region95: #{tcfpn_forward.1} parent=1 // pred_check_branch
      %151 = sbr.rel (0) target = $region97
    $region96: #{tcfpn_forward.1} parent=1 // pred_region
      _
    $region97: #{tcfpn_forward.1} parent=1 // pred_fallthru
      _
    // Predicated region
    $region98: #{tcfpn_forward.1} parent=1 // pred_check
      _
    $region99: #{tcfpn_forward.1} parent=1 // pred_check_branch
      %153 = sbr.rel (0) target = $region101
    $region100: #{tcfpn_forward.1} parent=1 // pred_region
      %s155 = ssub.s32 16, 16
      %156 = vsyncadd [#allocation5], %s155
      %s158 = sshll.u32 [#allocation6], 4
      %s159 = int_to_ptr.vmem [resolvable:$true] %s158
      %161 = dma.hbm_to_vmem [thread:$0]  %s49, 16, %s159, [#allocation5]
    $region101: #{tcfpn_forward.1} parent=1 // pred_fallthru
      _
    // Predicated region
    $region102: #{tcfpn_forward.1} parent=1 // pred_check
      _
    $region103: #{tcfpn_forward.1} parent=1 // pred_check_branch
      %163 = sbr.rel (0) target = $region105
    $region104: #{tcfpn_forward.1} parent=1 // pred_region
      _
    $region105: #{tcfpn_forward.1} parent=1 // pred_fallthru
      _
    // Predicated region
    $region106: #{tcfpn_forward.1} parent=1 // pred_check
      _
    $region107: #{tcfpn_forward.1} parent=1 // pred_check_branch
      %165 = sbr.rel (0) target = $region109
    $region108: #{tcfpn_forward.1} parent=1 // pred_region
      _
    $region109: #{tcfpn_forward.1} parent=1 // pred_fallthru
      _
    // Predicated region
    $region110: #{tcfpn_forward.1} parent=1 // pred_check
      _
    $region111: #{tcfpn_forward.1} parent=1 // pred_check_branch
      %167 = sbr.rel (0) target = $region113
    $region112: #{tcfpn_forward.1} parent=1 // pred_region
      _
    $region113: #{tcfpn_forward.1} parent=1 // pred_fallthru
      _
    // Predicated region
    $region114: #{tcfpn_forward.1} parent=1 // pred_check
      _
    $region115: #{tcfpn_forward.1} parent=1 // pred_check_branch
      %169 = sbr.rel (0) target = $region117
    $region116: #{tcfpn_forward.1} parent=1 // pred_region
      %s171 = ssub.s32 16, 16
      %172 = vsyncadd [#allocation8], %s171
      %s174 = sshll.u32 [#allocation7], 4
      %s175 = int_to_ptr.vmem [resolvable:$true] %s174
      %177 = dma.hbm_to_vmem [thread:$0]  %s57, 16, %s175, [#allocation8]
    $region117: #{tcfpn_forward.1} parent=1 // pred_fallthru
      _
    // Predicated region
    $region118: #{tcfpn_forward.1} parent=1 // pred_check
      _
    $region119: #{tcfpn_forward.1} parent=1 // pred_check_branch
      %179 = sbr.rel (0) target = $region121
    $region120: #{tcfpn_forward.1} parent=1 // pred_region
      _
    $region121: #{tcfpn_forward.1} parent=1 // pred_fallthru
      _
    // Predicated region
    $region122: #{tcfpn_forward.1} parent=1 // pred_check
      _
    $region123: #{tcfpn_forward.1} parent=1 // pred_check_branch
      %181 = sbr.rel (0) target = $region125
    $region124: #{tcfpn_forward.1} parent=1 // pred_region
      %s183 = ssub.s32 16, 16
      %184 = vsyncadd [#allocation8], %s183
      %s186 = sshll.u32 [#allocation9], 4
      %s187 = int_to_ptr.vmem [resolvable:$true] %s186
      %189 = dma.hbm_to_vmem [thread:$0]  %s61, 16, %s187, [#allocation8]
    $region125: #{tcfpn_forward.1} parent=1 // pred_fallthru
      _
    // Predicated region
    $region126: #{tcfpn_forward.1} parent=1 // pred_check
      _
    $region127: #{tcfpn_forward.1} parent=1 // pred_check_branch
      %191 = sbr.rel (0) target = $region129
    $region128: #{tcfpn_forward.1} parent=1 // pred_region
      _
    $region129: #{tcfpn_forward.1} parent=1 // pred_fallthru
      _
    // Predicated region
    $region130: #{tcfpn_forward.1} parent=1 // pred_check
      _
    $region131: #{tcfpn_forward.1} parent=1 // pred_check_branch
      %193 = sbr.rel (0) target = $region133
    $region132: #{tcfpn_forward.1} parent=1 // pred_region
      %s195 = ssub.s32 16, 16
      %196 = vsyncadd [#allocation11], %s195
      %s198 = sshll.u32 [#allocation10], 4
      %s199 = int_to_ptr.vmem [resolvable:$true] %s198
      %201 = dma.hbm_to_vmem [thread:$0]  %s65, 16, %s199, [#allocation11]
    $region133: #{tcfpn_forward.1} parent=1 // pred_fallthru
      _
    // Predicated region
    $region134: #{tcfpn_forward.1} parent=1 // pred_check
      _
    $region135: #{tcfpn_forward.1} parent=1 // pred_check_branch
      %203 = sbr.rel (0) target = $region137
    $region136: #{tcfpn_forward.1} parent=1 // pred_region
      _
    $region137: #{tcfpn_forward.1} parent=1 // pred_fallthru
      _
    // Predicated region
    $region138: #{tcfpn_forward.1} parent=1 // pred_check
      _
    $region139: #{tcfpn_forward.1} parent=1 // pred_check_branch
      %205 = sbr.rel (0) target = $region141
    $region140: #{tcfpn_forward.1} parent=1 // pred_region
      _
    $region141: #{tcfpn_forward.1} parent=1 // pred_fallthru
      _
    // Predicated region
    $region142: #{tcfpn_forward.1} parent=1 // pred_check
      _
    $region143: #{tcfpn_forward.1} parent=1 // pred_check_branch
      %207 = sbr.rel (0) target = $region145
    $region144: #{tcfpn_forward.1} parent=1 // pred_region
      _
    $region145: #{tcfpn_forward.1} parent=1 // pred_fallthru
      _
    // Predicated region
    $region146: #{tcfpn_forward.1} parent=1 // pred_check
      _
    $region147: #{tcfpn_forward.1} parent=1 // pred_check_branch
      %209 = sbr.rel (0) target = $region149
    $region148: #{tcfpn_forward.1} parent=1 // pred_region
      _
    $region149: #{tcfpn_forward.1} parent=1 // pred_fallthru
      _
    // Predicated region
    $region150: #{tcfpn_forward.1} parent=1 // pred_check
      _
    $region151: #{tcfpn_forward.1} parent=1 // pred_check_branch
      %211 = sbr.rel (0) target = $region153
    $region152: #{tcfpn_forward.1} parent=1 // pred_region
      _
    $region153: #{tcfpn_forward.1} parent=1 // pred_fallthru
      _
    // Predicated region
    $region154: #{tcfpn_forward.1} parent=1 // pred_check
      _
    $region155: #{tcfpn_forward.1} parent=1 // pred_check_branch
      %213 = sbr.rel (0) target = $region157
    $region156: #{tcfpn_forward.1} parent=1 // pred_region
      _
    $region157: #{tcfpn_forward.1} parent=1 // pred_fallthru
      _
    // Predicated region
    $region158: #{tcfpn_forward.1} parent=1 // pred_check
      _
    $region159: #{tcfpn_forward.1} parent=1 // pred_check_branch
      %215 = sbr.rel (0) target = $region161
    $region160: #{tcfpn_forward.1} parent=1 // pred_region
      %216 = dma.done [#allocation3], 16
    $region161: #{tcfpn_forward.1} parent=1 // pred_fallthru
      _
    // Predicated region
    $region162: #{tcfpn_forward.1} parent=1 // pred_check
      _
    $region163: #{tcfpn_forward.1} parent=1 // pred_check_branch
      %218 = sbr.rel (0) target = $region165
    $region164: #{tcfpn_forward.1} parent=1 // pred_region
      %219 = dma.done [#allocation5], 16
    $region165: #{tcfpn_forward.1} parent=1 // pred_fallthru
      _
    // Predicated region
    $region166: #{tcfpn_forward.1} parent=1 // pred_check
      _
    $region167: #{tcfpn_forward.1} parent=1 // pred_check_branch
      %221 = sbr.rel (0) target = $region169
    $region168: #{tcfpn_forward.1} parent=1 // pred_region
      %222 = dma.done [#allocation5], 16
    $region169: #{tcfpn_forward.1} parent=1 // pred_fallthru
      _
    // Predicated region
    $region170: #{tcfpn_forward.1} parent=1 // pred_check
      _
    $region171: #{tcfpn_forward.1} parent=1 // pred_check_branch
      %224 = sbr.rel (0) target = $region173
    $region172: #{tcfpn_forward.1} parent=1 // pred_region
      %225 = dma.done [#allocation8], 16
    $region173: #{tcfpn_forward.1} parent=1 // pred_fallthru
      _
    // Predicated region
    $region174: #{tcfpn_forward.1} parent=1 // pred_check
      _
    $region175: #{tcfpn_forward.1} parent=1 // pred_check_branch
      %227 = sbr.rel (0) target = $region177
    $region176: #{tcfpn_forward.1} parent=1 // pred_region
      %228 = dma.done [#allocation8], 16
    $region177: #{tcfpn_forward.1} parent=1 // pred_fallthru
      _
    // Predicated region
    $region178: #{tcfpn_forward.1} parent=1 // pred_check
      _
    $region179: #{tcfpn_forward.1} parent=1 // pred_check_branch
      %230 = sbr.rel (0) target = $region181
    $region180: #{tcfpn_forward.1} parent=1 // pred_region
      %231 = dma.done [#allocation11], 16
    $region181: #{tcfpn_forward.1} parent=1 // pred_fallthru
      _
    %v232 = vld [vmem:[%s1] sm:$0xff]
    %v233 = vld [vmem:[%s1 + $0x8] sm:$0xff]
    %v234 = vld [vmem:[%s1 + $0x10] sm:$0xff]
    %v235 = vld [vmem:[%s1 + $0x18] sm:$0xff]
    %s236 = scalar_lea.vmem %s3, 8
    %v237 = vld [vmem:[%s236] sm:$0xff]
    %v238 = vld [vmem:[%s7] sm:$0xff]
    %v239 = vld [vmem:[%s7 + $0x8] sm:$0xff]
    %v240 = vld [vmem:[%s7 + $0x10] sm:$0xff]
    %v241 = vld [vmem:[%s7 + $0x18] sm:$0xff]
    %vm242 = vcmask 261120
    %v244 = vsel %vm242, %v238, 0
    %v247 = vsel %vm242, %v239, 0
    %v250 = vsel %vm242, %v240, 0
    %v253 = vsel %vm242, %v241, 0
    %255 = vmatprep.subr.mxu0 0.0
    %256 = vmatpush1.msra.mxu0 %v232
    %257 = vmatprep.subr.mxu0 0.0
    %258 = vmatpush1.msra.mxu0 %v233
    %259 = vmatprep.subr.mxu0 0.0
    %260 = vmatpush1.msra.mxu0 %v234
    %261 = vmatprep.subr.mxu0 0.0
    %262 = vmatpush1.msra.mxu0 %v235
    %263 = vmatprep.subr.mxu0 0.0
    %264 = vmatpush1.msra.mxu0 0.0
    %265 = vmatprep.subr.mxu0 0.0
    %266 = vmatpush1.msra.mxu0 0.0
    %267 = vmatprep.subr.mxu0 0.0
    %268 = vmatpush1.msra.mxu0 0.0
    %269 = vmatprep.subr.mxu0 0.0
    %270 = vmatpush1.msra.mxu0 0.0
    %271 = vmatprep.subr.mxu0 0.0
    %272 = vmatpush1.msra.mxu0 0.0
    %273 = vmatprep.subr.mxu0 0.0
    %274 = vmatpush1.msra.mxu0 0.0
    %275 = vmatprep.subr.mxu0 0.0
    %276 = vmatpush1.msra.mxu0 0.0
    %277 = vmatprep.subr.mxu0 0.0
    %278 = vmatpush1.msra.mxu0 0.0
    %279 = vmatprep.subr.mxu0 0.0
    %280 = vmatpush1.msra.mxu0 0.0
    %281 = vmatprep.subr.mxu0 0.0
    %282 = vmatpush1.msra.mxu0 0.0
    %283 = vmatprep.subr.mxu0 0.0
    %284 = vmatpush1.msra.mxu0 0.0
    %285 = vmatprep.subr.mxu0 0.0
    %286 = vmatpush1.msra.mxu0 0.0
    %287 = vmatprep.subr.mxu0 0.0
    %288 = vmatpush1.msra.mxu0 0.0
    %289 = vmatprep.subr.mxu0 0.0
    %290 = vmatpush1.msra.mxu0 0.0
    %291 = vmatprep.subr.mxu0 0.0
    %292 = vmatpush1.msra.mxu0 0.0
    %293 = vmatprep.subr.mxu0 0.0
    %294 = vmatpush1.msra.mxu0 0.0
    %295 = vmatprep.subr.mxu0 0.0
    %296 = vmatpush1.msra.mxu0 0.0
    %297 = vmatprep.subr.mxu0 0.0
    %298 = vmatpush1.msra.mxu0 0.0
    %299 = vmatprep.subr.mxu0 0.0
    %300 = vmatpush1.msra.mxu0 0.0
    %301 = vmatprep.subr.mxu0 0.0
    %302 = vmatpush1.msra.mxu0 0.0
    %303 = vmatprep.subr.mxu0 0.0
    %304 = vmatpush1.msra.mxu0 0.0
    %305 = vmatprep.subr.mxu0 0.0
    %306 = vmatpush1.msra.mxu0 0.0
    %307 = vmatprep.subr.mxu0 0.0
    %308 = vmatpush1.msra.mxu0 0.0
    %309 = vmatprep.subr.mxu0 0.0
    %310 = vmatpush1.msra.mxu0 0.0
    %311 = vmatprep.subr.mxu0 0.0
    %312 = vmatpush1.msra.mxu0 0.0
    %313 = vmatprep.subr.mxu0 0.0
    %314 = vmatpush1.msra.mxu0 0.0
    %315 = vmatprep.subr.mxu0 0.0
    %316 = vmatpush1.msra.mxu0 0.0
    %317 = vmatprep.subr.mxu0 0.0
    %318 = vmatpush1.msra.mxu0 0.0
    %319 = vmatprep.mubr.f32.mxu0 0.0
    %320 = vmatmul.mubr.f32.gmra.mrb[0].mxu0 %v244
    %v321 = vpop.f32.mrb[0].mxu0
    %v322 = vadd.f32 0.0, %v321
    %v323 = vpop.f32.mrb[0].mxu0
    %324 = vmatprep.mubr.f32.mxu0 0.0
    %325 = vmatmul.mubr.f32.gmra.mrb[0].mxu0 %v247
    %v326 = vpop.f32.mrb[0].mxu0
    %v327 = vadd.f32 0.0, %v326
    %v328 = vpop.f32.mrb[0].mxu0
    %329 = vmatprep.mubr.f32.mxu0 0.0
    %330 = vmatmul.mubr.f32.gmra.mrb[0].mxu0 %v250
    %v331 = vpop.f32.mrb[0].mxu0
    %v332 = vadd.f32 0.0, %v331
    %v333 = vpop.f32.mrb[0].mxu0
    %334 = vmatprep.mubr.f32.mxu0 0.0
    %335 = vmatmul.mubr.f32.gmra.mrb[0].mxu0 %v253
    %v336 = vpop.f32.mrb[0].mxu0
    %v337 = vadd.f32 0.0, %v336
    %v338 = vpop.f32.mrb[0].mxu0
    %339 = vdwg.mxu0
    %v340 = vld [vmem:[%s3] sm:$0xff]
    %vm341 = vcmask 64512
    %v343 = vsel %vm341, %v322, 0
    %v346 = vsel %vm341, %v327, 0
    %v349 = vsel %vm341, %v332, 0
    %v352 = vsel %vm341, %v337, 0
    %354 = vmatprep.subr.mxu0 0.0
    %355 = vmatpush1.msra.mxu0 %v340
    %356 = vmatprep.subr.mxu0 0.0
    %357 = vmatpush1.msra.mxu0 0.0
    %358 = vmatprep.subr.mxu0 0.0
    %359 = vmatpush1.msra.mxu0 0.0
    %360 = vmatprep.subr.mxu0 0.0
    %361 = vmatpush1.msra.mxu0 0.0
    %362 = vmatprep.subr.mxu0 0.0
    %363 = vmatpush1.msra.mxu0 0.0
    %364 = vmatprep.subr.mxu0 0.0
    %365 = vmatpush1.msra.mxu0 0.0
    %366 = vmatprep.subr.mxu0 0.0
    %367 = vmatpush1.msra.mxu0 0.0
    %368 = vmatprep.subr.mxu0 0.0
    %369 = vmatpush1.msra.mxu0 0.0
    %370 = vmatprep.subr.mxu0 0.0
    %371 = vmatpush1.msra.mxu0 0.0
    %372 = vmatprep.subr.mxu0 0.0
    %373 = vmatpush1.msra.mxu0 0.0
    %374 = vmatprep.subr.mxu0 0.0
    %375 = vmatpush1.msra.mxu0 0.0
    %376 = vmatprep.subr.mxu0 0.0
    %377 = vmatpush1.msra.mxu0 0.0
    %378 = vmatprep.subr.mxu0 0.0
    %379 = vmatpush1.msra.mxu0 0.0
    %380 = vmatprep.subr.mxu0 0.0
    %381 = vmatpush1.msra.mxu0 0.0
    %382 = vmatprep.subr.mxu0 0.0
    %383 = vmatpush1.msra.mxu0 0.0
    %384 = vmatprep.subr.mxu0 0.0
    %385 = vmatpush1.msra.mxu0 0.0
    %386 = vmatprep.subr.mxu0 0.0
    %387 = vmatpush1.msra.mxu0 0.0
    %388 = vmatprep.subr.mxu0 0.0
    %389 = vmatpush1.msra.mxu0 0.0
    %390 = vmatprep.subr.mxu0 0.0
    %391 = vmatpush1.msra.mxu0 0.0
    %392 = vmatprep.subr.mxu0 0.0
    %393 = vmatpush1.msra.mxu0 0.0
    %394 = vmatprep.subr.mxu0 0.0
    %395 = vmatpush1.msra.mxu0 0.0
    %396 = vmatprep.subr.mxu0 0.0
    %397 = vmatpush1.msra.mxu0 0.0
    %398 = vmatprep.subr.mxu0 0.0
    %399 = vmatpush1.msra.mxu0 0.0
    %400 = vmatprep.subr.mxu0 0.0
    %401 = vmatpush1.msra.mxu0 0.0
    %402 = vmatprep.subr.mxu0 0.0
    %403 = vmatpush1.msra.mxu0 0.0
    %404 = vmatprep.subr.mxu0 0.0
    %405 = vmatpush1.msra.mxu0 0.0
    %406 = vmatprep.subr.mxu0 0.0
    %407 = vmatpush1.msra.mxu0 0.0
    %408 = vmatprep.subr.mxu0 0.0
    %409 = vmatpush1.msra.mxu0 0.0
    %410 = vmatprep.subr.mxu0 0.0
    %411 = vmatpush1.msra.mxu0 0.0
    %412 = vmatprep.subr.mxu0 0.0
    %413 = vmatpush1.msra.mxu0 0.0
    %414 = vmatprep.subr.mxu0 0.0
    %415 = vmatpush1.msra.mxu0 0.0
    %416 = vmatprep.subr.mxu0 0.0
    %417 = vmatpush1.msra.mxu0 0.0
    %418 = vmatprep.mubr.f32.mxu0 0.0
    %419 = vmatmul.mubr.f32.gmra.mrb[0].mxu0 %v343
    %v420 = vpop.f32.mrb[0].mxu0
    %v421 = vadd.f32 0.0, %v420
    %v422 = vpop.f32.mrb[0].mxu0
    %423 = vmatprep.mubr.f32.mxu0 0.0
    %424 = vmatmul.mubr.f32.gmra.mrb[0].mxu0 %v346
    %v425 = vpop.f32.mrb[0].mxu0
    %v426 = vadd.f32 0.0, %v425
    %v427 = vpop.f32.mrb[0].mxu0
    %428 = vmatprep.mubr.f32.mxu0 0.0
    %429 = vmatmul.mubr.f32.gmra.mrb[0].mxu0 %v349
    %v430 = vpop.f32.mrb[0].mxu0
    %v431 = vadd.f32 0.0, %v430
    %v432 = vpop.f32.mrb[0].mxu0
    %433 = vmatprep.mubr.f32.mxu0 0.0
    %434 = vmatmul.mubr.f32.gmra.mrb[0].mxu0 %v352
    %v435 = vpop.f32.mrb[0].mxu0
    %v436 = vadd.f32 0.0, %v435
    %v437 = vpop.f32.mrb[0].mxu0
    %438 = vdwg.mxu0
    %v440 = vsel %vm341, %v232, 0
    %v443 = vsel %vm341, %v233, 0
    %v446 = vsel %vm341, %v234, 0
    %v449 = vsel %vm341, %v235, 0
    %451 = vmatprep.subr.mxu0 0.0
    %452 = vmatpush1.msra.mxu0 %v237
    %453 = vmatprep.subr.mxu0 0.0
    %454 = vmatpush1.msra.mxu0 0.0
    %455 = vmatprep.subr.mxu0 0.0
    %456 = vmatpush1.msra.mxu0 0.0
    %457 = vmatprep.subr.mxu0 0.0
    %458 = vmatpush1.msra.mxu0 0.0
    %459 = vmatprep.subr.mxu0 0.0
    %460 = vmatpush1.msra.mxu0 0.0
    %461 = vmatprep.subr.mxu0 0.0
    %462 = vmatpush1.msra.mxu0 0.0
    %463 = vmatprep.subr.mxu0 0.0
    %464 = vmatpush1.msra.mxu0 0.0
    %465 = vmatprep.subr.mxu0 0.0
    %466 = vmatpush1.msra.mxu0 0.0
    %467 = vmatprep.subr.mxu0 0.0
    %468 = vmatpush1.msra.mxu0 0.0
    %469 = vmatprep.subr.mxu0 0.0
    %470 = vmatpush1.msra.mxu0 0.0
    %471 = vmatprep.subr.mxu0 0.0
    %472 = vmatpush1.msra.mxu0 0.0
    %473 = vmatprep.subr.mxu0 0.0
    %474 = vmatpush1.msra.mxu0 0.0
    %475 = vmatprep.subr.mxu0 0.0
    %476 = vmatpush1.msra.mxu0 0.0
    %477 = vmatprep.subr.mxu0 0.0
    %478 = vmatpush1.msra.mxu0 0.0
    %479 = vmatprep.subr.mxu0 0.0
    %480 = vmatpush1.msra.mxu0 0.0
    %481 = vmatprep.subr.mxu0 0.0
    %482 = vmatpush1.msra.mxu0 0.0
    %483 = vmatprep.subr.mxu0 0.0
    %484 = vmatpush1.msra.mxu0 0.0
    %485 = vmatprep.subr.mxu0 0.0
    %486 = vmatpush1.msra.mxu0 0.0
    %487 = vmatprep.subr.mxu0 0.0
    %488 = vmatpush1.msra.mxu0 0.0
    %489 = vmatprep.subr.mxu0 0.0
    %490 = vmatpush1.msra.mxu0 0.0
    %491 = vmatprep.subr.mxu0 0.0
    %492 = vmatpush1.msra.mxu0 0.0
    %493 = vmatprep.subr.mxu0 0.0
    %494 = vmatpush1.msra.mxu0 0.0
    %495 = vmatprep.subr.mxu0 0.0
    %496 = vmatpush1.msra.mxu0 0.0
    %497 = vmatprep.subr.mxu0 0.0
    %498 = vmatpush1.msra.mxu0 0.0
    %499 = vmatprep.subr.mxu0 0.0
    %500 = vmatpush1.msra.mxu0 0.0
    %501 = vmatprep.subr.mxu0 0.0
    %502 = vmatpush1.msra.mxu0 0.0
    %503 = vmatprep.subr.mxu0 0.0
    %504 = vmatpush1.msra.mxu0 0.0
    %505 = vmatprep.subr.mxu0 0.0
    %506 = vmatpush1.msra.mxu0 0.0
    %507 = vmatprep.subr.mxu0 0.0
    %508 = vmatpush1.msra.mxu0 0.0
    %509 = vmatprep.subr.mxu0 0.0
    %510 = vmatpush1.msra.mxu0 0.0
    %511 = vmatprep.subr.mxu0 0.0
    %512 = vmatpush1.msra.mxu0 0.0
    %513 = vmatprep.subr.mxu0 0.0
    %514 = vmatpush1.msra.mxu0 0.0
    %515 = vmatprep.mubr.f32.mxu0 0.0
    %516 = vmatmul.mubr.f32.gmra.mrb[0].mxu0 %v440
    %v517 = vpop.f32.mrb[0].mxu0
    %v518 = vadd.f32 %v421, %v517
    %v519 = vpop.f32.mrb[0].mxu0
    %520 = vmatprep.mubr.f32.mxu0 0.0
    %521 = vmatmul.mubr.f32.gmra.mrb[0].mxu0 %v443
    %v522 = vpop.f32.mrb[0].mxu0
    %v523 = vadd.f32 %v426, %v522
    %v524 = vpop.f32.mrb[0].mxu0
    %525 = vmatprep.mubr.f32.mxu0 0.0
    %526 = vmatmul.mubr.f32.gmra.mrb[0].mxu0 %v446
    %v527 = vpop.f32.mrb[0].mxu0
    %v528 = vadd.f32 %v431, %v527
    %v529 = vpop.f32.mrb[0].mxu0
    %530 = vmatprep.mubr.f32.mxu0 0.0
    %531 = vmatmul.mubr.f32.gmra.mrb[0].mxu0 %v449
    %v532 = vpop.f32.mrb[0].mxu0
    %v533 = vadd.f32 %v436, %v532
    %v534 = vpop.f32.mrb[0].mxu0
    %535 = vdwg.mxu0
    %v536 = vld [vmem:[%s9] sm:$0xff]
    %v537 = vld [vmem:[%s9 + $0x8] sm:$0xff]
    %v538 = vld [vmem:[%s9 + $0x10] sm:$0xff]
    %v539 = vld [vmem:[%s9 + $0x18] sm:$0xff]
    %v541 = vsel %vm242, %v536, 0
    %v544 = vsel %vm242, %v537, 0
    %v547 = vsel %vm242, %v538, 0
    %v550 = vsel %vm242, %v539, 0
    %552 = vmatprep.subr.mxu0 0.0
    %553 = vmatpush1.msra.mxu0 %v232
    %554 = vmatprep.subr.mxu0 0.0
    %555 = vmatpush1.msra.mxu0 %v233
    %556 = vmatprep.subr.mxu0 0.0
    %557 = vmatpush1.msra.mxu0 %v234
    %558 = vmatprep.subr.mxu0 0.0
    %559 = vmatpush1.msra.mxu0 %v235
    %560 = vmatprep.subr.mxu0 0.0
    %561 = vmatpush1.msra.mxu0 0.0
    %562 = vmatprep.subr.mxu0 0.0
    %563 = vmatpush1.msra.mxu0 0.0
    %564 = vmatprep.subr.mxu0 0.0
    %565 = vmatpush1.msra.mxu0 0.0
    %566 = vmatprep.subr.mxu0 0.0
    %567 = vmatpush1.msra.mxu0 0.0
    %568 = vmatprep.subr.mxu0 0.0
    %569 = vmatpush1.msra.mxu0 0.0
    %570 = vmatprep.subr.mxu0 0.0
    %571 = vmatpush1.msra.mxu0 0.0
    %572 = vmatprep.subr.mxu0 0.0
    %573 = vmatpush1.msra.mxu0 0.0
    %574 = vmatprep.subr.mxu0 0.0
    %575 = vmatpush1.msra.mxu0 0.0
    %576 = vmatprep.subr.mxu0 0.0
    %577 = vmatpush1.msra.mxu0 0.0
    %578 = vmatprep.subr.mxu0 0.0
    %579 = vmatpush1.msra.mxu0 0.0
    %580 = vmatprep.subr.mxu0 0.0
    %581 = vmatpush1.msra.mxu0 0.0
    %582 = vmatprep.subr.mxu0 0.0
    %583 = vmatpush1.msra.mxu0 0.0
    %584 = vmatprep.subr.mxu0 0.0
    %585 = vmatpush1.msra.mxu0 0.0
    %586 = vmatprep.subr.mxu0 0.0
    %587 = vmatpush1.msra.mxu0 0.0
    %588 = vmatprep.subr.mxu0 0.0
    %589 = vmatpush1.msra.mxu0 0.0
    %590 = vmatprep.subr.mxu0 0.0
    %591 = vmatpush1.msra.mxu0 0.0
    %592 = vmatprep.subr.mxu0 0.0
    %593 = vmatpush1.msra.mxu0 0.0
    %594 = vmatprep.subr.mxu0 0.0
    %595 = vmatpush1.msra.mxu0 0.0
    %596 = vmatprep.subr.mxu0 0.0
    %597 = vmatpush1.msra.mxu0 0.0
    %598 = vmatprep.subr.mxu0 0.0
    %599 = vmatpush1.msra.mxu0 0.0
    %600 = vmatprep.subr.mxu0 0.0
    %601 = vmatpush1.msra.mxu0 0.0
    %602 = vmatprep.subr.mxu0 0.0
    %603 = vmatpush1.msra.mxu0 0.0
    %604 = vmatprep.subr.mxu0 0.0
    %605 = vmatpush1.msra.mxu0 0.0
    %606 = vmatprep.subr.mxu0 0.0
    %607 = vmatpush1.msra.mxu0 0.0
    %608 = vmatprep.subr.mxu0 0.0
    %609 = vmatpush1.msra.mxu0 0.0
    %610 = vmatprep.subr.mxu0 0.0
    %611 = vmatpush1.msra.mxu0 0.0
    %612 = vmatprep.subr.mxu0 0.0
    %613 = vmatpush1.msra.mxu0 0.0
    %614 = vmatprep.subr.mxu0 0.0
    %615 = vmatpush1.msra.mxu0 0.0
    %616 = vmatprep.mubr.f32.mxu0 0.0
    %617 = vmatmul.mubr.f32.gmra.mrb[0].mxu0 %v541
    %v618 = vpop.f32.mrb[0].mxu0
    %v619 = vadd.f32 0.0, %v618
    %v620 = vpop.f32.mrb[0].mxu0
    %621 = vmatprep.mubr.f32.mxu0 0.0
    %622 = vmatmul.mubr.f32.gmra.mrb[0].mxu0 %v544
    %v623 = vpop.f32.mrb[0].mxu0
    %v624 = vadd.f32 0.0, %v623
    %v625 = vpop.f32.mrb[0].mxu0
    %626 = vmatprep.mubr.f32.mxu0 0.0
    %627 = vmatmul.mubr.f32.gmra.mrb[0].mxu0 %v547
    %v628 = vpop.f32.mrb[0].mxu0
    %v629 = vadd.f32 0.0, %v628
    %v630 = vpop.f32.mrb[0].mxu0
    %631 = vmatprep.mubr.f32.mxu0 0.0
    %632 = vmatmul.mubr.f32.gmra.mrb[0].mxu0 %v550
    %v633 = vpop.f32.mrb[0].mxu0
    %v634 = vadd.f32 0.0, %v633
    %v635 = vpop.f32.mrb[0].mxu0
    %636 = vdwg.mxu0
    %s637 = scalar_lea.vmem %s3, 16
    %v638 = vld [vmem:[%s637] sm:$0xff]
    %v640 = vsel %vm341, %v619, 0
    %v643 = vsel %vm341, %v624, 0
    %v646 = vsel %vm341, %v629, 0
    %v649 = vsel %vm341, %v634, 0
    %651 = vmatprep.subr.mxu0 0.0
    %652 = vmatpush1.msra.mxu0 %v638
    %653 = vmatprep.subr.mxu0 0.0
    %654 = vmatpush1.msra.mxu0 0.0
    %655 = vmatprep.subr.mxu0 0.0
    %656 = vmatpush1.msra.mxu0 0.0
    %657 = vmatprep.subr.mxu0 0.0
    %658 = vmatpush1.msra.mxu0 0.0
    %659 = vmatprep.subr.mxu0 0.0
    %660 = vmatpush1.msra.mxu0 0.0
    %661 = vmatprep.subr.mxu0 0.0
    %662 = vmatpush1.msra.mxu0 0.0
    %663 = vmatprep.subr.mxu0 0.0
    %664 = vmatpush1.msra.mxu0 0.0
    %665 = vmatprep.subr.mxu0 0.0
    %666 = vmatpush1.msra.mxu0 0.0
    %667 = vmatprep.subr.mxu0 0.0
    %668 = vmatpush1.msra.mxu0 0.0
    %669 = vmatprep.subr.mxu0 0.0
    %670 = vmatpush1.msra.mxu0 0.0
    %671 = vmatprep.subr.mxu0 0.0
    %672 = vmatpush1.msra.mxu0 0.0
    %673 = vmatprep.subr.mxu0 0.0
    %674 = vmatpush1.msra.mxu0 0.0
    %675 = vmatprep.subr.mxu0 0.0
    %676 = vmatpush1.msra.mxu0 0.0
    %677 = vmatprep.subr.mxu0 0.0
    %678 = vmatpush1.msra.mxu0 0.0
    %679 = vmatprep.subr.mxu0 0.0
    %680 = vmatpush1.msra.mxu0 0.0
    %681 = vmatprep.subr.mxu0 0.0
    %682 = vmatpush1.msra.mxu0 0.0
    %683 = vmatprep.subr.mxu0 0.0
    %684 = vmatpush1.msra.mxu0 0.0
    %685 = vmatprep.subr.mxu0 0.0
    %686 = vmatpush1.msra.mxu0 0.0
    %687 = vmatprep.subr.mxu0 0.0
    %688 = vmatpush1.msra.mxu0 0.0
    %689 = vmatprep.subr.mxu0 0.0
    %690 = vmatpush1.msra.mxu0 0.0
    %691 = vmatprep.subr.mxu0 0.0
    %692 = vmatpush1.msra.mxu0 0.0
    %693 = vmatprep.subr.mxu0 0.0
    %694 = vmatpush1.msra.mxu0 0.0
    %695 = vmatprep.subr.mxu0 0.0
    %696 = vmatpush1.msra.mxu0 0.0
    %697 = vmatprep.subr.mxu0 0.0
    %698 = vmatpush1.msra.mxu0 0.0
    %699 = vmatprep.subr.mxu0 0.0
    %700 = vmatpush1.msra.mxu0 0.0
    %701 = vmatprep.subr.mxu0 0.0
    %702 = vmatpush1.msra.mxu0 0.0
    %703 = vmatprep.subr.mxu0 0.0
    %704 = vmatpush1.msra.mxu0 0.0
    %705 = vmatprep.subr.mxu0 0.0
    %706 = vmatpush1.msra.mxu0 0.0
    %707 = vmatprep.subr.mxu0 0.0
    %708 = vmatpush1.msra.mxu0 0.0
    %709 = vmatprep.subr.mxu0 0.0
    %710 = vmatpush1.msra.mxu0 0.0
    %711 = vmatprep.subr.mxu0 0.0
    %712 = vmatpush1.msra.mxu0 0.0
    %713 = vmatprep.subr.mxu0 0.0
    %714 = vmatpush1.msra.mxu0 0.0
    %715 = vmatprep.mubr.f32.mxu0 0.0
    %716 = vmatmul.mubr.f32.gmra.mrb[0].mxu0 %v640
    %v717 = vpop.f32.mrb[0].mxu0
    %v718 = vadd.f32 0.0, %v717
    %v719 = vpop.f32.mrb[0].mxu0
    %720 = vmatprep.mubr.f32.mxu0 0.0
    %721 = vmatmul.mubr.f32.gmra.mrb[0].mxu0 %v643
    %v722 = vpop.f32.mrb[0].mxu0
    %v723 = vadd.f32 0.0, %v722
    %v724 = vpop.f32.mrb[0].mxu0
    %725 = vmatprep.mubr.f32.mxu0 0.0
    %726 = vmatmul.mubr.f32.gmra.mrb[0].mxu0 %v646
    %v727 = vpop.f32.mrb[0].mxu0
    %v728 = vadd.f32 0.0, %v727
    %v729 = vpop.f32.mrb[0].mxu0
    %730 = vmatprep.mubr.f32.mxu0 0.0
    %731 = vmatmul.mubr.f32.gmra.mrb[0].mxu0 %v649
    %v732 = vpop.f32.mrb[0].mxu0
    %v733 = vadd.f32 0.0, %v732
    %v734 = vpop.f32.mrb[0].mxu0
    %735 = vdwg.mxu0
    %v736 = vadd.f32 %v518, %v718
    %v737 = vadd.f32 %v523, %v723
    %v738 = vadd.f32 %v528, %v728
    %v739 = vadd.f32 %v533, %v733
    %v740 = vld [vmem:[%s5] sm:$0x1]
    %v742 = vlaneseq
    %v743 = vshrl.u32 %v742, 7
    %v744 = vsub.s32 0, %v743
    %v745 = vrot.slane %v740, %v744
    %v747 = vadd.f32 %v736, %v745
    %v748 = vadd.f32 %v737, %v745
    %v749 = vadd.f32 %v738, %v745
    %v750 = vadd.f32 %v739, %v745
    %v751 = vmax.f32 %v747, 0.0
    %v752 = vmax.f32 %v748, 0.0
    %v753 = vmax.f32 %v749, 0.0
    %v754 = vmax.f32 %v750, 0.0
    %v759 = vcombine.high %v751, %v751
    %v761 = vunpack.c.l.s4 1983009808
    %v762 = vunpack.c.0.s8 %v761
    %v763 = vlaneseq
    %v764 = vshrl.u32 %v763, 7
    %v765 = vsub.s32 %v762, %v764
    %v766 = vrot.slane %v751, %v765
    %v768 = vunpack.c.l.s4 1983009808
    %v769 = vunpack.c.0.s8 %v768
    %v770 = vlaneseq
    %v771 = vshrl.u32 %v770, 7
    %v772 = vsub.s32 %v769, %v771
    %v773 = vrot.slane %v759, %v772
    %v774 = vcombine.high %v766, %v766
    %v775 = vcombine.high %v773, %v773
    %v776 = vcombine.high %v752, %v752
    %v778 = vunpack.c.l.s4 1983009808
    %v779 = vunpack.c.0.s8 %v778
    %v780 = vlaneseq
    %v781 = vshrl.u32 %v780, 7
    %v782 = vsub.s32 %v779, %v781
    %v783 = vrot.slane %v752, %v782
    %v785 = vunpack.c.l.s4 1983009808
    %v786 = vunpack.c.0.s8 %v785
    %v787 = vlaneseq
    %v788 = vshrl.u32 %v787, 7
    %v789 = vsub.s32 %v786, %v788
    %v790 = vrot.slane %v776, %v789
    %v791 = vcombine.high %v783, %v783
    %v792 = vcombine.high %v790, %v790
    %v793 = vcombine.high %v753, %v753
    %v795 = vunpack.c.l.s4 1983009808
    %v796 = vunpack.c.0.s8 %v795
    %v797 = vlaneseq
    %v798 = vshrl.u32 %v797, 7
    %v799 = vsub.s32 %v796, %v798
    %v800 = vrot.slane %v753, %v799
    %v802 = vunpack.c.l.s4 1983009808
    %v803 = vunpack.c.0.s8 %v802
    %v804 = vlaneseq
    %v805 = vshrl.u32 %v804, 7
    %v806 = vsub.s32 %v803, %v805
    %v807 = vrot.slane %v793, %v806
    %v808 = vcombine.high %v800, %v800
    %v809 = vcombine.high %v807, %v807
    %v810 = vcombine.high %v754, %v754
    %v812 = vunpack.c.l.s4 1983009808
    %v813 = vunpack.c.0.s8 %v812
    %v814 = vlaneseq
    %v815 = vshrl.u32 %v814, 7
    %v816 = vsub.s32 %v813, %v815
    %v817 = vrot.slane %v754, %v816
    %v819 = vunpack.c.l.s4 1983009808
    %v820 = vunpack.c.0.s8 %v819
    %v821 = vlaneseq
    %v822 = vshrl.u32 %v821, 7
    %v823 = vsub.s32 %v820, %v822
    %v824 = vrot.slane %v810, %v823
    %v825 = vcombine.high %v817, %v817
    %v826 = vcombine.high %v824, %v824
    %vm843 = vcmask 58368
    %v844 = vsel %vm843, %v766, -inf
    %v845 = vrot.slane %v844, 4
    %v846 = vmax.f32 %v844, %v845
    %v847 = vrot.slane %v846, 2
    %v848 = vmax.f32 %v846, %v847
    %v849 = vrot.slane %v848, 1
    %v850 = vmax.f32 %v848, %v849
    %v851 = vsel %vm843, %v774, -inf
    %v852 = vrot.slane %v851, 4
    %v853 = vmax.f32 %v851, %v852
    %v854 = vrot.slane %v853, 2
    %v855 = vmax.f32 %v853, %v854
    %v856 = vrot.slane %v855, 1
    %v857 = vmax.f32 %v855, %v856
    %v858 = vsel %vm843, %v773, -inf
    %v859 = vrot.slane %v858, 4
    %v860 = vmax.f32 %v858, %v859
    %v861 = vrot.slane %v860, 2
    %v862 = vmax.f32 %v860, %v861
    %v863 = vrot.slane %v862, 1
    %v864 = vmax.f32 %v862, %v863
    %v865 = vsel %vm843, %v775, -inf
    %v866 = vrot.slane %v865, 4
    %v867 = vmax.f32 %v865, %v866
    %v868 = vrot.slane %v867, 2
    %v869 = vmax.f32 %v867, %v868
    %v870 = vrot.slane %v869, 1
    %v871 = vmax.f32 %v869, %v870
    %v872 = vsel %vm843, %v783, -inf
    %v873 = vrot.slane %v872, 4
    %v874 = vmax.f32 %v872, %v873
    %v875 = vrot.slane %v874, 2
    %v876 = vmax.f32 %v874, %v875
    %v877 = vrot.slane %v876, 1
    %v878 = vmax.f32 %v876, %v877
    %v879 = vsel %vm843, %v791, -inf
    %v880 = vrot.slane %v879, 4
    %v881 = vmax.f32 %v879, %v880
    %v882 = vrot.slane %v881, 2
    %v883 = vmax.f32 %v881, %v882
    %v884 = vrot.slane %v883, 1
    %v885 = vmax.f32 %v883, %v884
    %v886 = vsel %vm843, %v790, -inf
    %v887 = vrot.slane %v886, 4
    %v888 = vmax.f32 %v886, %v887
    %v889 = vrot.slane %v888, 2
    %v890 = vmax.f32 %v888, %v889
    %v891 = vrot.slane %v890, 1
    %v892 = vmax.f32 %v890, %v891
    %v893 = vsel %vm843, %v792, -inf
    %v894 = vrot.slane %v893, 4
    %v895 = vmax.f32 %v893, %v894
    %v896 = vrot.slane %v895, 2
    %v897 = vmax.f32 %v895, %v896
    %v898 = vrot.slane %v897, 1
    %v899 = vmax.f32 %v897, %v898
    %v900 = vsel %vm843, %v800, -inf
    %v901 = vrot.slane %v900, 4
    %v902 = vmax.f32 %v900, %v901
    %v903 = vrot.slane %v902, 2
    %v904 = vmax.f32 %v902, %v903
    %v905 = vrot.slane %v904, 1
    %v906 = vmax.f32 %v904, %v905
    %v907 = vsel %vm843, %v808, -inf
    %v908 = vrot.slane %v907, 4
    %v909 = vmax.f32 %v907, %v908
    %v910 = vrot.slane %v909, 2
    %v911 = vmax.f32 %v909, %v910
    %v912 = vrot.slane %v911, 1
    %v913 = vmax.f32 %v911, %v912
    %v914 = vsel %vm843, %v807, -inf
    %v915 = vrot.slane %v914, 4
    %v916 = vmax.f32 %v914, %v915
    %v917 = vrot.slane %v916, 2
    %v918 = vmax.f32 %v916, %v917
    %v919 = vrot.slane %v918, 1
    %v920 = vmax.f32 %v918, %v919
    %v921 = vsel %vm843, %v809, -inf
    %v922 = vrot.slane %v921, 4
    %v923 = vmax.f32 %v921, %v922
    %v924 = vrot.slane %v923, 2
    %v925 = vmax.f32 %v923, %v924
    %v926 = vrot.slane %v925, 1
    %v927 = vmax.f32 %v925, %v926
    %v928 = vsel %vm843, %v817, -inf
    %v929 = vrot.slane %v928, 4
    %v930 = vmax.f32 %v928, %v929
    %v931 = vrot.slane %v930, 2
    %v932 = vmax.f32 %v930, %v931
    %v933 = vrot.slane %v932, 1
    %v934 = vmax.f32 %v932, %v933
    %v935 = vsel %vm843, %v825, -inf
    %v936 = vrot.slane %v935, 4
    %v937 = vmax.f32 %v935, %v936
    %v938 = vrot.slane %v937, 2
    %v939 = vmax.f32 %v937, %v938
    %v940 = vrot.slane %v939, 1
    %v941 = vmax.f32 %v939, %v940
    %v942 = vsel %vm843, %v824, -inf
    %v943 = vrot.slane %v942, 4
    %v944 = vmax.f32 %v942, %v943
    %v945 = vrot.slane %v944, 2
    %v946 = vmax.f32 %v944, %v945
    %v947 = vrot.slane %v946, 1
    %v948 = vmax.f32 %v946, %v947
    %v949 = vsel %vm843, %v826, -inf
    %v950 = vrot.slane %v949, 4
    %v951 = vmax.f32 %v949, %v950
    %v952 = vrot.slane %v951, 2
    %v953 = vmax.f32 %v951, %v952
    %v954 = vrot.slane %v953, 1
    %v955 = vmax.f32 %v953, %v954
    %s956 = scalar_lea.vmem %s11, 8
    %v957 = vld [vmem:[%s956] sm:$0xff]
    %v958 = vld [vmem:[%s15] sm:$0xff]
    %v959 = vld [vmem:[%s15 + $0x8] sm:$0xff]
    %vm976 = vcmask 1041409
    %v977 = vsel %vm976, %v857, %v850
    %vm978 = vcmask 1042434
    %v979 = vsel %vm978, %v864, %v977
    %vm980 = vcmask 1043459
    %v981 = vsel %vm980, %v871, %v979
    %vm982 = vcmask 1044484
    %v983 = vsel %vm982, %v878, %v981
    %vm984 = vcmask 1045509
    %v985 = vsel %vm984, %v885, %v983
    %vm986 = vcmask 1046534
    %v987 = vsel %vm986, %v892, %v985
    %vm988 = vcmask 1047559
    %v989 = vsel %vm988, %v899, %v987
    %v990 = vsel %vm976, %v913, %v906
    %v991 = vsel %vm978, %v920, %v990
    %v992 = vsel %vm980, %v927, %v991
    %v993 = vsel %vm982, %v934, %v992
    %v994 = vsel %vm984, %v941, %v993
    %v995 = vsel %vm986, %v948, %v994
    %v996 = vsel %vm988, %v955, %v995
    %vm999 = vcmask 130048
    %v1001 = vsel %vm999, %v958, 0
    %v1004 = vsel %vm999, %v959, 0
    %1006 = vmatprep.subr.mxu0 0.0
    %1007 = vmatpush1.msra.mxu0 %v989
    %1008 = vmatprep.subr.mxu0 0.0
    %1009 = vmatpush1.msra.mxu0 %v996
    %1010 = vmatprep.subr.mxu0 0.0
    %1011 = vmatpush1.msra.mxu0 0.0
    %1012 = vmatprep.subr.mxu0 0.0
    %1013 = vmatpush1.msra.mxu0 0.0
    %1014 = vmatprep.subr.mxu0 0.0
    %1015 = vmatpush1.msra.mxu0 0.0
    %1016 = vmatprep.subr.mxu0 0.0
    %1017 = vmatpush1.msra.mxu0 0.0
    %1018 = vmatprep.subr.mxu0 0.0
    %1019 = vmatpush1.msra.mxu0 0.0
    %1020 = vmatprep.subr.mxu0 0.0
    %1021 = vmatpush1.msra.mxu0 0.0
    %1022 = vmatprep.subr.mxu0 0.0
    %1023 = vmatpush1.msra.mxu0 0.0
    %1024 = vmatprep.subr.mxu0 0.0
    %1025 = vmatpush1.msra.mxu0 0.0
    %1026 = vmatprep.subr.mxu0 0.0
    %1027 = vmatpush1.msra.mxu0 0.0
    %1028 = vmatprep.subr.mxu0 0.0
    %1029 = vmatpush1.msra.mxu0 0.0
    %1030 = vmatprep.subr.mxu0 0.0
    %1031 = vmatpush1.msra.mxu0 0.0
    %1032 = vmatprep.subr.mxu0 0.0
    %1033 = vmatpush1.msra.mxu0 0.0
    %1034 = vmatprep.subr.mxu0 0.0
    %1035 = vmatpush1.msra.mxu0 0.0
    %1036 = vmatprep.subr.mxu0 0.0
    %1037 = vmatpush1.msra.mxu0 0.0
    %1038 = vmatprep.subr.mxu0 0.0
    %1039 = vmatpush1.msra.mxu0 0.0
    %1040 = vmatprep.subr.mxu0 0.0
    %1041 = vmatpush1.msra.mxu0 0.0
    %1042 = vmatprep.subr.mxu0 0.0
    %1043 = vmatpush1.msra.mxu0 0.0
    %1044 = vmatprep.subr.mxu0 0.0
    %1045 = vmatpush1.msra.mxu0 0.0
    %1046 = vmatprep.subr.mxu0 0.0
    %1047 = vmatpush1.msra.mxu0 0.0
    %1048 = vmatprep.subr.mxu0 0.0
    %1049 = vmatpush1.msra.mxu0 0.0
    %1050 = vmatprep.subr.mxu0 0.0
    %1051 = vmatpush1.msra.mxu0 0.0
    %1052 = vmatprep.subr.mxu0 0.0
    %1053 = vmatpush1.msra.mxu0 0.0
    %1054 = vmatprep.subr.mxu0 0.0
    %1055 = vmatpush1.msra.mxu0 0.0
    %1056 = vmatprep.subr.mxu0 0.0
    %1057 = vmatpush1.msra.mxu0 0.0
    %1058 = vmatprep.subr.mxu0 0.0
    %1059 = vmatpush1.msra.mxu0 0.0
    %1060 = vmatprep.subr.mxu0 0.0
    %1061 = vmatpush1.msra.mxu0 0.0
    %1062 = vmatprep.subr.mxu0 0.0
    %1063 = vmatpush1.msra.mxu0 0.0
    %1064 = vmatprep.subr.mxu0 0.0
    %1065 = vmatpush1.msra.mxu0 0.0
    %1066 = vmatprep.subr.mxu0 0.0
    %1067 = vmatpush1.msra.mxu0 0.0
    %1068 = vmatprep.subr.mxu0 0.0
    %1069 = vmatpush1.msra.mxu0 0.0
    %1070 = vmatprep.mubr.f32.mxu0 0.0
    %1071 = vmatmul.mubr.f32.gmra.mrb[0].mxu0 %v1001
    %v1072 = vpop.f32.mrb[0].mxu0
    %v1073 = vadd.f32 0.0, %v1072
    %v1074 = vpop.f32.mrb[0].mxu0
    %1075 = vmatprep.mubr.f32.mxu0 0.0
    %1076 = vmatmul.mubr.f32.gmra.mrb[0].mxu0 %v1004
    %v1077 = vpop.f32.mrb[0].mxu0
    %v1078 = vadd.f32 0.0, %v1077
    %v1079 = vpop.f32.mrb[0].mxu0
    %1080 = vdwg.mxu0
    %v1081 = vld [vmem:[%s11] sm:$0xff]
    %v1083 = vsel %vm341, %v1073, 0
    %v1086 = vsel %vm341, %v1078, 0
    %1088 = vmatprep.subr.mxu0 0.0
    %1089 = vmatpush1.msra.mxu0 %v1081
    %1090 = vmatprep.subr.mxu0 0.0
    %1091 = vmatpush1.msra.mxu0 0.0
    %1092 = vmatprep.subr.mxu0 0.0
    %1093 = vmatpush1.msra.mxu0 0.0
    %1094 = vmatprep.subr.mxu0 0.0
    %1095 = vmatpush1.msra.mxu0 0.0
    %1096 = vmatprep.subr.mxu0 0.0
    %1097 = vmatpush1.msra.mxu0 0.0
    %1098 = vmatprep.subr.mxu0 0.0
    %1099 = vmatpush1.msra.mxu0 0.0
    %1100 = vmatprep.subr.mxu0 0.0
    %1101 = vmatpush1.msra.mxu0 0.0
    %1102 = vmatprep.subr.mxu0 0.0
    %1103 = vmatpush1.msra.mxu0 0.0
    %1104 = vmatprep.subr.mxu0 0.0
    %1105 = vmatpush1.msra.mxu0 0.0
    %1106 = vmatprep.subr.mxu0 0.0
    %1107 = vmatpush1.msra.mxu0 0.0
    %1108 = vmatprep.subr.mxu0 0.0
    %1109 = vmatpush1.msra.mxu0 0.0
    %1110 = vmatprep.subr.mxu0 0.0
    %1111 = vmatpush1.msra.mxu0 0.0
    %1112 = vmatprep.subr.mxu0 0.0
    %1113 = vmatpush1.msra.mxu0 0.0
    %1114 = vmatprep.subr.mxu0 0.0
    %1115 = vmatpush1.msra.mxu0 0.0
    %1116 = vmatprep.subr.mxu0 0.0
    %1117 = vmatpush1.msra.mxu0 0.0
    %1118 = vmatprep.subr.mxu0 0.0
    %1119 = vmatpush1.msra.mxu0 0.0
    %1120 = vmatprep.subr.mxu0 0.0
    %1121 = vmatpush1.msra.mxu0 0.0
    %1122 = vmatprep.subr.mxu0 0.0
    %1123 = vmatpush1.msra.mxu0 0.0
    %1124 = vmatprep.subr.mxu0 0.0
    %1125 = vmatpush1.msra.mxu0 0.0
    %1126 = vmatprep.subr.mxu0 0.0
    %1127 = vmatpush1.msra.mxu0 0.0
    %1128 = vmatprep.subr.mxu0 0.0
    %1129 = vmatpush1.msra.mxu0 0.0
    %1130 = vmatprep.subr.mxu0 0.0
    %1131 = vmatpush1.msra.mxu0 0.0
    %1132 = vmatprep.subr.mxu0 0.0
    %1133 = vmatpush1.msra.mxu0 0.0
    %1134 = vmatprep.subr.mxu0 0.0
    %1135 = vmatpush1.msra.mxu0 0.0
    %1136 = vmatprep.subr.mxu0 0.0
    %1137 = vmatpush1.msra.mxu0 0.0
    %1138 = vmatprep.subr.mxu0 0.0
    %1139 = vmatpush1.msra.mxu0 0.0
    %1140 = vmatprep.subr.mxu0 0.0
    %1141 = vmatpush1.msra.mxu0 0.0
    %1142 = vmatprep.subr.mxu0 0.0
    %1143 = vmatpush1.msra.mxu0 0.0
    %1144 = vmatprep.subr.mxu0 0.0
    %1145 = vmatpush1.msra.mxu0 0.0
    %1146 = vmatprep.subr.mxu0 0.0
    %1147 = vmatpush1.msra.mxu0 0.0
    %1148 = vmatprep.subr.mxu0 0.0
    %1149 = vmatpush1.msra.mxu0 0.0
    %1150 = vmatprep.subr.mxu0 0.0
    %1151 = vmatpush1.msra.mxu0 0.0
    %1152 = vmatprep.mubr.f32.mxu0 0.0
    %1153 = vmatmul.mubr.f32.gmra.mrb[0].mxu0 %v1083
    %v1154 = vpop.f32.mrb[0].mxu0
    %v1155 = vadd.f32 0.0, %v1154
    %v1156 = vpop.f32.mrb[0].mxu0
    %1157 = vmatprep.mubr.f32.mxu0 0.0
    %1158 = vmatmul.mubr.f32.gmra.mrb[0].mxu0 %v1086
    %v1159 = vpop.f32.mrb[0].mxu0
    %v1160 = vadd.f32 0.0, %v1159
    %v1161 = vpop.f32.mrb[0].mxu0
    %1162 = vdwg.mxu0
    %v1163 = vsel %vm341, %v989, 0
    %v1165 = vsel %vm341, %v996, 0
    %1167 = vmatprep.subr.mxu0 0.0
    %1168 = vmatpush1.msra.mxu0 %v957
    %1169 = vmatprep.subr.mxu0 0.0
    %1170 = vmatpush1.msra.mxu0 0.0
    %1171 = vmatprep.subr.mxu0 0.0
    %1172 = vmatpush1.msra.mxu0 0.0
    %1173 = vmatprep.subr.mxu0 0.0
    %1174 = vmatpush1.msra.mxu0 0.0
    %1175 = vmatprep.subr.mxu0 0.0
    %1176 = vmatpush1.msra.mxu0 0.0
    %1177 = vmatprep.subr.mxu0 0.0
    %1178 = vmatpush1.msra.mxu0 0.0
    %1179 = vmatprep.subr.mxu0 0.0
    %1180 = vmatpush1.msra.mxu0 0.0
    %1181 = vmatprep.subr.mxu0 0.0
    %1182 = vmatpush1.msra.mxu0 0.0
    %1183 = vmatprep.subr.mxu0 0.0
    %1184 = vmatpush1.msra.mxu0 0.0
    %1185 = vmatprep.subr.mxu0 0.0
    %1186 = vmatpush1.msra.mxu0 0.0
    %1187 = vmatprep.subr.mxu0 0.0
    %1188 = vmatpush1.msra.mxu0 0.0
    %1189 = vmatprep.subr.mxu0 0.0
    %1190 = vmatpush1.msra.mxu0 0.0
    %1191 = vmatprep.subr.mxu0 0.0
    %1192 = vmatpush1.msra.mxu0 0.0
    %1193 = vmatprep.subr.mxu0 0.0
    %1194 = vmatpush1.msra.mxu0 0.0
    %1195 = vmatprep.subr.mxu0 0.0
    %1196 = vmatpush1.msra.mxu0 0.0
    %1197 = vmatprep.subr.mxu0 0.0
    %1198 = vmatpush1.msra.mxu0 0.0
    %1199 = vmatprep.subr.mxu0 0.0
    %1200 = vmatpush1.msra.mxu0 0.0
    %1201 = vmatprep.subr.mxu0 0.0
    %1202 = vmatpush1.msra.mxu0 0.0
    %1203 = vmatprep.subr.mxu0 0.0
    %1204 = vmatpush1.msra.mxu0 0.0
    %1205 = vmatprep.subr.mxu0 0.0
    %1206 = vmatpush1.msra.mxu0 0.0
    %1207 = vmatprep.subr.mxu0 0.0
    %1208 = vmatpush1.msra.mxu0 0.0
    %1209 = vmatprep.subr.mxu0 0.0
    %1210 = vmatpush1.msra.mxu0 0.0
    %1211 = vmatprep.subr.mxu0 0.0
    %1212 = vmatpush1.msra.mxu0 0.0
    %1213 = vmatprep.subr.mxu0 0.0
    %1214 = vmatpush1.msra.mxu0 0.0
    %1215 = vmatprep.subr.mxu0 0.0
    %1216 = vmatpush1.msra.mxu0 0.0
    %1217 = vmatprep.subr.mxu0 0.0
    %1218 = vmatpush1.msra.mxu0 0.0
    %1219 = vmatprep.subr.mxu0 0.0
    %1220 = vmatpush1.msra.mxu0 0.0
    %1221 = vmatprep.subr.mxu0 0.0
    %1222 = vmatpush1.msra.mxu0 0.0
    %1223 = vmatprep.subr.mxu0 0.0
    %1224 = vmatpush1.msra.mxu0 0.0
    %1225 = vmatprep.subr.mxu0 0.0
    %1226 = vmatpush1.msra.mxu0 0.0
    %1227 = vmatprep.subr.mxu0 0.0
    %1228 = vmatpush1.msra.mxu0 0.0
    %1229 = vmatprep.subr.mxu0 0.0
    %1230 = vmatpush1.msra.mxu0 0.0
    %1231 = vmatprep.mubr.f32.mxu0 0.0
    %1232 = vmatmul.mubr.f32.gmra.mrb[0].mxu0 %v1163
    %v1233 = vpop.f32.mrb[0].mxu0
    %v1234 = vadd.f32 %v1155, %v1233
    %v1235 = vpop.f32.mrb[0].mxu0
    %1236 = vmatprep.mubr.f32.mxu0 0.0
    %1237 = vmatmul.mubr.f32.gmra.mrb[0].mxu0 %v1165
    %v1238 = vpop.f32.mrb[0].mxu0
    %v1239 = vadd.f32 %v1160, %v1238
    %v1240 = vpop.f32.mrb[0].mxu0
    %1241 = vdwg.mxu0
    %v1242 = vld [vmem:[%s17] sm:$0xff]
    %v1243 = vld [vmem:[%s17 + $0x8] sm:$0xff]
    %v1245 = vsel %vm999, %v1242, 0
    %v1248 = vsel %vm999, %v1243, 0
    %1250 = vmatprep.subr.mxu0 0.0
    %1251 = vmatpush1.msra.mxu0 %v989
    %1252 = vmatprep.subr.mxu0 0.0
    %1253 = vmatpush1.msra.mxu0 %v996
    %1254 = vmatprep.subr.mxu0 0.0
    %1255 = vmatpush1.msra.mxu0 0.0
    %1256 = vmatprep.subr.mxu0 0.0
    %1257 = vmatpush1.msra.mxu0 0.0
    %1258 = vmatprep.subr.mxu0 0.0
    %1259 = vmatpush1.msra.mxu0 0.0
    %1260 = vmatprep.subr.mxu0 0.0
    %1261 = vmatpush1.msra.mxu0 0.0
    %1262 = vmatprep.subr.mxu0 0.0
    %1263 = vmatpush1.msra.mxu0 0.0
    %1264 = vmatprep.subr.mxu0 0.0
    %1265 = vmatpush1.msra.mxu0 0.0
    %1266 = vmatprep.subr.mxu0 0.0
    %1267 = vmatpush1.msra.mxu0 0.0
    %1268 = vmatprep.subr.mxu0 0.0
    %1269 = vmatpush1.msra.mxu0 0.0
    %1270 = vmatprep.subr.mxu0 0.0
    %1271 = vmatpush1.msra.mxu0 0.0
    %1272 = vmatprep.subr.mxu0 0.0
    %1273 = vmatpush1.msra.mxu0 0.0
    %1274 = vmatprep.subr.mxu0 0.0
    %1275 = vmatpush1.msra.mxu0 0.0
    %1276 = vmatprep.subr.mxu0 0.0
    %1277 = vmatpush1.msra.mxu0 0.0
    %1278 = vmatprep.subr.mxu0 0.0
    %1279 = vmatpush1.msra.mxu0 0.0
    %1280 = vmatprep.subr.mxu0 0.0
    %1281 = vmatpush1.msra.mxu0 0.0
    %1282 = vmatprep.subr.mxu0 0.0
    %1283 = vmatpush1.msra.mxu0 0.0
    %1284 = vmatprep.subr.mxu0 0.0
    %1285 = vmatpush1.msra.mxu0 0.0
    %1286 = vmatprep.subr.mxu0 0.0
    %1287 = vmatpush1.msra.mxu0 0.0
    %1288 = vmatprep.subr.mxu0 0.0
    %1289 = vmatpush1.msra.mxu0 0.0
    %1290 = vmatprep.subr.mxu0 0.0
    %1291 = vmatpush1.msra.mxu0 0.0
    %1292 = vmatprep.subr.mxu0 0.0
    %1293 = vmatpush1.msra.mxu0 0.0
    %1294 = vmatprep.subr.mxu0 0.0
    %1295 = vmatpush1.msra.mxu0 0.0
    %1296 = vmatprep.subr.mxu0 0.0
    %1297 = vmatpush1.msra.mxu0 0.0
    %1298 = vmatprep.subr.mxu0 0.0
    %1299 = vmatpush1.msra.mxu0 0.0
    %1300 = vmatprep.subr.mxu0 0.0
    %1301 = vmatpush1.msra.mxu0 0.0
    %1302 = vmatprep.subr.mxu0 0.0
    %1303 = vmatpush1.msra.mxu0 0.0
    %1304 = vmatprep.subr.mxu0 0.0
    %1305 = vmatpush1.msra.mxu0 0.0
    %1306 = vmatprep.subr.mxu0 0.0
    %1307 = vmatpush1.msra.mxu0 0.0
    %1308 = vmatprep.subr.mxu0 0.0
    %1309 = vmatpush1.msra.mxu0 0.0
    %1310 = vmatprep.subr.mxu0 0.0
    %1311 = vmatpush1.msra.mxu0 0.0
    %1312 = vmatprep.subr.mxu0 0.0
    %1313 = vmatpush1.msra.mxu0 0.0
    %1314 = vmatprep.mubr.f32.mxu0 0.0
    %1315 = vmatmul.mubr.f32.gmra.mrb[0].mxu0 %v1245
    %v1316 = vpop.f32.mrb[0].mxu0
    %v1317 = vadd.f32 0.0, %v1316
    %v1318 = vpop.f32.mrb[0].mxu0
    %1319 = vmatprep.mubr.f32.mxu0 0.0
    %1320 = vmatmul.mubr.f32.gmra.mrb[0].mxu0 %v1248
    %v1321 = vpop.f32.mrb[0].mxu0
    %v1322 = vadd.f32 0.0, %v1321
    %v1323 = vpop.f32.mrb[0].mxu0
    %1324 = vdwg.mxu0
    %s1325 = scalar_lea.vmem %s11, 16
    %v1326 = vld [vmem:[%s1325] sm:$0xff]
    %v1328 = vsel %vm341, %v1317, 0
    %v1331 = vsel %vm341, %v1322, 0
    %1333 = vmatprep.subr.mxu0 0.0
    %1334 = vmatpush1.msra.mxu0 %v1326
    %1335 = vmatprep.subr.mxu0 0.0
    %1336 = vmatpush1.msra.mxu0 0.0
    %1337 = vmatprep.subr.mxu0 0.0
    %1338 = vmatpush1.msra.mxu0 0.0
    %1339 = vmatprep.subr.mxu0 0.0
    %1340 = vmatpush1.msra.mxu0 0.0
    %1341 = vmatprep.subr.mxu0 0.0
    %1342 = vmatpush1.msra.mxu0 0.0
    %1343 = vmatprep.subr.mxu0 0.0
    %1344 = vmatpush1.msra.mxu0 0.0
    %1345 = vmatprep.subr.mxu0 0.0
    %1346 = vmatpush1.msra.mxu0 0.0
    %1347 = vmatprep.subr.mxu0 0.0
    %1348 = vmatpush1.msra.mxu0 0.0
    %1349 = vmatprep.subr.mxu0 0.0
    %1350 = vmatpush1.msra.mxu0 0.0
    %1351 = vmatprep.subr.mxu0 0.0
    %1352 = vmatpush1.msra.mxu0 0.0
    %1353 = vmatprep.subr.mxu0 0.0
    %1354 = vmatpush1.msra.mxu0 0.0
    %1355 = vmatprep.subr.mxu0 0.0
    %1356 = vmatpush1.msra.mxu0 0.0
    %1357 = vmatprep.subr.mxu0 0.0
    %1358 = vmatpush1.msra.mxu0 0.0
    %1359 = vmatprep.subr.mxu0 0.0
    %1360 = vmatpush1.msra.mxu0 0.0
    %1361 = vmatprep.subr.mxu0 0.0
    %1362 = vmatpush1.msra.mxu0 0.0
    %1363 = vmatprep.subr.mxu0 0.0
    %1364 = vmatpush1.msra.mxu0 0.0
    %1365 = vmatprep.subr.mxu0 0.0
    %1366 = vmatpush1.msra.mxu0 0.0
    %1367 = vmatprep.subr.mxu0 0.0
    %1368 = vmatpush1.msra.mxu0 0.0
    %1369 = vmatprep.subr.mxu0 0.0
    %1370 = vmatpush1.msra.mxu0 0.0
    %1371 = vmatprep.subr.mxu0 0.0
    %1372 = vmatpush1.msra.mxu0 0.0
    %1373 = vmatprep.subr.mxu0 0.0
    %1374 = vmatpush1.msra.mxu0 0.0
    %1375 = vmatprep.subr.mxu0 0.0
    %1376 = vmatpush1.msra.mxu0 0.0
    %1377 = vmatprep.subr.mxu0 0.0
    %1378 = vmatpush1.msra.mxu0 0.0
    %1379 = vmatprep.subr.mxu0 0.0
    %1380 = vmatpush1.msra.mxu0 0.0
    %1381 = vmatprep.subr.mxu0 0.0
    %1382 = vmatpush1.msra.mxu0 0.0
    %1383 = vmatprep.subr.mxu0 0.0
    %1384 = vmatpush1.msra.mxu0 0.0
    %1385 = vmatprep.subr.mxu0 0.0
    %1386 = vmatpush1.msra.mxu0 0.0
    %1387 = vmatprep.subr.mxu0 0.0
    %1388 = vmatpush1.msra.mxu0 0.0
    %1389 = vmatprep.subr.mxu0 0.0
    %1390 = vmatpush1.msra.mxu0 0.0
    %1391 = vmatprep.subr.mxu0 0.0
    %1392 = vmatpush1.msra.mxu0 0.0
    %1393 = vmatprep.subr.mxu0 0.0
    %1394 = vmatpush1.msra.mxu0 0.0
    %1395 = vmatprep.subr.mxu0 0.0
    %1396 = vmatpush1.msra.mxu0 0.0
    %1397 = vmatprep.mubr.f32.mxu0 0.0
    %1398 = vmatmul.mubr.f32.gmra.mrb[0].mxu0 %v1328
    %v1399 = vpop.f32.mrb[0].mxu0
    %v1400 = vadd.f32 0.0, %v1399
    %v1401 = vpop.f32.mrb[0].mxu0
    %1402 = vmatprep.mubr.f32.mxu0 0.0
    %1403 = vmatmul.mubr.f32.gmra.mrb[0].mxu0 %v1331
    %v1404 = vpop.f32.mrb[0].mxu0
    %v1405 = vadd.f32 0.0, %v1404
    %v1406 = vpop.f32.mrb[0].mxu0
    %1407 = vdwg.mxu0
    %v1408 = vadd.f32 %v1234, %v1400
    %v1409 = vadd.f32 %v1239, %v1405
    %v1410 = vld [vmem:[%s13] sm:$0x1]
    %v1412 = vlaneseq
    %v1413 = vshrl.u32 %v1412, 7
    %v1414 = vsub.s32 0, %v1413
    %v1415 = vrot.slane %v1410, %v1414
    %v1417 = vadd.f32 %v1408, %v1415
    %v1418 = vadd.f32 %v1409, %v1415
    %v1419 = vmax.f32 %v1417, 0.0
    %v1420 = vmax.f32 %v1418, 0.0
    %v1423 = vcombine.high %v1419, %v1419
    %v1425 = vunpack.c.l.s4 1983009808
    %v1426 = vunpack.c.0.s8 %v1425
    %v1427 = vlaneseq
    %v1428 = vshrl.u32 %v1427, 7
    %v1429 = vsub.s32 %v1426, %v1428
    %v1430 = vrot.slane %v1419, %v1429
    %v1432 = vunpack.c.l.s4 1983009808
    %v1433 = vunpack.c.0.s8 %v1432
    %v1434 = vlaneseq
    %v1435 = vshrl.u32 %v1434, 7
    %v1436 = vsub.s32 %v1433, %v1435
    %v1437 = vrot.slane %v1423, %v1436
    %v1438 = vcombine.high %v1430, %v1430
    %v1439 = vcombine.high %v1437, %v1437
    %v1440 = vcombine.high %v1420, %v1420
    %v1442 = vunpack.c.l.s4 1983009808
    %v1443 = vunpack.c.0.s8 %v1442
    %v1444 = vlaneseq
    %v1445 = vshrl.u32 %v1444, 7
    %v1446 = vsub.s32 %v1443, %v1445
    %v1447 = vrot.slane %v1420, %v1446
    %v1449 = vunpack.c.l.s4 1983009808
    %v1450 = vunpack.c.0.s8 %v1449
    %v1451 = vlaneseq
    %v1452 = vshrl.u32 %v1451, 7
    %v1453 = vsub.s32 %v1450, %v1452
    %v1454 = vrot.slane %v1440, %v1453
    %v1455 = vcombine.high %v1447, %v1447
    %v1456 = vcombine.high %v1454, %v1454
    %vm1465 = vcmask 123904
    %v1466 = vsel %vm1465, %v1430, -inf
    %v1467 = vrot.slane %v1466, 4
    %v1468 = vmax.f32 %v1466, %v1467
    %v1469 = vrot.slane %v1468, 2
    %v1470 = vmax.f32 %v1468, %v1469
    %v1471 = vrot.slane %v1470, 1
    %v1472 = vmax.f32 %v1470, %v1471
    %v1473 = vsel %vm1465, %v1438, -inf
    %v1474 = vrot.slane %v1473, 4
    %v1475 = vmax.f32 %v1473, %v1474
    %v1476 = vrot.slane %v1475, 2
    %v1477 = vmax.f32 %v1475, %v1476
    %v1478 = vrot.slane %v1477, 1
    %v1479 = vmax.f32 %v1477, %v1478
    %v1480 = vsel %vm1465, %v1437, -inf
    %v1481 = vrot.slane %v1480, 4
    %v1482 = vmax.f32 %v1480, %v1481
    %v1483 = vrot.slane %v1482, 2
    %v1484 = vmax.f32 %v1482, %v1483
    %v1485 = vrot.slane %v1484, 1
    %v1486 = vmax.f32 %v1484, %v1485
    %v1487 = vsel %vm1465, %v1439, -inf
    %v1488 = vrot.slane %v1487, 4
    %v1489 = vmax.f32 %v1487, %v1488
    %v1490 = vrot.slane %v1489, 2
    %v1491 = vmax.f32 %v1489, %v1490
    %v1492 = vrot.slane %v1491, 1
    %v1493 = vmax.f32 %v1491, %v1492
    %v1494 = vsel %vm1465, %v1447, -inf
    %v1495 = vrot.slane %v1494, 4
    %v1496 = vmax.f32 %v1494, %v1495
    %v1497 = vrot.slane %v1496, 2
    %v1498 = vmax.f32 %v1496, %v1497
    %v1499 = vrot.slane %v1498, 1
    %v1500 = vmax.f32 %v1498, %v1499
    %v1501 = vsel %vm1465, %v1455, -inf
    %v1502 = vrot.slane %v1501, 4
    %v1503 = vmax.f32 %v1501, %v1502
    %v1504 = vrot.slane %v1503, 2
    %v1505 = vmax.f32 %v1503, %v1504
    %v1506 = vrot.slane %v1505, 1
    %v1507 = vmax.f32 %v1505, %v1506
    %v1508 = vsel %vm1465, %v1454, -inf
    %v1509 = vrot.slane %v1508, 4
    %v1510 = vmax.f32 %v1508, %v1509
    %v1511 = vrot.slane %v1510, 2
    %v1512 = vmax.f32 %v1510, %v1511
    %v1513 = vrot.slane %v1512, 1
    %v1514 = vmax.f32 %v1512, %v1513
    %v1515 = vsel %vm1465, %v1456, -inf
    %v1516 = vrot.slane %v1515, 4
    %v1517 = vmax.f32 %v1515, %v1516
    %v1518 = vrot.slane %v1517, 2
    %v1519 = vmax.f32 %v1517, %v1518
    %v1520 = vrot.slane %v1519, 1
    %v1521 = vmax.f32 %v1519, %v1520
    %s1522 = scalar_lea.vmem %s19, 16
    %v1523 = vld [vmem:[%s1522] sm:$0xff]
    %v1524 = vld [vmem:[%s1522 + $0x8] sm:$0xff]
    %v1525 = vld [vmem:[%s23] sm:$0xff]
    %v1534 = vsel %vm976, %v1479, %v1472
    %v1535 = vsel %vm978, %v1486, %v1534
    %v1536 = vsel %vm980, %v1493, %v1535
    %v1537 = vsel %vm982, %v1500, %v1536
    %v1538 = vsel %vm984, %v1507, %v1537
    %v1539 = vsel %vm986, %v1514, %v1538
    %v1540 = vsel %vm988, %v1521, %v1539
    %v1543 = vsel %vm341, %v1525, 0
    %1545 = vmatprep.subr.mxu0 0.0
    %1546 = vmatpush1.msra.mxu0 %v1540
    %1547 = vmatprep.subr.mxu0 0.0
    %1548 = vmatpush1.msra.mxu0 0.0
    %1549 = vmatprep.subr.mxu0 0.0
    %1550 = vmatpush1.msra.mxu0 0.0
    %1551 = vmatprep.subr.mxu0 0.0
    %1552 = vmatpush1.msra.mxu0 0.0
    %1553 = vmatprep.subr.mxu0 0.0
    %1554 = vmatpush1.msra.mxu0 0.0
    %1555 = vmatprep.subr.mxu0 0.0
    %1556 = vmatpush1.msra.mxu0 0.0
    %1557 = vmatprep.subr.mxu0 0.0
    %1558 = vmatpush1.msra.mxu0 0.0
    %1559 = vmatprep.subr.mxu0 0.0
    %1560 = vmatpush1.msra.mxu0 0.0
    %1561 = vmatprep.subr.mxu0 0.0
    %1562 = vmatpush1.msra.mxu0 0.0
    %1563 = vmatprep.subr.mxu0 0.0
    %1564 = vmatpush1.msra.mxu0 0.0
    %1565 = vmatprep.subr.mxu0 0.0
    %1566 = vmatpush1.msra.mxu0 0.0
    %1567 = vmatprep.subr.mxu0 0.0
    %1568 = vmatpush1.msra.mxu0 0.0
    %1569 = vmatprep.subr.mxu0 0.0
    %1570 = vmatpush1.msra.mxu0 0.0
    %1571 = vmatprep.subr.mxu0 0.0
    %1572 = vmatpush1.msra.mxu0 0.0
    %1573 = vmatprep.subr.mxu0 0.0
    %1574 = vmatpush1.msra.mxu0 0.0
    %1575 = vmatprep.subr.mxu0 0.0
    %1576 = vmatpush1.msra.mxu0 0.0
    %1577 = vmatprep.subr.mxu0 0.0
    %1578 = vmatpush1.msra.mxu0 0.0
    %1579 = vmatprep.subr.mxu0 0.0
    %1580 = vmatpush1.msra.mxu0 0.0
    %1581 = vmatprep.subr.mxu0 0.0
    %1582 = vmatpush1.msra.mxu0 0.0
    %1583 = vmatprep.subr.mxu0 0.0
    %1584 = vmatpush1.msra.mxu0 0.0
    %1585 = vmatprep.subr.mxu0 0.0
    %1586 = vmatpush1.msra.mxu0 0.0
    %1587 = vmatprep.subr.mxu0 0.0
    %1588 = vmatpush1.msra.mxu0 0.0
    %1589 = vmatprep.subr.mxu0 0.0
    %1590 = vmatpush1.msra.mxu0 0.0
    %1591 = vmatprep.subr.mxu0 0.0
    %1592 = vmatpush1.msra.mxu0 0.0
    %1593 = vmatprep.subr.mxu0 0.0
    %1594 = vmatpush1.msra.mxu0 0.0
    %1595 = vmatprep.subr.mxu0 0.0
    %1596 = vmatpush1.msra.mxu0 0.0
    %1597 = vmatprep.subr.mxu0 0.0
    %1598 = vmatpush1.msra.mxu0 0.0
    %1599 = vmatprep.subr.mxu0 0.0
    %1600 = vmatpush1.msra.mxu0 0.0
    %1601 = vmatprep.subr.mxu0 0.0
    %1602 = vmatpush1.msra.mxu0 0.0
    %1603 = vmatprep.subr.mxu0 0.0
    %1604 = vmatpush1.msra.mxu0 0.0
    %1605 = vmatprep.subr.mxu0 0.0
    %1606 = vmatpush1.msra.mxu0 0.0
    %1607 = vmatprep.subr.mxu0 0.0
    %1608 = vmatpush1.msra.mxu0 0.0
    %1609 = vmatprep.mubr.f32.mxu0 0.0
    %1610 = vmatmul.mubr.f32.gmra.mrb[0].mxu0 %v1543
    %v1611 = vpop.f32.mrb[0].mxu0
    %v1612 = vadd.f32 0.0, %v1611
    %v1613 = vpop.f32.mrb[0].mxu0
    %1614 = vdwg.mxu0
    %v1615 = vld [vmem:[%s19] sm:$0xff]
    %v1616 = vld [vmem:[%s19 + $0x8] sm:$0xff]
    %v1618 = vsel %vm999, %v1612, 0
    %1620 = vmatprep.subr.mxu0 0.0
    %1621 = vmatpush1.msra.mxu0 %v1615
    %1622 = vmatprep.subr.mxu0 0.0
    %1623 = vmatpush1.msra.mxu0 %v1616
    %1624 = vmatprep.subr.mxu0 0.0
    %1625 = vmatpush1.msra.mxu0 0.0
    %1626 = vmatprep.subr.mxu0 0.0
    %1627 = vmatpush1.msra.mxu0 0.0
    %1628 = vmatprep.subr.mxu0 0.0
    %1629 = vmatpush1.msra.mxu0 0.0
    %1630 = vmatprep.subr.mxu0 0.0
    %1631 = vmatpush1.msra.mxu0 0.0
    %1632 = vmatprep.subr.mxu0 0.0
    %1633 = vmatpush1.msra.mxu0 0.0
    %1634 = vmatprep.subr.mxu0 0.0
    %1635 = vmatpush1.msra.mxu0 0.0
    %1636 = vmatprep.subr.mxu0 0.0
    %1637 = vmatpush1.msra.mxu0 0.0
    %1638 = vmatprep.subr.mxu0 0.0
    %1639 = vmatpush1.msra.mxu0 0.0
    %1640 = vmatprep.subr.mxu0 0.0
    %1641 = vmatpush1.msra.mxu0 0.0
    %1642 = vmatprep.subr.mxu0 0.0
    %1643 = vmatpush1.msra.mxu0 0.0
    %1644 = vmatprep.subr.mxu0 0.0
    %1645 = vmatpush1.msra.mxu0 0.0
    %1646 = vmatprep.subr.mxu0 0.0
    %1647 = vmatpush1.msra.mxu0 0.0
    %1648 = vmatprep.subr.mxu0 0.0
    %1649 = vmatpush1.msra.mxu0 0.0
    %1650 = vmatprep.subr.mxu0 0.0
    %1651 = vmatpush1.msra.mxu0 0.0
    %1652 = vmatprep.subr.mxu0 0.0
    %1653 = vmatpush1.msra.mxu0 0.0
    %1654 = vmatprep.subr.mxu0 0.0
    %1655 = vmatpush1.msra.mxu0 0.0
    %1656 = vmatprep.subr.mxu0 0.0
    %1657 = vmatpush1.msra.mxu0 0.0
    %1658 = vmatprep.subr.mxu0 0.0
    %1659 = vmatpush1.msra.mxu0 0.0
    %1660 = vmatprep.subr.mxu0 0.0
    %1661 = vmatpush1.msra.mxu0 0.0
    %1662 = vmatprep.subr.mxu0 0.0
    %1663 = vmatpush1.msra.mxu0 0.0
    %1664 = vmatprep.subr.mxu0 0.0
    %1665 = vmatpush1.msra.mxu0 0.0
    %1666 = vmatprep.subr.mxu0 0.0
    %1667 = vmatpush1.msra.mxu0 0.0
    %1668 = vmatprep.subr.mxu0 0.0
    %1669 = vmatpush1.msra.mxu0 0.0
    %1670 = vmatprep.subr.mxu0 0.0
    %1671 = vmatpush1.msra.mxu0 0.0
    %1672 = vmatprep.subr.mxu0 0.0
    %1673 = vmatpush1.msra.mxu0 0.0
    %1674 = vmatprep.subr.mxu0 0.0
    %1675 = vmatpush1.msra.mxu0 0.0
    %1676 = vmatprep.subr.mxu0 0.0
    %1677 = vmatpush1.msra.mxu0 0.0
    %1678 = vmatprep.subr.mxu0 0.0
    %1679 = vmatpush1.msra.mxu0 0.0
    %1680 = vmatprep.subr.mxu0 0.0
    %1681 = vmatpush1.msra.mxu0 0.0
    %1682 = vmatprep.subr.mxu0 0.0
    %1683 = vmatpush1.msra.mxu0 0.0
    %1684 = vmatprep.mubr.f32.mxu0 0.0
    %1685 = vmatmul.mubr.f32.gmra.mrb[0].mxu0 %v1618
    %v1686 = vpop.f32.mrb[0].mxu0
    %v1687 = vadd.f32 0.0, %v1686
    %v1688 = vpop.f32.mrb[0].mxu0
    %1689 = vdwg.mxu0
    %v1690 = vsel %vm999, %v1540, 0
    %1692 = vmatprep.subr.mxu0 0.0
    %1693 = vmatpush1.msra.mxu0 %v1523
    %1694 = vmatprep.subr.mxu0 0.0
    %1695 = vmatpush1.msra.mxu0 %v1524
    %1696 = vmatprep.subr.mxu0 0.0
    %1697 = vmatpush1.msra.mxu0 0.0
    %1698 = vmatprep.subr.mxu0 0.0
    %1699 = vmatpush1.msra.mxu0 0.0
    %1700 = vmatprep.subr.mxu0 0.0
    %1701 = vmatpush1.msra.mxu0 0.0
    %1702 = vmatprep.subr.mxu0 0.0
    %1703 = vmatpush1.msra.mxu0 0.0
    %1704 = vmatprep.subr.mxu0 0.0
    %1705 = vmatpush1.msra.mxu0 0.0
    %1706 = vmatprep.subr.mxu0 0.0
    %1707 = vmatpush1.msra.mxu0 0.0
    %1708 = vmatprep.subr.mxu0 0.0
    %1709 = vmatpush1.msra.mxu0 0.0
    %1710 = vmatprep.subr.mxu0 0.0
    %1711 = vmatpush1.msra.mxu0 0.0
    %1712 = vmatprep.subr.mxu0 0.0
    %1713 = vmatpush1.msra.mxu0 0.0
    %1714 = vmatprep.subr.mxu0 0.0
    %1715 = vmatpush1.msra.mxu0 0.0
    %1716 = vmatprep.subr.mxu0 0.0
    %1717 = vmatpush1.msra.mxu0 0.0
    %1718 = vmatprep.subr.mxu0 0.0
    %1719 = vmatpush1.msra.mxu0 0.0
    %1720 = vmatprep.subr.mxu0 0.0
    %1721 = vmatpush1.msra.mxu0 0.0
    %1722 = vmatprep.subr.mxu0 0.0
    %1723 = vmatpush1.msra.mxu0 0.0
    %1724 = vmatprep.subr.mxu0 0.0
    %1725 = vmatpush1.msra.mxu0 0.0
    %1726 = vmatprep.subr.mxu0 0.0
    %1727 = vmatpush1.msra.mxu0 0.0
    %1728 = vmatprep.subr.mxu0 0.0
    %1729 = vmatpush1.msra.mxu0 0.0
    %1730 = vmatprep.subr.mxu0 0.0
    %1731 = vmatpush1.msra.mxu0 0.0
    %1732 = vmatprep.subr.mxu0 0.0
    %1733 = vmatpush1.msra.mxu0 0.0
    %1734 = vmatprep.subr.mxu0 0.0
    %1735 = vmatpush1.msra.mxu0 0.0
    %1736 = vmatprep.subr.mxu0 0.0
    %1737 = vmatpush1.msra.mxu0 0.0
    %1738 = vmatprep.subr.mxu0 0.0
    %1739 = vmatpush1.msra.mxu0 0.0
    %1740 = vmatprep.subr.mxu0 0.0
    %1741 = vmatpush1.msra.mxu0 0.0
    %1742 = vmatprep.subr.mxu0 0.0
    %1743 = vmatpush1.msra.mxu0 0.0
    %1744 = vmatprep.subr.mxu0 0.0
    %1745 = vmatpush1.msra.mxu0 0.0
    %1746 = vmatprep.subr.mxu0 0.0
    %1747 = vmatpush1.msra.mxu0 0.0
    %1748 = vmatprep.subr.mxu0 0.0
    %1749 = vmatpush1.msra.mxu0 0.0
    %1750 = vmatprep.subr.mxu0 0.0
    %1751 = vmatpush1.msra.mxu0 0.0
    %1752 = vmatprep.subr.mxu0 0.0
    %1753 = vmatpush1.msra.mxu0 0.0
    %1754 = vmatprep.subr.mxu0 0.0
    %1755 = vmatpush1.msra.mxu0 0.0
    %1756 = vmatprep.mubr.f32.mxu0 0.0
    %1757 = vmatmul.mubr.f32.gmra.mrb[0].mxu0 %v1690
    %v1758 = vpop.f32.mrb[0].mxu0
    %v1759 = vadd.f32 %v1687, %v1758
    %v1760 = vpop.f32.mrb[0].mxu0
    %1761 = vdwg.mxu0
    %v1762 = vld [vmem:[%s25] sm:$0xff]
    %v1764 = vsel %vm341, %v1762, 0
    %1766 = vmatprep.subr.mxu0 0.0
    %1767 = vmatpush1.msra.mxu0 %v1540
    %1768 = vmatprep.subr.mxu0 0.0
    %1769 = vmatpush1.msra.mxu0 0.0
    %1770 = vmatprep.subr.mxu0 0.0
    %1771 = vmatpush1.msra.mxu0 0.0
    %1772 = vmatprep.subr.mxu0 0.0
    %1773 = vmatpush1.msra.mxu0 0.0
    %1774 = vmatprep.subr.mxu0 0.0
    %1775 = vmatpush1.msra.mxu0 0.0
    %1776 = vmatprep.subr.mxu0 0.0
    %1777 = vmatpush1.msra.mxu0 0.0
    %1778 = vmatprep.subr.mxu0 0.0
    %1779 = vmatpush1.msra.mxu0 0.0
    %1780 = vmatprep.subr.mxu0 0.0
    %1781 = vmatpush1.msra.mxu0 0.0
    %1782 = vmatprep.subr.mxu0 0.0
    %1783 = vmatpush1.msra.mxu0 0.0
    %1784 = vmatprep.subr.mxu0 0.0
    %1785 = vmatpush1.msra.mxu0 0.0
    %1786 = vmatprep.subr.mxu0 0.0
    %1787 = vmatpush1.msra.mxu0 0.0
    %1788 = vmatprep.subr.mxu0 0.0
    %1789 = vmatpush1.msra.mxu0 0.0
    %1790 = vmatprep.subr.mxu0 0.0
    %1791 = vmatpush1.msra.mxu0 0.0
    %1792 = vmatprep.subr.mxu0 0.0
    %1793 = vmatpush1.msra.mxu0 0.0
    %1794 = vmatprep.subr.mxu0 0.0
    %1795 = vmatpush1.msra.mxu0 0.0
    %1796 = vmatprep.subr.mxu0 0.0
    %1797 = vmatpush1.msra.mxu0 0.0
    %1798 = vmatprep.subr.mxu0 0.0
    %1799 = vmatpush1.msra.mxu0 0.0
    %1800 = vmatprep.subr.mxu0 0.0
    %1801 = vmatpush1.msra.mxu0 0.0
    %1802 = vmatprep.subr.mxu0 0.0
    %1803 = vmatpush1.msra.mxu0 0.0
    %1804 = vmatprep.subr.mxu0 0.0
    %1805 = vmatpush1.msra.mxu0 0.0
    %1806 = vmatprep.subr.mxu0 0.0
    %1807 = vmatpush1.msra.mxu0 0.0
    %1808 = vmatprep.subr.mxu0 0.0
    %1809 = vmatpush1.msra.mxu0 0.0
    %1810 = vmatprep.subr.mxu0 0.0
    %1811 = vmatpush1.msra.mxu0 0.0
    %1812 = vmatprep.subr.mxu0 0.0
    %1813 = vmatpush1.msra.mxu0 0.0
    %1814 = vmatprep.subr.mxu0 0.0
    %1815 = vmatpush1.msra.mxu0 0.0
    %1816 = vmatprep.subr.mxu0 0.0
    %1817 = vmatpush1.msra.mxu0 0.0
    %1818 = vmatprep.subr.mxu0 0.0
    %1819 = vmatpush1.msra.mxu0 0.0
    %1820 = vmatprep.subr.mxu0 0.0
    %1821 = vmatpush1.msra.mxu0 0.0
    %1822 = vmatprep.subr.mxu0 0.0
    %1823 = vmatpush1.msra.mxu0 0.0
    %1824 = vmatprep.subr.mxu0 0.0
    %1825 = vmatpush1.msra.mxu0 0.0
    %1826 = vmatprep.subr.mxu0 0.0
    %1827 = vmatpush1.msra.mxu0 0.0
    %1828 = vmatprep.subr.mxu0 0.0
    %1829 = vmatpush1.msra.mxu0 0.0
    %1830 = vmatprep.mubr.f32.mxu0 0.0
    %1831 = vmatmul.mubr.f32.gmra.mrb[0].mxu0 %v1764
    %v1832 = vpop.f32.mrb[0].mxu0
    %v1833 = vadd.f32 0.0, %v1832
    %v1834 = vpop.f32.mrb[0].mxu0
    %1835 = vdwg.mxu0
    %s1836 = scalar_lea.vmem %s19, 32
    %v1837 = vld [vmem:[%s1836] sm:$0xff]
    %v1838 = vld [vmem:[%s1836 + $0x8] sm:$0xff]
    %v1840 = vsel %vm999, %v1833, 0
    %1842 = vmatprep.subr.mxu0 0.0
    %1843 = vmatpush1.msra.mxu0 %v1837
    %1844 = vmatprep.subr.mxu0 0.0
    %1845 = vmatpush1.msra.mxu0 %v1838
    %1846 = vmatprep.subr.mxu0 0.0
    %1847 = vmatpush1.msra.mxu0 0.0
    %1848 = vmatprep.subr.mxu0 0.0
    %1849 = vmatpush1.msra.mxu0 0.0
    %1850 = vmatprep.subr.mxu0 0.0
    %1851 = vmatpush1.msra.mxu0 0.0
    %1852 = vmatprep.subr.mxu0 0.0
    %1853 = vmatpush1.msra.mxu0 0.0
    %1854 = vmatprep.subr.mxu0 0.0
    %1855 = vmatpush1.msra.mxu0 0.0
    %1856 = vmatprep.subr.mxu0 0.0
    %1857 = vmatpush1.msra.mxu0 0.0
    %1858 = vmatprep.subr.mxu0 0.0
    %1859 = vmatpush1.msra.mxu0 0.0
    %1860 = vmatprep.subr.mxu0 0.0
    %1861 = vmatpush1.msra.mxu0 0.0
    %1862 = vmatprep.subr.mxu0 0.0
    %1863 = vmatpush1.msra.mxu0 0.0
    %1864 = vmatprep.subr.mxu0 0.0
    %1865 = vmatpush1.msra.mxu0 0.0
    %1866 = vmatprep.subr.mxu0 0.0
    %1867 = vmatpush1.msra.mxu0 0.0
    %1868 = vmatprep.subr.mxu0 0.0
    %1869 = vmatpush1.msra.mxu0 0.0
    %1870 = vmatprep.subr.mxu0 0.0
    %1871 = vmatpush1.msra.mxu0 0.0
    %1872 = vmatprep.subr.mxu0 0.0
    %1873 = vmatpush1.msra.mxu0 0.0
    %1874 = vmatprep.subr.mxu0 0.0
    %1875 = vmatpush1.msra.mxu0 0.0
    %1876 = vmatprep.subr.mxu0 0.0
    %1877 = vmatpush1.msra.mxu0 0.0
    %1878 = vmatprep.subr.mxu0 0.0
    %1879 = vmatpush1.msra.mxu0 0.0
    %1880 = vmatprep.subr.mxu0 0.0
    %1881 = vmatpush1.msra.mxu0 0.0
    %1882 = vmatprep.subr.mxu0 0.0
    %1883 = vmatpush1.msra.mxu0 0.0
    %1884 = vmatprep.subr.mxu0 0.0
    %1885 = vmatpush1.msra.mxu0 0.0
    %1886 = vmatprep.subr.mxu0 0.0
    %1887 = vmatpush1.msra.mxu0 0.0
    %1888 = vmatprep.subr.mxu0 0.0
    %1889 = vmatpush1.msra.mxu0 0.0
    %1890 = vmatprep.subr.mxu0 0.0
    %1891 = vmatpush1.msra.mxu0 0.0
    %1892 = vmatprep.subr.mxu0 0.0
    %1893 = vmatpush1.msra.mxu0 0.0
    %1894 = vmatprep.subr.mxu0 0.0
    %1895 = vmatpush1.msra.mxu0 0.0
    %1896 = vmatprep.subr.mxu0 0.0
    %1897 = vmatpush1.msra.mxu0 0.0
    %1898 = vmatprep.subr.mxu0 0.0
    %1899 = vmatpush1.msra.mxu0 0.0
    %1900 = vmatprep.subr.mxu0 0.0
    %1901 = vmatpush1.msra.mxu0 0.0
    %1902 = vmatprep.subr.mxu0 0.0
    %1903 = vmatpush1.msra.mxu0 0.0
    %1904 = vmatprep.subr.mxu0 0.0
    %1905 = vmatpush1.msra.mxu0 0.0
    %1906 = vmatprep.mubr.f32.mxu0 0.0
    %1907 = vmatmul.mubr.f32.gmra.mrb[0].mxu0 %v1840
    %v1908 = vpop.f32.mrb[0].mxu0
    %v1909 = vadd.f32 0.0, %v1908
    %v1910 = vpop.f32.mrb[0].mxu0
    %1911 = vdwg.mxu0
    %v1912 = vadd.f32 %v1759, %v1909
    %v1913 = vld [vmem:[%s21] sm:$0x1]
    %v1915 = vlaneseq
    %v1916 = vshrl.u32 %v1915, 7
    %v1917 = vsub.s32 0, %v1916
    %v1918 = vrot.slane %v1913, %v1917
    %v1920 = vadd.f32 %v1912, %v1918
    %v1921 = vmax.f32 %v1920, 0.0
    %v1923 = vcombine.high %v1921, %v1921
    %v1925 = vunpack.c.l.s4 1983009808
    %v1926 = vunpack.c.0.s8 %v1925
    %v1927 = vlaneseq
    %v1928 = vshrl.u32 %v1927, 7
    %v1929 = vsub.s32 %v1926, %v1928
    %v1930 = vrot.slane %v1921, %v1929
    %v1932 = vunpack.c.l.s4 1983009808
    %v1933 = vunpack.c.0.s8 %v1932
    %v1934 = vlaneseq
    %v1935 = vshrl.u32 %v1934, 7
    %v1936 = vsub.s32 %v1933, %v1935
    %v1937 = vrot.slane %v1923, %v1936
    %v1938 = vcombine.high %v1930, %v1930
    %v1939 = vcombine.high %v1937, %v1937
    %vm1944 = vcmask 254976
    %v1945 = vsel %vm1944, %v1930, -inf
    %v1946 = vrot.slane %v1945, 4
    %v1947 = vmax.f32 %v1945, %v1946
    %v1948 = vrot.slane %v1947, 2
    %v1949 = vmax.f32 %v1947, %v1948
    %v1950 = vrot.slane %v1949, 1
    %v1951 = vmax.f32 %v1949, %v1950
    %v1952 = vsel %vm1944, %v1938, -inf
    %v1953 = vrot.slane %v1952, 4
    %v1954 = vmax.f32 %v1952, %v1953
    %v1955 = vrot.slane %v1954, 2
    %v1956 = vmax.f32 %v1954, %v1955
    %v1957 = vrot.slane %v1956, 1
    %v1958 = vmax.f32 %v1956, %v1957
    %v1959 = vsel %vm1944, %v1937, -inf
    %v1960 = vrot.slane %v1959, 4
    %v1961 = vmax.f32 %v1959, %v1960
    %v1962 = vrot.slane %v1961, 2
    %v1963 = vmax.f32 %v1961, %v1962
    %v1964 = vrot.slane %v1963, 1
    %v1965 = vmax.f32 %v1963, %v1964
    %v1966 = vsel %vm1944, %v1939, -inf
    %v1967 = vrot.slane %v1966, 4
    %v1968 = vmax.f32 %v1966, %v1967
    %v1969 = vrot.slane %v1968, 2
    %v1970 = vmax.f32 %v1968, %v1969
    %v1971 = vrot.slane %v1970, 1
    %v1972 = vmax.f32 %v1970, %v1971
    %v1973 = vld [vmem:[%s27] sm:$0xff]
    %v1974 = vld [vmem:[%s27 + $0x8] sm:$0xff]
    %v1975 = vld [vmem:[%s27 + $0x10] sm:$0xff]
    %v1976 = vld [vmem:[%s27 + $0x18] sm:$0xff]
    %v1977 = vld [vmem:[%s29] sm:$0x1]
    %v1979 = vlaneseq
    %v1980 = vshrl.u32 %v1979, 7
    %v1981 = vsub.s32 0, %v1980
    %v1982 = vrot.slane %v1977, %v1981
    %v1988 = vsel %vm976, %v1958, %v1951
    %v1989 = vsel %vm978, %v1965, %v1988
    %v1990 = vsel %vm980, %v1972, %v1989
    %v1991 = vsel %vm242, %v1990, 0
    %1993 = vmatprep.subr.mxu0 0.0
    %1994 = vmatpush1.msra.mxu0 %v1973
    %1995 = vmatprep.subr.mxu0 0.0
    %1996 = vmatpush1.msra.mxu0 %v1974
    %1997 = vmatprep.subr.mxu0 0.0
    %1998 = vmatpush1.msra.mxu0 %v1975
    %1999 = vmatprep.subr.mxu0 0.0
    %2000 = vmatpush1.msra.mxu0 %v1976
    %2001 = vmatprep.subr.mxu0 0.0
    %2002 = vmatpush1.msra.mxu0 0.0
    %2003 = vmatprep.subr.mxu0 0.0
    %2004 = vmatpush1.msra.mxu0 0.0
    %2005 = vmatprep.subr.mxu0 0.0
    %2006 = vmatpush1.msra.mxu0 0.0
    %2007 = vmatprep.subr.mxu0 0.0
    %2008 = vmatpush1.msra.mxu0 0.0
    %2009 = vmatprep.subr.mxu0 0.0
    %2010 = vmatpush1.msra.mxu0 0.0
    %2011 = vmatprep.subr.mxu0 0.0
    %2012 = vmatpush1.msra.mxu0 0.0
    %2013 = vmatprep.subr.mxu0 0.0
    %2014 = vmatpush1.msra.mxu0 0.0
    %2015 = vmatprep.subr.mxu0 0.0
    %2016 = vmatpush1.msra.mxu0 0.0
    %2017 = vmatprep.subr.mxu0 0.0
    %2018 = vmatpush1.msra.mxu0 0.0
    %2019 = vmatprep.subr.mxu0 0.0
    %2020 = vmatpush1.msra.mxu0 0.0
    %2021 = vmatprep.subr.mxu0 0.0
    %2022 = vmatpush1.msra.mxu0 0.0
    %2023 = vmatprep.subr.mxu0 0.0
    %2024 = vmatpush1.msra.mxu0 0.0
    %2025 = vmatprep.subr.mxu0 0.0
    %2026 = vmatpush1.msra.mxu0 0.0
    %2027 = vmatprep.subr.mxu0 0.0
    %2028 = vmatpush1.msra.mxu0 0.0
    %2029 = vmatprep.subr.mxu0 0.0
    %2030 = vmatpush1.msra.mxu0 0.0
    %2031 = vmatprep.subr.mxu0 0.0
    %2032 = vmatpush1.msra.mxu0 0.0
    %2033 = vmatprep.subr.mxu0 0.0
    %2034 = vmatpush1.msra.mxu0 0.0
    %2035 = vmatprep.subr.mxu0 0.0
    %2036 = vmatpush1.msra.mxu0 0.0
    %2037 = vmatprep.subr.mxu0 0.0
    %2038 = vmatpush1.msra.mxu0 0.0
    %2039 = vmatprep.subr.mxu0 0.0
    %2040 = vmatpush1.msra.mxu0 0.0
    %2041 = vmatprep.subr.mxu0 0.0
    %2042 = vmatpush1.msra.mxu0 0.0
    %2043 = vmatprep.subr.mxu0 0.0
    %2044 = vmatpush1.msra.mxu0 0.0
    %2045 = vmatprep.subr.mxu0 0.0
    %2046 = vmatpush1.msra.mxu0 0.0
    %2047 = vmatprep.subr.mxu0 0.0
    %2048 = vmatpush1.msra.mxu0 0.0
    %2049 = vmatprep.subr.mxu0 0.0
    %2050 = vmatpush1.msra.mxu0 0.0
    %2051 = vmatprep.subr.mxu0 0.0
    %2052 = vmatpush1.msra.mxu0 0.0
    %2053 = vmatprep.subr.mxu0 0.0
    %2054 = vmatpush1.msra.mxu0 0.0
    %2055 = vmatprep.subr.mxu0 0.0
    %2056 = vmatpush1.msra.mxu0 0.0
    %2057 = vmatprep.mubr.f32.mxu0 0.0
    %2058 = vmatmul.mubr.f32.gmra.mrb[0].mxu0 %v1991
    %v2059 = vpop.f32.mrb[0].mxu0
    %v2060 = vadd.f32 %v1982, %v2059
    %v2061 = vpop.f32.mrb[0].mxu0
    %2062 = vdwg.mxu0
    %v2063 = vld [vmem:[%s35] sm:$0xff]
    %v2064 = vld [vmem:[%s35 + $0x8] sm:$0xff]
    %v2065 = vld [vmem:[%s35 + $0x10] sm:$0xff]
    %v2066 = vld [vmem:[%s35 + $0x18] sm:$0xff]
    %v2067 = vld [vmem:[%s31] sm:$0xff]
    %v2068 = vld [vmem:[%s33] sm:$0x1]
    %v2070 = vlaneseq
    %v2071 = vshrl.u32 %v2070, 7
    %v2072 = vsub.s32 0, %v2071
    %v2073 = vrot.slane %v2068, %v2072
    %v2076 = vsel %vm341, %v2060, 0
    %2078 = vmatprep.subr.mxu0 0.0
    %2079 = vmatpush1.msra.mxu0 %v2067
    %2080 = vmatprep.subr.mxu0 0.0
    %2081 = vmatpush1.msra.mxu0 0.0
    %2082 = vmatprep.subr.mxu0 0.0
    %2083 = vmatpush1.msra.mxu0 0.0
    %2084 = vmatprep.subr.mxu0 0.0
    %2085 = vmatpush1.msra.mxu0 0.0
    %2086 = vmatprep.subr.mxu0 0.0
    %2087 = vmatpush1.msra.mxu0 0.0
    %2088 = vmatprep.subr.mxu0 0.0
    %2089 = vmatpush1.msra.mxu0 0.0
    %2090 = vmatprep.subr.mxu0 0.0
    %2091 = vmatpush1.msra.mxu0 0.0
    %2092 = vmatprep.subr.mxu0 0.0
    %2093 = vmatpush1.msra.mxu0 0.0
    %2094 = vmatprep.subr.mxu0 0.0
    %2095 = vmatpush1.msra.mxu0 0.0
    %2096 = vmatprep.subr.mxu0 0.0
    %2097 = vmatpush1.msra.mxu0 0.0
    %2098 = vmatprep.subr.mxu0 0.0
    %2099 = vmatpush1.msra.mxu0 0.0
    %2100 = vmatprep.subr.mxu0 0.0
    %2101 = vmatpush1.msra.mxu0 0.0
    %2102 = vmatprep.subr.mxu0 0.0
    %2103 = vmatpush1.msra.mxu0 0.0
    %2104 = vmatprep.subr.mxu0 0.0
    %2105 = vmatpush1.msra.mxu0 0.0
    %2106 = vmatprep.subr.mxu0 0.0
    %2107 = vmatpush1.msra.mxu0 0.0
    %2108 = vmatprep.subr.mxu0 0.0
    %2109 = vmatpush1.msra.mxu0 0.0
    %2110 = vmatprep.subr.mxu0 0.0
    %2111 = vmatpush1.msra.mxu0 0.0
    %2112 = vmatprep.subr.mxu0 0.0
    %2113 = vmatpush1.msra.mxu0 0.0
    %2114 = vmatprep.subr.mxu0 0.0
    %2115 = vmatpush1.msra.mxu0 0.0
    %2116 = vmatprep.subr.mxu0 0.0
    %2117 = vmatpush1.msra.mxu0 0.0
    %2118 = vmatprep.subr.mxu0 0.0
    %2119 = vmatpush1.msra.mxu0 0.0
    %2120 = vmatprep.subr.mxu0 0.0
    %2121 = vmatpush1.msra.mxu0 0.0
    %2122 = vmatprep.subr.mxu0 0.0
    %2123 = vmatpush1.msra.mxu0 0.0
    %2124 = vmatprep.subr.mxu0 0.0
    %2125 = vmatpush1.msra.mxu0 0.0
    %2126 = vmatprep.subr.mxu0 0.0
    %2127 = vmatpush1.msra.mxu0 0.0
    %2128 = vmatprep.subr.mxu0 0.0
    %2129 = vmatpush1.msra.mxu0 0.0
    %2130 = vmatprep.subr.mxu0 0.0
    %2131 = vmatpush1.msra.mxu0 0.0
    %2132 = vmatprep.subr.mxu0 0.0
    %2133 = vmatpush1.msra.mxu0 0.0
    %2134 = vmatprep.subr.mxu0 0.0
    %2135 = vmatpush1.msra.mxu0 0.0
    %2136 = vmatprep.subr.mxu0 0.0
    %2137 = vmatpush1.msra.mxu0 0.0
    %2138 = vmatprep.subr.mxu0 0.0
    %2139 = vmatpush1.msra.mxu0 0.0
    %2140 = vmatprep.subr.mxu0 0.0
    %2141 = vmatpush1.msra.mxu0 0.0
    %2142 = vmatprep.mubr.f32.mxu0 0.0
    %2143 = vmatmul.mubr.f32.gmra.mrb[0].mxu0 %v2076
    %v2144 = vpop.f32.mrb[0].mxu0
    %v2145 = vadd.f32 %v2073, %v2144
    %v2146 = vpop.f32.mrb[0].mxu0
    %2147 = vdwg.mxu0
    %vm2148 = vcmask 117760
    %v2149 = vsel %vm2148, %v2145, -inf
    %2150 = vmax.xlane.f32.xlu0 %v2149
    %v2151 = vpop.xlane.xlu0 %2150
    %v2152 = vsub.f32 %v2145, %v2151
    %v2153 = vmul.f32 %v2152, 1.442695
    %v2154 = vpow.pop %v2153
    %v2155 = vsel %vm2148, %v2154, 0.0
    %2156 = vadd.xlane.f32.xlu0 %v2155
    %v2157 = vpop.xlane.xlu0 %2156
    %v2158 = vrcp.pop %v2157
    %v2159 = vmul.f32 %v2154, %v2158
    %v2160 = vld [vmem:[%s37] sm:$0xff]
    %v2161 = vld [vmem:[%s39] sm:$0xff]
    %v2162 = vld [vmem:[%s39 + $0x8] sm:$0xff]
    %2163 = vmatprep.subr.mxu0 0.0
    %2164 = vmatpush1.msra.mxu0 %v2161
    %2165 = vmatprep.subr.mxu0 0.0
    %2166 = vmatpush1.msra.mxu0 %v2162
    %2167 = vmatprep.subr.mxu0 0.0
    %2168 = vmatpush1.msra.mxu0 0.0
    %2169 = vmatprep.subr.mxu0 0.0
    %2170 = vmatpush1.msra.mxu0 0.0
    %2171 = vmatprep.subr.mxu0 0.0
    %2172 = vmatpush1.msra.mxu0 0.0
    %2173 = vmatprep.subr.mxu0 0.0
    %2174 = vmatpush1.msra.mxu0 0.0
    %2175 = vmatprep.subr.mxu0 0.0
    %2176 = vmatpush1.msra.mxu0 0.0
    %2177 = vmatprep.subr.mxu0 0.0
    %2178 = vmatpush1.msra.mxu0 0.0
    %2179 = vmatprep.subr.mxu0 0.0
    %2180 = vmatpush1.msra.mxu0 0.0
    %2181 = vmatprep.subr.mxu0 0.0
    %2182 = vmatpush1.msra.mxu0 0.0
    %2183 = vmatprep.subr.mxu0 0.0
    %2184 = vmatpush1.msra.mxu0 0.0
    %2185 = vmatprep.subr.mxu0 0.0
    %2186 = vmatpush1.msra.mxu0 0.0
    %2187 = vmatprep.subr.mxu0 0.0
    %2188 = vmatpush1.msra.mxu0 0.0
    %2189 = vmatprep.subr.mxu0 0.0
    %2190 = vmatpush1.msra.mxu0 0.0
    %2191 = vmatprep.subr.mxu0 0.0
    %2192 = vmatpush1.msra.mxu0 0.0
    %2193 = vmatprep.subr.mxu0 0.0
    %2194 = vmatpush1.msra.mxu0 0.0
    %2195 = vmatprep.subr.mxu0 0.0
    %2196 = vmatpush1.msra.mxu0 0.0
    %2197 = vmatprep.subr.mxu0 0.0
    %2198 = vmatpush1.msra.mxu0 0.0
    %2199 = vmatprep.subr.mxu0 0.0
    %2200 = vmatpush1.msra.mxu0 0.0
    %2201 = vmatprep.subr.mxu0 0.0
    %2202 = vmatpush1.msra.mxu0 0.0
    %2203 = vmatprep.subr.mxu0 0.0
    %2204 = vmatpush1.msra.mxu0 0.0
    %2205 = vmatprep.subr.mxu0 0.0
    %2206 = vmatpush1.msra.mxu0 0.0
    %2207 = vmatprep.subr.mxu0 0.0
    %2208 = vmatpush1.msra.mxu0 0.0
    %2209 = vmatprep.subr.mxu0 0.0
    %2210 = vmatpush1.msra.mxu0 0.0
    %2211 = vmatprep.subr.mxu0 0.0
    %2212 = vmatpush1.msra.mxu0 0.0
    %2213 = vmatprep.subr.mxu0 0.0
    %2214 = vmatpush1.msra.mxu0 0.0
    %2215 = vmatprep.subr.mxu0 0.0
    %2216 = vmatpush1.msra.mxu0 0.0
    %2217 = vmatprep.subr.mxu0 0.0
    %2218 = vmatpush1.msra.mxu0 0.0
    %2219 = vmatprep.subr.mxu0 0.0
    %2220 = vmatpush1.msra.mxu0 0.0
    %2221 = vmatprep.subr.mxu0 0.0
    %2222 = vmatpush1.msra.mxu0 0.0
    %2223 = vmatprep.subr.mxu0 0.0
    %2224 = vmatpush1.msra.mxu0 0.0
    %2225 = vmatprep.subr.mxu0 0.0
    %2226 = vmatpush1.msra.mxu0 0.0
    %2227 = vmatprep.mubr.f32.mxu0 0.0
    %2228 = vmatmul.mubr.f32.gmra.mrb[0].mxu0 %v1690
    %v2229 = vpop.f32.mrb[0].mxu0
    %v2230 = vadd.f32 0.0, %v2229
    %v2231 = vpop.f32.mrb[0].mxu0
    %2232 = vdwg.mxu0
    %vm2233 = vcmask 31744
    %v2235 = vsel %vm2233, %v2160, 0
    %vm2237 = vcmask 1043456
    %v2238 = vsel %vm2237, %v2060, 0
    %2240 = vmatprep.subr.mxu0 0.0
    %2241 = vmatpush1.msra.mxu0 %v2238
    %2242 = vmatprep.subr.mxu0 0.0
    %2243 = vmatpush1.msra.mxu0 0.0
    %2244 = vmatprep.subr.mxu0 0.0
    %2245 = vmatpush1.msra.mxu0 0.0
    %2246 = vmatprep.subr.mxu0 0.0
    %2247 = vmatpush1.msra.mxu0 0.0
    %2248 = vmatprep.subr.mxu0 0.0
    %2249 = vmatpush1.msra.mxu0 0.0
    %2250 = vmatprep.subr.mxu0 0.0
    %2251 = vmatpush1.msra.mxu0 0.0
    %2252 = vmatprep.subr.mxu0 0.0
    %2253 = vmatpush1.msra.mxu0 0.0
    %2254 = vmatprep.subr.mxu0 0.0
    %2255 = vmatpush1.msra.mxu0 0.0
    %2256 = vmatprep.subr.mxu0 0.0
    %2257 = vmatpush1.msra.mxu0 0.0
    %2258 = vmatprep.subr.mxu0 0.0
    %2259 = vmatpush1.msra.mxu0 0.0
    %2260 = vmatprep.subr.mxu0 0.0
    %2261 = vmatpush1.msra.mxu0 0.0
    %2262 = vmatprep.subr.mxu0 0.0
    %2263 = vmatpush1.msra.mxu0 0.0
    %2264 = vmatprep.subr.mxu0 0.0
    %2265 = vmatpush1.msra.mxu0 0.0
    %2266 = vmatprep.subr.mxu0 0.0
    %2267 = vmatpush1.msra.mxu0 0.0
    %2268 = vmatprep.subr.mxu0 0.0
    %2269 = vmatpush1.msra.mxu0 0.0
    %2270 = vmatprep.subr.mxu0 0.0
    %2271 = vmatpush1.msra.mxu0 0.0
    %2272 = vmatprep.subr.mxu0 0.0
    %2273 = vmatpush1.msra.mxu0 0.0
    %2274 = vmatprep.subr.mxu0 0.0
    %2275 = vmatpush1.msra.mxu0 0.0
    %2276 = vmatprep.subr.mxu0 0.0
    %2277 = vmatpush1.msra.mxu0 0.0
    %2278 = vmatprep.subr.mxu0 0.0
    %2279 = vmatpush1.msra.mxu0 0.0
    %2280 = vmatprep.subr.mxu0 0.0
    %2281 = vmatpush1.msra.mxu0 0.0
    %2282 = vmatprep.subr.mxu0 0.0
    %2283 = vmatpush1.msra.mxu0 0.0
    %2284 = vmatprep.subr.mxu0 0.0
    %2285 = vmatpush1.msra.mxu0 0.0
    %2286 = vmatprep.subr.mxu0 0.0
    %2287 = vmatpush1.msra.mxu0 0.0
    %2288 = vmatprep.subr.mxu0 0.0
    %2289 = vmatpush1.msra.mxu0 0.0
    %2290 = vmatprep.subr.mxu0 0.0
    %2291 = vmatpush1.msra.mxu0 0.0
    %2292 = vmatprep.subr.mxu0 0.0
    %2293 = vmatpush1.msra.mxu0 0.0
    %2294 = vmatprep.subr.mxu0 0.0
    %2295 = vmatpush1.msra.mxu0 0.0
    %2296 = vmatprep.subr.mxu0 0.0
    %2297 = vmatpush1.msra.mxu0 0.0
    %2298 = vmatprep.subr.mxu0 0.0
    %2299 = vmatpush1.msra.mxu0 0.0
    %2300 = vmatprep.subr.mxu0 0.0
    %2301 = vmatpush1.msra.mxu0 0.0
    %2302 = vmatprep.subr.mxu0 0.0
    %2303 = vmatpush1.msra.mxu0 0.0
    %2304 = vmatprep.mubr.f32.mxu0 0.0
    %2305 = vmatmul.mubr.f32.gmra.mrb[0].mxu0 %v2235
    %v2306 = vpop.f32.mrb[0].mxu0
    %v2307 = vadd.f32 %v2230, %v2306
    %v2308 = vpop.f32.mrb[0].mxu0
    %2309 = vdwg.mxu0
    %v2310 = vld [vmem:[#allocation2] sm:$0x1]
    %v2312 = vlaneseq
    %v2313 = vshrl.u32 %v2312, 7
    %v2314 = vsub.s32 0, %v2313
    %v2315 = vrot.slane %v2310, %v2314
    %v2317 = vadd.f32 %v2307, %v2315
    %s2318 = scalar_lea.vmem %s43, 8
    %v2319 = vld [vmem:[%s2318] sm:$0xff]
    %2320 = vmatprep.subr.mxu0 0.0
    %2321 = vmatpush1.msra.mxu0 %v2317
    %2322 = vmatprep.subr.mxu0 0.0
    %2323 = vmatpush1.msra.mxu0 0.0
    %2324 = vmatprep.subr.mxu0 0.0
    %2325 = vmatpush1.msra.mxu0 0.0
    %2326 = vmatprep.subr.mxu0 0.0
    %2327 = vmatpush1.msra.mxu0 0.0
    %2328 = vmatprep.subr.mxu0 0.0
    %2329 = vmatpush1.msra.mxu0 0.0
    %2330 = vmatprep.subr.mxu0 0.0
    %2331 = vmatpush1.msra.mxu0 0.0
    %2332 = vmatprep.subr.mxu0 0.0
    %2333 = vmatpush1.msra.mxu0 0.0
    %2334 = vmatprep.subr.mxu0 0.0
    %2335 = vmatpush1.msra.mxu0 0.0
    %2336 = vmatprep.subr.mxu0 0.0
    %2337 = vmatpush1.msra.mxu0 0.0
    %2338 = vmatprep.subr.mxu0 0.0
    %2339 = vmatpush1.msra.mxu0 0.0
    %2340 = vmatprep.subr.mxu0 0.0
    %2341 = vmatpush1.msra.mxu0 0.0
    %2342 = vmatprep.subr.mxu0 0.0
    %2343 = vmatpush1.msra.mxu0 0.0
    %2344 = vmatprep.subr.mxu0 0.0
    %2345 = vmatpush1.msra.mxu0 0.0
    %2346 = vmatprep.subr.mxu0 0.0
    %2347 = vmatpush1.msra.mxu0 0.0
    %2348 = vmatprep.subr.mxu0 0.0
    %2349 = vmatpush1.msra.mxu0 0.0
    %2350 = vmatprep.subr.mxu0 0.0
    %2351 = vmatpush1.msra.mxu0 0.0
    %2352 = vmatprep.subr.mxu0 0.0
    %2353 = vmatpush1.msra.mxu0 0.0
    %2354 = vmatprep.subr.mxu0 0.0
    %2355 = vmatpush1.msra.mxu0 0.0
    %2356 = vmatprep.subr.mxu0 0.0
    %2357 = vmatpush1.msra.mxu0 0.0
    %2358 = vmatprep.subr.mxu0 0.0
    %2359 = vmatpush1.msra.mxu0 0.0
    %2360 = vmatprep.subr.mxu0 0.0
    %2361 = vmatpush1.msra.mxu0 0.0
    %2362 = vmatprep.subr.mxu0 0.0
    %2363 = vmatpush1.msra.mxu0 0.0
    %2364 = vmatprep.subr.mxu0 0.0
    %2365 = vmatpush1.msra.mxu0 0.0
    %2366 = vmatprep.subr.mxu0 0.0
    %2367 = vmatpush1.msra.mxu0 0.0
    %2368 = vmatprep.subr.mxu0 0.0
    %2369 = vmatpush1.msra.mxu0 0.0
    %2370 = vmatprep.subr.mxu0 0.0
    %2371 = vmatpush1.msra.mxu0 0.0
    %2372 = vmatprep.subr.mxu0 0.0
    %2373 = vmatpush1.msra.mxu0 0.0
    %2374 = vmatprep.subr.mxu0 0.0
    %2375 = vmatpush1.msra.mxu0 0.0
    %2376 = vmatprep.subr.mxu0 0.0
    %2377 = vmatpush1.msra.mxu0 0.0
    %2378 = vmatprep.subr.mxu0 0.0
    %2379 = vmatpush1.msra.mxu0 0.0
    %2380 = vmatprep.subr.mxu0 0.0
    %2381 = vmatpush1.msra.mxu0 0.0
    %2382 = vmatprep.subr.mxu0 0.0
    %2383 = vmatpush1.msra.mxu0 0.0
    %2384 = vmatprep.mubr.f32.mxu0 0.0
    %2385 = vmatmul.mubr.f32.gmra.mrb[0].mxu0 %v1543
    %v2386 = vpop.f32.mrb[0].mxu0
    %v2387 = vadd.f32 0.0, %v2386
    %v2388 = vpop.f32.mrb[0].mxu0
    %2389 = vdwg.mxu0
    %v2390 = vld [vmem:[%s43] sm:$0xff]
    %v2392 = vsel %vm341, %v2387, 0
    %2394 = vmatprep.subr.mxu0 0.0
    %2395 = vmatpush1.msra.mxu0 %v2390
    %2396 = vmatprep.subr.mxu0 0.0
    %2397 = vmatpush1.msra.mxu0 0.0
    %2398 = vmatprep.subr.mxu0 0.0
    %2399 = vmatpush1.msra.mxu0 0.0
    %2400 = vmatprep.subr.mxu0 0.0
    %2401 = vmatpush1.msra.mxu0 0.0
    %2402 = vmatprep.subr.mxu0 0.0
    %2403 = vmatpush1.msra.mxu0 0.0
    %2404 = vmatprep.subr.mxu0 0.0
    %2405 = vmatpush1.msra.mxu0 0.0
    %2406 = vmatprep.subr.mxu0 0.0
    %2407 = vmatpush1.msra.mxu0 0.0
    %2408 = vmatprep.subr.mxu0 0.0
    %2409 = vmatpush1.msra.mxu0 0.0
    %2410 = vmatprep.subr.mxu0 0.0
    %2411 = vmatpush1.msra.mxu0 0.0
    %2412 = vmatprep.subr.mxu0 0.0
    %2413 = vmatpush1.msra.mxu0 0.0
    %2414 = vmatprep.subr.mxu0 0.0
    %2415 = vmatpush1.msra.mxu0 0.0
    %2416 = vmatprep.subr.mxu0 0.0
    %2417 = vmatpush1.msra.mxu0 0.0
    %2418 = vmatprep.subr.mxu0 0.0
    %2419 = vmatpush1.msra.mxu0 0.0
    %2420 = vmatprep.subr.mxu0 0.0
    %2421 = vmatpush1.msra.mxu0 0.0
    %2422 = vmatprep.subr.mxu0 0.0
    %2423 = vmatpush1.msra.mxu0 0.0
    %2424 = vmatprep.subr.mxu0 0.0
    %2425 = vmatpush1.msra.mxu0 0.0
    %2426 = vmatprep.subr.mxu0 0.0
    %2427 = vmatpush1.msra.mxu0 0.0
    %2428 = vmatprep.subr.mxu0 0.0
    %2429 = vmatpush1.msra.mxu0 0.0
    %2430 = vmatprep.subr.mxu0 0.0
    %2431 = vmatpush1.msra.mxu0 0.0
    %2432 = vmatprep.subr.mxu0 0.0
    %2433 = vmatpush1.msra.mxu0 0.0
    %2434 = vmatprep.subr.mxu0 0.0
    %2435 = vmatpush1.msra.mxu0 0.0
    %2436 = vmatprep.subr.mxu0 0.0
    %2437 = vmatpush1.msra.mxu0 0.0
    %2438 = vmatprep.subr.mxu0 0.0
    %2439 = vmatpush1.msra.mxu0 0.0
    %2440 = vmatprep.subr.mxu0 0.0
    %2441 = vmatpush1.msra.mxu0 0.0
    %2442 = vmatprep.subr.mxu0 0.0
    %2443 = vmatpush1.msra.mxu0 0.0
    %2444 = vmatprep.subr.mxu0 0.0
    %2445 = vmatpush1.msra.mxu0 0.0
    %2446 = vmatprep.subr.mxu0 0.0
    %2447 = vmatpush1.msra.mxu0 0.0
    %2448 = vmatprep.subr.mxu0 0.0
    %2449 = vmatpush1.msra.mxu0 0.0
    %2450 = vmatprep.subr.mxu0 0.0
    %2451 = vmatpush1.msra.mxu0 0.0
    %2452 = vmatprep.subr.mxu0 0.0
    %2453 = vmatpush1.msra.mxu0 0.0
    %2454 = vmatprep.subr.mxu0 0.0
    %2455 = vmatpush1.msra.mxu0 0.0
    %2456 = vmatprep.subr.mxu0 0.0
    %2457 = vmatpush1.msra.mxu0 0.0
    %2458 = vmatprep.mubr.f32.mxu0 0.0
    %2459 = vmatmul.mubr.f32.gmra.mrb[0].mxu0 %v2392
    %v2460 = vpop.f32.mrb[0].mxu0
    %v2461 = vadd.f32 0.0, %v2460
    %v2462 = vpop.f32.mrb[0].mxu0
    %2463 = vdwg.mxu0
    %v2465 = vsel %vm341, %v2317, 0
    %2467 = vmatprep.subr.mxu0 0.0
    %2468 = vmatpush1.msra.mxu0 %v2319
    %2469 = vmatprep.subr.mxu0 0.0
    %2470 = vmatpush1.msra.mxu0 0.0
    %2471 = vmatprep.subr.mxu0 0.0
    %2472 = vmatpush1.msra.mxu0 0.0
    %2473 = vmatprep.subr.mxu0 0.0
    %2474 = vmatpush1.msra.mxu0 0.0
    %2475 = vmatprep.subr.mxu0 0.0
    %2476 = vmatpush1.msra.mxu0 0.0
    %2477 = vmatprep.subr.mxu0 0.0
    %2478 = vmatpush1.msra.mxu0 0.0
    %2479 = vmatprep.subr.mxu0 0.0
    %2480 = vmatpush1.msra.mxu0 0.0
    %2481 = vmatprep.subr.mxu0 0.0
    %2482 = vmatpush1.msra.mxu0 0.0
    %2483 = vmatprep.subr.mxu0 0.0
    %2484 = vmatpush1.msra.mxu0 0.0
    %2485 = vmatprep.subr.mxu0 0.0
    %2486 = vmatpush1.msra.mxu0 0.0
    %2487 = vmatprep.subr.mxu0 0.0
    %2488 = vmatpush1.msra.mxu0 0.0
    %2489 = vmatprep.subr.mxu0 0.0
    %2490 = vmatpush1.msra.mxu0 0.0
    %2491 = vmatprep.subr.mxu0 0.0
    %2492 = vmatpush1.msra.mxu0 0.0
    %2493 = vmatprep.subr.mxu0 0.0
    %2494 = vmatpush1.msra.mxu0 0.0
    %2495 = vmatprep.subr.mxu0 0.0
    %2496 = vmatpush1.msra.mxu0 0.0
    %2497 = vmatprep.subr.mxu0 0.0
    %2498 = vmatpush1.msra.mxu0 0.0
    %2499 = vmatprep.subr.mxu0 0.0
    %2500 = vmatpush1.msra.mxu0 0.0
    %2501 = vmatprep.subr.mxu0 0.0
    %2502 = vmatpush1.msra.mxu0 0.0
    %2503 = vmatprep.subr.mxu0 0.0
    %2504 = vmatpush1.msra.mxu0 0.0
    %2505 = vmatprep.subr.mxu0 0.0
    %2506 = vmatpush1.msra.mxu0 0.0
    %2507 = vmatprep.subr.mxu0 0.0
    %2508 = vmatpush1.msra.mxu0 0.0
    %2509 = vmatprep.subr.mxu0 0.0
    %2510 = vmatpush1.msra.mxu0 0.0
    %2511 = vmatprep.subr.mxu0 0.0
    %2512 = vmatpush1.msra.mxu0 0.0
    %2513 = vmatprep.subr.mxu0 0.0
    %2514 = vmatpush1.msra.mxu0 0.0
    %2515 = vmatprep.subr.mxu0 0.0
    %2516 = vmatpush1.msra.mxu0 0.0
    %2517 = vmatprep.subr.mxu0 0.0
    %2518 = vmatpush1.msra.mxu0 0.0
    %2519 = vmatprep.subr.mxu0 0.0
    %2520 = vmatpush1.msra.mxu0 0.0
    %2521 = vmatprep.subr.mxu0 0.0
    %2522 = vmatpush1.msra.mxu0 0.0
    %2523 = vmatprep.subr.mxu0 0.0
    %2524 = vmatpush1.msra.mxu0 0.0
    %2525 = vmatprep.subr.mxu0 0.0
    %2526 = vmatpush1.msra.mxu0 0.0
    %2527 = vmatprep.subr.mxu0 0.0
    %2528 = vmatpush1.msra.mxu0 0.0
    %2529 = vmatprep.subr.mxu0 0.0
    %2530 = vmatpush1.msra.mxu0 0.0
    %2531 = vmatprep.mubr.f32.mxu0 0.0
    %2532 = vmatmul.mubr.f32.gmra.mrb[0].mxu0 %v2465
    %v2533 = vpop.f32.mrb[0].mxu0
    %v2534 = vadd.f32 %v2461, %v2533
    %v2535 = vpop.f32.mrb[0].mxu0
    %2536 = vdwg.mxu0
    %2537 = vmatprep.subr.mxu0 0.0
    %2538 = vmatpush1.msra.mxu0 %v2317
    %2539 = vmatprep.subr.mxu0 0.0
    %2540 = vmatpush1.msra.mxu0 0.0
    %2541 = vmatprep.subr.mxu0 0.0
    %2542 = vmatpush1.msra.mxu0 0.0
    %2543 = vmatprep.subr.mxu0 0.0
    %2544 = vmatpush1.msra.mxu0 0.0
    %2545 = vmatprep.subr.mxu0 0.0
    %2546 = vmatpush1.msra.mxu0 0.0
    %2547 = vmatprep.subr.mxu0 0.0
    %2548 = vmatpush1.msra.mxu0 0.0
    %2549 = vmatprep.subr.mxu0 0.0
    %2550 = vmatpush1.msra.mxu0 0.0
    %2551 = vmatprep.subr.mxu0 0.0
    %2552 = vmatpush1.msra.mxu0 0.0
    %2553 = vmatprep.subr.mxu0 0.0
    %2554 = vmatpush1.msra.mxu0 0.0
    %2555 = vmatprep.subr.mxu0 0.0
    %2556 = vmatpush1.msra.mxu0 0.0
    %2557 = vmatprep.subr.mxu0 0.0
    %2558 = vmatpush1.msra.mxu0 0.0
    %2559 = vmatprep.subr.mxu0 0.0
    %2560 = vmatpush1.msra.mxu0 0.0
    %2561 = vmatprep.subr.mxu0 0.0
    %2562 = vmatpush1.msra.mxu0 0.0
    %2563 = vmatprep.subr.mxu0 0.0
    %2564 = vmatpush1.msra.mxu0 0.0
    %2565 = vmatprep.subr.mxu0 0.0
    %2566 = vmatpush1.msra.mxu0 0.0
    %2567 = vmatprep.subr.mxu0 0.0
    %2568 = vmatpush1.msra.mxu0 0.0
    %2569 = vmatprep.subr.mxu0 0.0
    %2570 = vmatpush1.msra.mxu0 0.0
    %2571 = vmatprep.subr.mxu0 0.0
    %2572 = vmatpush1.msra.mxu0 0.0
    %2573 = vmatprep.subr.mxu0 0.0
    %2574 = vmatpush1.msra.mxu0 0.0
    %2575 = vmatprep.subr.mxu0 0.0
    %2576 = vmatpush1.msra.mxu0 0.0
    %2577 = vmatprep.subr.mxu0 0.0
    %2578 = vmatpush1.msra.mxu0 0.0
    %2579 = vmatprep.subr.mxu0 0.0
    %2580 = vmatpush1.msra.mxu0 0.0
    %2581 = vmatprep.subr.mxu0 0.0
    %2582 = vmatpush1.msra.mxu0 0.0
    %2583 = vmatprep.subr.mxu0 0.0
    %2584 = vmatpush1.msra.mxu0 0.0
    %2585 = vmatprep.subr.mxu0 0.0
    %2586 = vmatpush1.msra.mxu0 0.0
    %2587 = vmatprep.subr.mxu0 0.0
    %2588 = vmatpush1.msra.mxu0 0.0
    %2589 = vmatprep.subr.mxu0 0.0
    %2590 = vmatpush1.msra.mxu0 0.0
    %2591 = vmatprep.subr.mxu0 0.0
    %2592 = vmatpush1.msra.mxu0 0.0
    %2593 = vmatprep.subr.mxu0 0.0
    %2594 = vmatpush1.msra.mxu0 0.0
    %2595 = vmatprep.subr.mxu0 0.0
    %2596 = vmatpush1.msra.mxu0 0.0
    %2597 = vmatprep.subr.mxu0 0.0
    %2598 = vmatpush1.msra.mxu0 0.0
    %2599 = vmatprep.subr.mxu0 0.0
    %2600 = vmatpush1.msra.mxu0 0.0
    %2601 = vmatprep.mubr.f32.mxu0 0.0
    %2602 = vmatmul.mubr.f32.gmra.mrb[0].mxu0 %v1764
    %v2603 = vpop.f32.mrb[0].mxu0
    %v2604 = vadd.f32 0.0, %v2603
    %v2605 = vpop.f32.mrb[0].mxu0
    %2606 = vdwg.mxu0
    %s2607 = scalar_lea.vmem %s43, 16
    %v2608 = vld [vmem:[%s2607] sm:$0xff]
    %v2610 = vsel %vm341, %v2604, 0
    %2612 = vmatprep.subr.mxu0 0.0
    %2613 = vmatpush1.msra.mxu0 %v2608
    %2614 = vmatprep.subr.mxu0 0.0
    %2615 = vmatpush1.msra.mxu0 0.0
    %2616 = vmatprep.subr.mxu0 0.0
    %2617 = vmatpush1.msra.mxu0 0.0
    %2618 = vmatprep.subr.mxu0 0.0
    %2619 = vmatpush1.msra.mxu0 0.0
    %2620 = vmatprep.subr.mxu0 0.0
    %2621 = vmatpush1.msra.mxu0 0.0
    %2622 = vmatprep.subr.mxu0 0.0
    %2623 = vmatpush1.msra.mxu0 0.0
    %2624 = vmatprep.subr.mxu0 0.0
    %2625 = vmatpush1.msra.mxu0 0.0
    %2626 = vmatprep.subr.mxu0 0.0
    %2627 = vmatpush1.msra.mxu0 0.0
    %2628 = vmatprep.subr.mxu0 0.0
    %2629 = vmatpush1.msra.mxu0 0.0
    %2630 = vmatprep.subr.mxu0 0.0
    %2631 = vmatpush1.msra.mxu0 0.0
    %2632 = vmatprep.subr.mxu0 0.0
    %2633 = vmatpush1.msra.mxu0 0.0
    %2634 = vmatprep.subr.mxu0 0.0
    %2635 = vmatpush1.msra.mxu0 0.0
    %2636 = vmatprep.subr.mxu0 0.0
    %2637 = vmatpush1.msra.mxu0 0.0
    %2638 = vmatprep.subr.mxu0 0.0
    %2639 = vmatpush1.msra.mxu0 0.0
    %2640 = vmatprep.subr.mxu0 0.0
    %2641 = vmatpush1.msra.mxu0 0.0
    %2642 = vmatprep.subr.mxu0 0.0
    %2643 = vmatpush1.msra.mxu0 0.0
    %2644 = vmatprep.subr.mxu0 0.0
    %2645 = vmatpush1.msra.mxu0 0.0
    %2646 = vmatprep.subr.mxu0 0.0
    %2647 = vmatpush1.msra.mxu0 0.0
    %2648 = vmatprep.subr.mxu0 0.0
    %2649 = vmatpush1.msra.mxu0 0.0
    %2650 = vmatprep.subr.mxu0 0.0
    %2651 = vmatpush1.msra.mxu0 0.0
    %2652 = vmatprep.subr.mxu0 0.0
    %2653 = vmatpush1.msra.mxu0 0.0
    %2654 = vmatprep.subr.mxu0 0.0
    %2655 = vmatpush1.msra.mxu0 0.0
    %2656 = vmatprep.subr.mxu0 0.0
    %2657 = vmatpush1.msra.mxu0 0.0
    %2658 = vmatprep.subr.mxu0 0.0
    %2659 = vmatpush1.msra.mxu0 0.0
    %2660 = vmatprep.subr.mxu0 0.0
    %2661 = vmatpush1.msra.mxu0 0.0
    %2662 = vmatprep.subr.mxu0 0.0
    %2663 = vmatpush1.msra.mxu0 0.0
    %2664 = vmatprep.subr.mxu0 0.0
    %2665 = vmatpush1.msra.mxu0 0.0
    %2666 = vmatprep.subr.mxu0 0.0
    %2667 = vmatpush1.msra.mxu0 0.0
    %2668 = vmatprep.subr.mxu0 0.0
    %2669 = vmatpush1.msra.mxu0 0.0
    %2670 = vmatprep.subr.mxu0 0.0
    %2671 = vmatpush1.msra.mxu0 0.0
    %2672 = vmatprep.subr.mxu0 0.0
    %2673 = vmatpush1.msra.mxu0 0.0
    %2674 = vmatprep.subr.mxu0 0.0
    %2675 = vmatpush1.msra.mxu0 0.0
    %2676 = vmatprep.mubr.f32.mxu0 0.0
    %2677 = vmatmul.mubr.f32.gmra.mrb[0].mxu0 %v2610
    %v2678 = vpop.f32.mrb[0].mxu0
    %v2679 = vadd.f32 0.0, %v2678
    %v2680 = vpop.f32.mrb[0].mxu0
    %2681 = vdwg.mxu0
    %v2682 = vadd.f32 %v2534, %v2679
    %v2683 = vld [vmem:[#allocation4] sm:$0x1]
    %v2685 = vlaneseq
    %v2686 = vshrl.u32 %v2685, 7
    %v2687 = vsub.s32 0, %v2686
    %v2688 = vrot.slane %v2683, %v2687
    %v2690 = vadd.f32 %v2682, %v2688
    %v2691 = vld [vmem:[%s47] sm:$0xff]
    %v2692 = vld [vmem:[#allocation6] sm:$0x1]
    %v2694 = vlaneseq
    %v2695 = vshrl.u32 %v2694, 7
    %v2696 = vsub.s32 0, %v2695
    %v2697 = vrot.slane %v2692, %v2696
    %v2700 = vsel %vm341, %v2690, 0
    %2702 = vmatprep.subr.mxu0 0.0
    %2703 = vmatpush1.msra.mxu0 %v2691
    %2704 = vmatprep.subr.mxu0 0.0
    %2705 = vmatpush1.msra.mxu0 0.0
    %2706 = vmatprep.subr.mxu0 0.0
    %2707 = vmatpush1.msra.mxu0 0.0
    %2708 = vmatprep.subr.mxu0 0.0
    %2709 = vmatpush1.msra.mxu0 0.0
    %2710 = vmatprep.subr.mxu0 0.0
    %2711 = vmatpush1.msra.mxu0 0.0
    %2712 = vmatprep.subr.mxu0 0.0
    %2713 = vmatpush1.msra.mxu0 0.0
    %2714 = vmatprep.subr.mxu0 0.0
    %2715 = vmatpush1.msra.mxu0 0.0
    %2716 = vmatprep.subr.mxu0 0.0
    %2717 = vmatpush1.msra.mxu0 0.0
    %2718 = vmatprep.subr.mxu0 0.0
    %2719 = vmatpush1.msra.mxu0 0.0
    %2720 = vmatprep.subr.mxu0 0.0
    %2721 = vmatpush1.msra.mxu0 0.0
    %2722 = vmatprep.subr.mxu0 0.0
    %2723 = vmatpush1.msra.mxu0 0.0
    %2724 = vmatprep.subr.mxu0 0.0
    %2725 = vmatpush1.msra.mxu0 0.0
    %2726 = vmatprep.subr.mxu0 0.0
    %2727 = vmatpush1.msra.mxu0 0.0
    %2728 = vmatprep.subr.mxu0 0.0
    %2729 = vmatpush1.msra.mxu0 0.0
    %2730 = vmatprep.subr.mxu0 0.0
    %2731 = vmatpush1.msra.mxu0 0.0
    %2732 = vmatprep.subr.mxu0 0.0
    %2733 = vmatpush1.msra.mxu0 0.0
    %2734 = vmatprep.subr.mxu0 0.0
    %2735 = vmatpush1.msra.mxu0 0.0
    %2736 = vmatprep.subr.mxu0 0.0
    %2737 = vmatpush1.msra.mxu0 0.0
    %2738 = vmatprep.subr.mxu0 0.0
    %2739 = vmatpush1.msra.mxu0 0.0
    %2740 = vmatprep.subr.mxu0 0.0
    %2741 = vmatpush1.msra.mxu0 0.0
    %2742 = vmatprep.subr.mxu0 0.0
    %2743 = vmatpush1.msra.mxu0 0.0
    %2744 = vmatprep.subr.mxu0 0.0
    %2745 = vmatpush1.msra.mxu0 0.0
    %2746 = vmatprep.subr.mxu0 0.0
    %2747 = vmatpush1.msra.mxu0 0.0
    %2748 = vmatprep.subr.mxu0 0.0
    %2749 = vmatpush1.msra.mxu0 0.0
    %2750 = vmatprep.subr.mxu0 0.0
    %2751 = vmatpush1.msra.mxu0 0.0
    %2752 = vmatprep.subr.mxu0 0.0
    %2753 = vmatpush1.msra.mxu0 0.0
    %2754 = vmatprep.subr.mxu0 0.0
    %2755 = vmatpush1.msra.mxu0 0.0
    %2756 = vmatprep.subr.mxu0 0.0
    %2757 = vmatpush1.msra.mxu0 0.0
    %2758 = vmatprep.subr.mxu0 0.0
    %2759 = vmatpush1.msra.mxu0 0.0
    %2760 = vmatprep.subr.mxu0 0.0
    %2761 = vmatpush1.msra.mxu0 0.0
    %2762 = vmatprep.subr.mxu0 0.0
    %2763 = vmatpush1.msra.mxu0 0.0
    %2764 = vmatprep.subr.mxu0 0.0
    %2765 = vmatpush1.msra.mxu0 0.0
    %2766 = vmatprep.mubr.f32.mxu0 0.0
    %2767 = vmatmul.mubr.f32.gmra.mrb[0].mxu0 %v2700
    %v2768 = vpop.f32.mrb[0].mxu0
    %v2769 = vadd.f32 %v2697, %v2768
    %v2770 = vpop.f32.mrb[0].mxu0
    %2771 = vdwg.mxu0
    %vm2772 = vcmask 121856
    %v2773 = vsel %vm2772, %v2769, -inf
    %2774 = vmax.xlane.f32.xlu0 %v2773
    %v2775 = vpop.xlane.xlu0 %2774
    %v2776 = vsub.f32 %v2769, %v2775
    %v2777 = vmul.f32 %v2776, 1.442695
    %v2778 = vpow.pop %v2777
    %v2779 = vsel %vm2772, %v2778, 0.0
    %2780 = vadd.xlane.f32.xlu0 %v2779
    %v2781 = vpop.xlane.xlu0 %2780
    %v2782 = vrcp.pop %v2781
    %v2783 = vmul.f32 %v2778, %v2782
    %v2784 = vld [vmem:[%s51] sm:$0xff]
    %v2785 = vld [vmem:[%s51 + $0x8] sm:$0xff]
    %v2786 = vld [vmem:[%s51 + $0x10] sm:$0xff]
    %v2787 = vld [vmem:[%s51 + $0x18] sm:$0xff]
    %v2789 = vsel %vm341, %v2784, 0
    %v2792 = vsel %vm341, %v2785, 0
    %v2795 = vsel %vm341, %v2786, 0
    %v2798 = vsel %vm341, %v2787, 0
    %2800 = vmatprep.subr.mxu0 0.0
    %2801 = vmatpush1.msra.mxu0 %v2783
    %2802 = vmatprep.subr.mxu0 0.0
    %2803 = vmatpush1.msra.mxu0 0.0
    %2804 = vmatprep.subr.mxu0 0.0
    %2805 = vmatpush1.msra.mxu0 0.0
    %2806 = vmatprep.subr.mxu0 0.0
    %2807 = vmatpush1.msra.mxu0 0.0
    %2808 = vmatprep.subr.mxu0 0.0
    %2809 = vmatpush1.msra.mxu0 0.0
    %2810 = vmatprep.subr.mxu0 0.0
    %2811 = vmatpush1.msra.mxu0 0.0
    %2812 = vmatprep.subr.mxu0 0.0
    %2813 = vmatpush1.msra.mxu0 0.0
    %2814 = vmatprep.subr.mxu0 0.0
    %2815 = vmatpush1.msra.mxu0 0.0
    %2816 = vmatprep.subr.mxu0 0.0
    %2817 = vmatpush1.msra.mxu0 0.0
    %2818 = vmatprep.subr.mxu0 0.0
    %2819 = vmatpush1.msra.mxu0 0.0
    %2820 = vmatprep.subr.mxu0 0.0
    %2821 = vmatpush1.msra.mxu0 0.0
    %2822 = vmatprep.subr.mxu0 0.0
    %2823 = vmatpush1.msra.mxu0 0.0
    %2824 = vmatprep.subr.mxu0 0.0
    %2825 = vmatpush1.msra.mxu0 0.0
    %2826 = vmatprep.subr.mxu0 0.0
    %2827 = vmatpush1.msra.mxu0 0.0
    %2828 = vmatprep.subr.mxu0 0.0
    %2829 = vmatpush1.msra.mxu0 0.0
    %2830 = vmatprep.subr.mxu0 0.0
    %2831 = vmatpush1.msra.mxu0 0.0
    %2832 = vmatprep.subr.mxu0 0.0
    %2833 = vmatpush1.msra.mxu0 0.0
    %2834 = vmatprep.subr.mxu0 0.0
    %2835 = vmatpush1.msra.mxu0 0.0
    %2836 = vmatprep.subr.mxu0 0.0
    %2837 = vmatpush1.msra.mxu0 0.0
    %2838 = vmatprep.subr.mxu0 0.0
    %2839 = vmatpush1.msra.mxu0 0.0
    %2840 = vmatprep.subr.mxu0 0.0
    %2841 = vmatpush1.msra.mxu0 0.0
    %2842 = vmatprep.subr.mxu0 0.0
    %2843 = vmatpush1.msra.mxu0 0.0
    %2844 = vmatprep.subr.mxu0 0.0
    %2845 = vmatpush1.msra.mxu0 0.0
    %2846 = vmatprep.subr.mxu0 0.0
    %2847 = vmatpush1.msra.mxu0 0.0
    %2848 = vmatprep.subr.mxu0 0.0
    %2849 = vmatpush1.msra.mxu0 0.0
    %2850 = vmatprep.subr.mxu0 0.0
    %2851 = vmatpush1.msra.mxu0 0.0
    %2852 = vmatprep.subr.mxu0 0.0
    %2853 = vmatpush1.msra.mxu0 0.0
    %2854 = vmatprep.subr.mxu0 0.0
    %2855 = vmatpush1.msra.mxu0 0.0
    %2856 = vmatprep.subr.mxu0 0.0
    %2857 = vmatpush1.msra.mxu0 0.0
    %2858 = vmatprep.subr.mxu0 0.0
    %2859 = vmatpush1.msra.mxu0 0.0
    %2860 = vmatprep.subr.mxu0 0.0
    %2861 = vmatpush1.msra.mxu0 0.0
    %2862 = vmatprep.subr.mxu0 0.0
    %2863 = vmatpush1.msra.mxu0 0.0
    %2864 = vmatprep.mubr.f32.mxu0 0.0
    %2865 = vmatmul.mubr.f32.gmra.mrb[0].mxu0 %v2789
    %v2866 = vpop.f32.mrb[0].mxu0
    %v2867 = vadd.f32 0.0, %v2866
    %v2868 = vpop.f32.mrb[0].mxu0
    %2869 = vmatprep.mubr.f32.mxu0 0.0
    %2870 = vmatmul.mubr.f32.gmra.mrb[0].mxu0 %v2792
    %v2871 = vpop.f32.mrb[0].mxu0
    %v2872 = vadd.f32 0.0, %v2871
    %v2873 = vpop.f32.mrb[0].mxu0
    %2874 = vmatprep.mubr.f32.mxu0 0.0
    %2875 = vmatmul.mubr.f32.gmra.mrb[0].mxu0 %v2795
    %v2876 = vpop.f32.mrb[0].mxu0
    %v2877 = vadd.f32 0.0, %v2876
    %v2878 = vpop.f32.mrb[0].mxu0
    %2879 = vmatprep.mubr.f32.mxu0 0.0
    %2880 = vmatmul.mubr.f32.gmra.mrb[0].mxu0 %v2798
    %v2881 = vpop.f32.mrb[0].mxu0
    %v2882 = vadd.f32 0.0, %v2881
    %v2883 = vpop.f32.mrb[0].mxu0
    %2884 = vdwg.mxu0
    %v2886 = vsel %vm2233, %v2063, 0
    %v2889 = vsel %vm2233, %v2064, 0
    %v2892 = vsel %vm2233, %v2065, 0
    %v2895 = vsel %vm2233, %v2066, 0
    %v2898 = vsel %vm2237, %v2159, 0
    %2900 = vmatprep.subr.mxu0 0.0
    %2901 = vmatpush1.msra.mxu0 %v2898
    %2902 = vmatprep.subr.mxu0 0.0
    %2903 = vmatpush1.msra.mxu0 0.0
    %2904 = vmatprep.subr.mxu0 0.0
    %2905 = vmatpush1.msra.mxu0 0.0
    %2906 = vmatprep.subr.mxu0 0.0
    %2907 = vmatpush1.msra.mxu0 0.0
    %2908 = vmatprep.subr.mxu0 0.0
    %2909 = vmatpush1.msra.mxu0 0.0
    %2910 = vmatprep.subr.mxu0 0.0
    %2911 = vmatpush1.msra.mxu0 0.0
    %2912 = vmatprep.subr.mxu0 0.0
    %2913 = vmatpush1.msra.mxu0 0.0
    %2914 = vmatprep.subr.mxu0 0.0
    %2915 = vmatpush1.msra.mxu0 0.0
    %2916 = vmatprep.subr.mxu0 0.0
    %2917 = vmatpush1.msra.mxu0 0.0
    %2918 = vmatprep.subr.mxu0 0.0
    %2919 = vmatpush1.msra.mxu0 0.0
    %2920 = vmatprep.subr.mxu0 0.0
    %2921 = vmatpush1.msra.mxu0 0.0
    %2922 = vmatprep.subr.mxu0 0.0
    %2923 = vmatpush1.msra.mxu0 0.0
    %2924 = vmatprep.subr.mxu0 0.0
    %2925 = vmatpush1.msra.mxu0 0.0
    %2926 = vmatprep.subr.mxu0 0.0
    %2927 = vmatpush1.msra.mxu0 0.0
    %2928 = vmatprep.subr.mxu0 0.0
    %2929 = vmatpush1.msra.mxu0 0.0
    %2930 = vmatprep.subr.mxu0 0.0
    %2931 = vmatpush1.msra.mxu0 0.0
    %2932 = vmatprep.subr.mxu0 0.0
    %2933 = vmatpush1.msra.mxu0 0.0
    %2934 = vmatprep.subr.mxu0 0.0
    %2935 = vmatpush1.msra.mxu0 0.0
    %2936 = vmatprep.subr.mxu0 0.0
    %2937 = vmatpush1.msra.mxu0 0.0
    %2938 = vmatprep.subr.mxu0 0.0
    %2939 = vmatpush1.msra.mxu0 0.0
    %2940 = vmatprep.subr.mxu0 0.0
    %2941 = vmatpush1.msra.mxu0 0.0
    %2942 = vmatprep.subr.mxu0 0.0
    %2943 = vmatpush1.msra.mxu0 0.0
    %2944 = vmatprep.subr.mxu0 0.0
    %2945 = vmatpush1.msra.mxu0 0.0
    %2946 = vmatprep.subr.mxu0 0.0
    %2947 = vmatpush1.msra.mxu0 0.0
    %2948 = vmatprep.subr.mxu0 0.0
    %2949 = vmatpush1.msra.mxu0 0.0
    %2950 = vmatprep.subr.mxu0 0.0
    %2951 = vmatpush1.msra.mxu0 0.0
    %2952 = vmatprep.subr.mxu0 0.0
    %2953 = vmatpush1.msra.mxu0 0.0
    %2954 = vmatprep.subr.mxu0 0.0
    %2955 = vmatpush1.msra.mxu0 0.0
    %2956 = vmatprep.subr.mxu0 0.0
    %2957 = vmatpush1.msra.mxu0 0.0
    %2958 = vmatprep.subr.mxu0 0.0
    %2959 = vmatpush1.msra.mxu0 0.0
    %2960 = vmatprep.subr.mxu0 0.0
    %2961 = vmatpush1.msra.mxu0 0.0
    %2962 = vmatprep.subr.mxu0 0.0
    %2963 = vmatpush1.msra.mxu0 0.0
    %2964 = vmatprep.mubr.f32.mxu0 0.0
    %2965 = vmatmul.mubr.f32.gmra.mrb[0].mxu0 %v2886
    %v2966 = vpop.f32.mrb[0].mxu0
    %v2967 = vadd.f32 %v2867, %v2966
    %v2968 = vpop.f32.mrb[0].mxu0
    %2969 = vmatprep.mubr.f32.mxu0 0.0
    %2970 = vmatmul.mubr.f32.gmra.mrb[0].mxu0 %v2889
    %v2971 = vpop.f32.mrb[0].mxu0
    %v2972 = vadd.f32 %v2872, %v2971
    %v2973 = vpop.f32.mrb[0].mxu0
    %2974 = vmatprep.mubr.f32.mxu0 0.0
    %2975 = vmatmul.mubr.f32.gmra.mrb[0].mxu0 %v2892
    %v2976 = vpop.f32.mrb[0].mxu0
    %v2977 = vadd.f32 %v2877, %v2976
    %v2978 = vpop.f32.mrb[0].mxu0
    %2979 = vmatprep.mubr.f32.mxu0 0.0
    %2980 = vmatmul.mubr.f32.gmra.mrb[0].mxu0 %v2895
    %v2981 = vpop.f32.mrb[0].mxu0
    %v2982 = vadd.f32 %v2882, %v2981
    %v2983 = vpop.f32.mrb[0].mxu0
    %2984 = vdwg.mxu0
    %v2985 = vld [vmem:[%s53] sm:$0xff]
    %v2986 = vld [vmem:[%s53 + $0x8] sm:$0xff]
    %v2987 = vld [vmem:[%s55] sm:$0xff]
    %2988 = vmatprep.subr.mxu0 0.0
    %2989 = vmatpush1.msra.mxu0 %v2987
    %2990 = vmatprep.subr.mxu0 0.0
    %2991 = vmatpush1.msra.mxu0 0.0
    %2992 = vmatprep.subr.mxu0 0.0
    %2993 = vmatpush1.msra.mxu0 0.0
    %2994 = vmatprep.subr.mxu0 0.0
    %2995 = vmatpush1.msra.mxu0 0.0
    %2996 = vmatprep.subr.mxu0 0.0
    %2997 = vmatpush1.msra.mxu0 0.0
    %2998 = vmatprep.subr.mxu0 0.0
    %2999 = vmatpush1.msra.mxu0 0.0
    %3000 = vmatprep.subr.mxu0 0.0
    %3001 = vmatpush1.msra.mxu0 0.0
    %3002 = vmatprep.subr.mxu0 0.0
    %3003 = vmatpush1.msra.mxu0 0.0
    %3004 = vmatprep.subr.mxu0 0.0
    %3005 = vmatpush1.msra.mxu0 0.0
    %3006 = vmatprep.subr.mxu0 0.0
    %3007 = vmatpush1.msra.mxu0 0.0
    %3008 = vmatprep.subr.mxu0 0.0
    %3009 = vmatpush1.msra.mxu0 0.0
    %3010 = vmatprep.subr.mxu0 0.0
    %3011 = vmatpush1.msra.mxu0 0.0
    %3012 = vmatprep.subr.mxu0 0.0
    %3013 = vmatpush1.msra.mxu0 0.0
    %3014 = vmatprep.subr.mxu0 0.0
    %3015 = vmatpush1.msra.mxu0 0.0
    %3016 = vmatprep.subr.mxu0 0.0
    %3017 = vmatpush1.msra.mxu0 0.0
    %3018 = vmatprep.subr.mxu0 0.0
    %3019 = vmatpush1.msra.mxu0 0.0
    %3020 = vmatprep.subr.mxu0 0.0
    %3021 = vmatpush1.msra.mxu0 0.0
    %3022 = vmatprep.subr.mxu0 0.0
    %3023 = vmatpush1.msra.mxu0 0.0
    %3024 = vmatprep.subr.mxu0 0.0
    %3025 = vmatpush1.msra.mxu0 0.0
    %3026 = vmatprep.subr.mxu0 0.0
    %3027 = vmatpush1.msra.mxu0 0.0
    %3028 = vmatprep.subr.mxu0 0.0
    %3029 = vmatpush1.msra.mxu0 0.0
    %3030 = vmatprep.subr.mxu0 0.0
    %3031 = vmatpush1.msra.mxu0 0.0
    %3032 = vmatprep.subr.mxu0 0.0
    %3033 = vmatpush1.msra.mxu0 0.0
    %3034 = vmatprep.subr.mxu0 0.0
    %3035 = vmatpush1.msra.mxu0 0.0
    %3036 = vmatprep.subr.mxu0 0.0
    %3037 = vmatpush1.msra.mxu0 0.0
    %3038 = vmatprep.subr.mxu0 0.0
    %3039 = vmatpush1.msra.mxu0 0.0
    %3040 = vmatprep.subr.mxu0 0.0
    %3041 = vmatpush1.msra.mxu0 0.0
    %3042 = vmatprep.subr.mxu0 0.0
    %3043 = vmatpush1.msra.mxu0 0.0
    %3044 = vmatprep.subr.mxu0 0.0
    %3045 = vmatpush1.msra.mxu0 0.0
    %3046 = vmatprep.subr.mxu0 0.0
    %3047 = vmatpush1.msra.mxu0 0.0
    %3048 = vmatprep.subr.mxu0 0.0
    %3049 = vmatpush1.msra.mxu0 0.0
    %3050 = vmatprep.subr.mxu0 0.0
    %3051 = vmatpush1.msra.mxu0 0.0
    %3052 = vmatprep.mubr.f32.mxu0 0.0
    %3053 = vmatmul.mubr.f32.gmra.mrb[0].mxu0 %v1163
    %v3054 = vpop.f32.mrb[0].mxu0
    %v3055 = vadd.f32 0.0, %v3054
    %v3056 = vpop.f32.mrb[0].mxu0
    %3057 = vmatprep.mubr.f32.mxu0 0.0
    %3058 = vmatmul.mubr.f32.gmra.mrb[0].mxu0 %v1165
    %v3059 = vpop.f32.mrb[0].mxu0
    %v3060 = vadd.f32 0.0, %v3059
    %v3061 = vpop.f32.mrb[0].mxu0
    %3062 = vdwg.mxu0
    %v3064 = vsel %vm341, %v2985, 0
    %v3067 = vsel %vm341, %v2986, 0
    %3069 = vmatprep.subr.mxu0 0.0
    %3070 = vmatpush1.msra.mxu0 %v2690
    %3071 = vmatprep.subr.mxu0 0.0
    %3072 = vmatpush1.msra.mxu0 0.0
    %3073 = vmatprep.subr.mxu0 0.0
    %3074 = vmatpush1.msra.mxu0 0.0
    %3075 = vmatprep.subr.mxu0 0.0
    %3076 = vmatpush1.msra.mxu0 0.0
    %3077 = vmatprep.subr.mxu0 0.0
    %3078 = vmatpush1.msra.mxu0 0.0
    %3079 = vmatprep.subr.mxu0 0.0
    %3080 = vmatpush1.msra.mxu0 0.0
    %3081 = vmatprep.subr.mxu0 0.0
    %3082 = vmatpush1.msra.mxu0 0.0
    %3083 = vmatprep.subr.mxu0 0.0
    %3084 = vmatpush1.msra.mxu0 0.0
    %3085 = vmatprep.subr.mxu0 0.0
    %3086 = vmatpush1.msra.mxu0 0.0
    %3087 = vmatprep.subr.mxu0 0.0
    %3088 = vmatpush1.msra.mxu0 0.0
    %3089 = vmatprep.subr.mxu0 0.0
    %3090 = vmatpush1.msra.mxu0 0.0
    %3091 = vmatprep.subr.mxu0 0.0
    %3092 = vmatpush1.msra.mxu0 0.0
    %3093 = vmatprep.subr.mxu0 0.0
    %3094 = vmatpush1.msra.mxu0 0.0
    %3095 = vmatprep.subr.mxu0 0.0
    %3096 = vmatpush1.msra.mxu0 0.0
    %3097 = vmatprep.subr.mxu0 0.0
    %3098 = vmatpush1.msra.mxu0 0.0
    %3099 = vmatprep.subr.mxu0 0.0
    %3100 = vmatpush1.msra.mxu0 0.0
    %3101 = vmatprep.subr.mxu0 0.0
    %3102 = vmatpush1.msra.mxu0 0.0
    %3103 = vmatprep.subr.mxu0 0.0
    %3104 = vmatpush1.msra.mxu0 0.0
    %3105 = vmatprep.subr.mxu0 0.0
    %3106 = vmatpush1.msra.mxu0 0.0
    %3107 = vmatprep.subr.mxu0 0.0
    %3108 = vmatpush1.msra.mxu0 0.0
    %3109 = vmatprep.subr.mxu0 0.0
    %3110 = vmatpush1.msra.mxu0 0.0
    %3111 = vmatprep.subr.mxu0 0.0
    %3112 = vmatpush1.msra.mxu0 0.0
    %3113 = vmatprep.subr.mxu0 0.0
    %3114 = vmatpush1.msra.mxu0 0.0
    %3115 = vmatprep.subr.mxu0 0.0
    %3116 = vmatpush1.msra.mxu0 0.0
    %3117 = vmatprep.subr.mxu0 0.0
    %3118 = vmatpush1.msra.mxu0 0.0
    %3119 = vmatprep.subr.mxu0 0.0
    %3120 = vmatpush1.msra.mxu0 0.0
    %3121 = vmatprep.subr.mxu0 0.0
    %3122 = vmatpush1.msra.mxu0 0.0
    %3123 = vmatprep.subr.mxu0 0.0
    %3124 = vmatpush1.msra.mxu0 0.0
    %3125 = vmatprep.subr.mxu0 0.0
    %3126 = vmatpush1.msra.mxu0 0.0
    %3127 = vmatprep.subr.mxu0 0.0
    %3128 = vmatpush1.msra.mxu0 0.0
    %3129 = vmatprep.subr.mxu0 0.0
    %3130 = vmatpush1.msra.mxu0 0.0
    %3131 = vmatprep.subr.mxu0 0.0
    %3132 = vmatpush1.msra.mxu0 0.0
    %3133 = vmatprep.mubr.f32.mxu0 0.0
    %3134 = vmatmul.mubr.f32.gmra.mrb[0].mxu0 %v3064
    %v3135 = vpop.f32.mrb[0].mxu0
    %v3136 = vadd.f32 %v3055, %v3135
    %v3137 = vpop.f32.mrb[0].mxu0
    %3138 = vmatprep.mubr.f32.mxu0 0.0
    %3139 = vmatmul.mubr.f32.gmra.mrb[0].mxu0 %v3067
    %v3140 = vpop.f32.mrb[0].mxu0
    %v3141 = vadd.f32 %v3060, %v3140
    %v3142 = vpop.f32.mrb[0].mxu0
    %3143 = vdwg.mxu0
    %v3144 = vld [vmem:[#allocation7] sm:$0x1]
    %v3146 = vlaneseq
    %v3147 = vshrl.u32 %v3146, 7
    %v3148 = vsub.s32 0, %v3147
    %v3149 = vrot.slane %v3144, %v3148
    %v3151 = vadd.f32 %v3136, %v3149
    %v3152 = vadd.f32 %v3141, %v3149
    %s3153 = scalar_lea.vmem %s59, 8
    %v3154 = vld [vmem:[%s3153] sm:$0xff]
    %3155 = vmatprep.subr.mxu0 0.0
    %3156 = vmatpush1.msra.mxu0 %v3151
    %3157 = vmatprep.subr.mxu0 0.0
    %3158 = vmatpush1.msra.mxu0 %v3152
    %3159 = vmatprep.subr.mxu0 0.0
    %3160 = vmatpush1.msra.mxu0 0.0
    %3161 = vmatprep.subr.mxu0 0.0
    %3162 = vmatpush1.msra.mxu0 0.0
    %3163 = vmatprep.subr.mxu0 0.0
    %3164 = vmatpush1.msra.mxu0 0.0
    %3165 = vmatprep.subr.mxu0 0.0
    %3166 = vmatpush1.msra.mxu0 0.0
    %3167 = vmatprep.subr.mxu0 0.0
    %3168 = vmatpush1.msra.mxu0 0.0
    %3169 = vmatprep.subr.mxu0 0.0
    %3170 = vmatpush1.msra.mxu0 0.0
    %3171 = vmatprep.subr.mxu0 0.0
    %3172 = vmatpush1.msra.mxu0 0.0
    %3173 = vmatprep.subr.mxu0 0.0
    %3174 = vmatpush1.msra.mxu0 0.0
    %3175 = vmatprep.subr.mxu0 0.0
    %3176 = vmatpush1.msra.mxu0 0.0
    %3177 = vmatprep.subr.mxu0 0.0
    %3178 = vmatpush1.msra.mxu0 0.0
    %3179 = vmatprep.subr.mxu0 0.0
    %3180 = vmatpush1.msra.mxu0 0.0
    %3181 = vmatprep.subr.mxu0 0.0
    %3182 = vmatpush1.msra.mxu0 0.0
    %3183 = vmatprep.subr.mxu0 0.0
    %3184 = vmatpush1.msra.mxu0 0.0
    %3185 = vmatprep.subr.mxu0 0.0
    %3186 = vmatpush1.msra.mxu0 0.0
    %3187 = vmatprep.subr.mxu0 0.0
    %3188 = vmatpush1.msra.mxu0 0.0
    %3189 = vmatprep.subr.mxu0 0.0
    %3190 = vmatpush1.msra.mxu0 0.0
    %3191 = vmatprep.subr.mxu0 0.0
    %3192 = vmatpush1.msra.mxu0 0.0
    %3193 = vmatprep.subr.mxu0 0.0
    %3194 = vmatpush1.msra.mxu0 0.0
    %3195 = vmatprep.subr.mxu0 0.0
    %3196 = vmatpush1.msra.mxu0 0.0
    %3197 = vmatprep.subr.mxu0 0.0
    %3198 = vmatpush1.msra.mxu0 0.0
    %3199 = vmatprep.subr.mxu0 0.0
    %3200 = vmatpush1.msra.mxu0 0.0
    %3201 = vmatprep.subr.mxu0 0.0
    %3202 = vmatpush1.msra.mxu0 0.0
    %3203 = vmatprep.subr.mxu0 0.0
    %3204 = vmatpush1.msra.mxu0 0.0
    %3205 = vmatprep.subr.mxu0 0.0
    %3206 = vmatpush1.msra.mxu0 0.0
    %3207 = vmatprep.subr.mxu0 0.0
    %3208 = vmatpush1.msra.mxu0 0.0
    %3209 = vmatprep.subr.mxu0 0.0
    %3210 = vmatpush1.msra.mxu0 0.0
    %3211 = vmatprep.subr.mxu0 0.0
    %3212 = vmatpush1.msra.mxu0 0.0
    %3213 = vmatprep.subr.mxu0 0.0
    %3214 = vmatpush1.msra.mxu0 0.0
    %3215 = vmatprep.subr.mxu0 0.0
    %3216 = vmatpush1.msra.mxu0 0.0
    %3217 = vmatprep.subr.mxu0 0.0
    %3218 = vmatpush1.msra.mxu0 0.0
    %3219 = vmatprep.mubr.f32.mxu0 0.0
    %3220 = vmatmul.mubr.f32.gmra.mrb[0].mxu0 %v1001
    %v3221 = vpop.f32.mrb[0].mxu0
    %v3222 = vadd.f32 0.0, %v3221
    %v3223 = vpop.f32.mrb[0].mxu0
    %3224 = vmatprep.mubr.f32.mxu0 0.0
    %3225 = vmatmul.mubr.f32.gmra.mrb[0].mxu0 %v1004
    %v3226 = vpop.f32.mrb[0].mxu0
    %v3227 = vadd.f32 0.0, %v3226
    %v3228 = vpop.f32.mrb[0].mxu0
    %3229 = vdwg.mxu0
    %v3230 = vld [vmem:[%s59] sm:$0xff]
    %v3232 = vsel %vm341, %v3222, 0
    %v3235 = vsel %vm341, %v3227, 0
    %3237 = vmatprep.subr.mxu0 0.0
    %3238 = vmatpush1.msra.mxu0 %v3230
    %3239 = vmatprep.subr.mxu0 0.0
    %3240 = vmatpush1.msra.mxu0 0.0
    %3241 = vmatprep.subr.mxu0 0.0
    %3242 = vmatpush1.msra.mxu0 0.0
    %3243 = vmatprep.subr.mxu0 0.0
    %3244 = vmatpush1.msra.mxu0 0.0
    %3245 = vmatprep.subr.mxu0 0.0
    %3246 = vmatpush1.msra.mxu0 0.0
    %3247 = vmatprep.subr.mxu0 0.0
    %3248 = vmatpush1.msra.mxu0 0.0
    %3249 = vmatprep.subr.mxu0 0.0
    %3250 = vmatpush1.msra.mxu0 0.0
    %3251 = vmatprep.subr.mxu0 0.0
    %3252 = vmatpush1.msra.mxu0 0.0
    %3253 = vmatprep.subr.mxu0 0.0
    %3254 = vmatpush1.msra.mxu0 0.0
    %3255 = vmatprep.subr.mxu0 0.0
    %3256 = vmatpush1.msra.mxu0 0.0
    %3257 = vmatprep.subr.mxu0 0.0
    %3258 = vmatpush1.msra.mxu0 0.0
    %3259 = vmatprep.subr.mxu0 0.0
    %3260 = vmatpush1.msra.mxu0 0.0
    %3261 = vmatprep.subr.mxu0 0.0
    %3262 = vmatpush1.msra.mxu0 0.0
    %3263 = vmatprep.subr.mxu0 0.0
    %3264 = vmatpush1.msra.mxu0 0.0
    %3265 = vmatprep.subr.mxu0 0.0
    %3266 = vmatpush1.msra.mxu0 0.0
    %3267 = vmatprep.subr.mxu0 0.0
    %3268 = vmatpush1.msra.mxu0 0.0
    %3269 = vmatprep.subr.mxu0 0.0
    %3270 = vmatpush1.msra.mxu0 0.0
    %3271 = vmatprep.subr.mxu0 0.0
    %3272 = vmatpush1.msra.mxu0 0.0
    %3273 = vmatprep.subr.mxu0 0.0
    %3274 = vmatpush1.msra.mxu0 0.0
    %3275 = vmatprep.subr.mxu0 0.0
    %3276 = vmatpush1.msra.mxu0 0.0
    %3277 = vmatprep.subr.mxu0 0.0
    %3278 = vmatpush1.msra.mxu0 0.0
    %3279 = vmatprep.subr.mxu0 0.0
    %3280 = vmatpush1.msra.mxu0 0.0
    %3281 = vmatprep.subr.mxu0 0.0
    %3282 = vmatpush1.msra.mxu0 0.0
    %3283 = vmatprep.subr.mxu0 0.0
    %3284 = vmatpush1.msra.mxu0 0.0
    %3285 = vmatprep.subr.mxu0 0.0
    %3286 = vmatpush1.msra.mxu0 0.0
    %3287 = vmatprep.subr.mxu0 0.0
    %3288 = vmatpush1.msra.mxu0 0.0
    %3289 = vmatprep.subr.mxu0 0.0
    %3290 = vmatpush1.msra.mxu0 0.0
    %3291 = vmatprep.subr.mxu0 0.0
    %3292 = vmatpush1.msra.mxu0 0.0
    %3293 = vmatprep.subr.mxu0 0.0
    %3294 = vmatpush1.msra.mxu0 0.0
    %3295 = vmatprep.subr.mxu0 0.0
    %3296 = vmatpush1.msra.mxu0 0.0
    %3297 = vmatprep.subr.mxu0 0.0
    %3298 = vmatpush1.msra.mxu0 0.0
    %3299 = vmatprep.subr.mxu0 0.0
    %3300 = vmatpush1.msra.mxu0 0.0
    %3301 = vmatprep.mubr.f32.mxu0 0.0
    %3302 = vmatmul.mubr.f32.gmra.mrb[0].mxu0 %v3232
    %v3303 = vpop.f32.mrb[0].mxu0
    %v3304 = vadd.f32 0.0, %v3303
    %v3305 = vpop.f32.mrb[0].mxu0
    %3306 = vmatprep.mubr.f32.mxu0 0.0
    %3307 = vmatmul.mubr.f32.gmra.mrb[0].mxu0 %v3235
    %v3308 = vpop.f32.mrb[0].mxu0
    %v3309 = vadd.f32 0.0, %v3308
    %v3310 = vpop.f32.mrb[0].mxu0
    %3311 = vdwg.mxu0
    %v3313 = vsel %vm341, %v3151, 0
    %v3316 = vsel %vm341, %v3152, 0
    %3318 = vmatprep.subr.mxu0 0.0
    %3319 = vmatpush1.msra.mxu0 %v3154
    %3320 = vmatprep.subr.mxu0 0.0
    %3321 = vmatpush1.msra.mxu0 0.0
    %3322 = vmatprep.subr.mxu0 0.0
    %3323 = vmatpush1.msra.mxu0 0.0
    %3324 = vmatprep.subr.mxu0 0.0
    %3325 = vmatpush1.msra.mxu0 0.0
    %3326 = vmatprep.subr.mxu0 0.0
    %3327 = vmatpush1.msra.mxu0 0.0
    %3328 = vmatprep.subr.mxu0 0.0
    %3329 = vmatpush1.msra.mxu0 0.0
    %3330 = vmatprep.subr.mxu0 0.0
    %3331 = vmatpush1.msra.mxu0 0.0
    %3332 = vmatprep.subr.mxu0 0.0
    %3333 = vmatpush1.msra.mxu0 0.0
    %3334 = vmatprep.subr.mxu0 0.0
    %3335 = vmatpush1.msra.mxu0 0.0
    %3336 = vmatprep.subr.mxu0 0.0
    %3337 = vmatpush1.msra.mxu0 0.0
    %3338 = vmatprep.subr.mxu0 0.0
    %3339 = vmatpush1.msra.mxu0 0.0
    %3340 = vmatprep.subr.mxu0 0.0
    %3341 = vmatpush1.msra.mxu0 0.0
    %3342 = vmatprep.subr.mxu0 0.0
    %3343 = vmatpush1.msra.mxu0 0.0
    %3344 = vmatprep.subr.mxu0 0.0
    %3345 = vmatpush1.msra.mxu0 0.0
    %3346 = vmatprep.subr.mxu0 0.0
    %3347 = vmatpush1.msra.mxu0 0.0
    %3348 = vmatprep.subr.mxu0 0.0
    %3349 = vmatpush1.msra.mxu0 0.0
    %3350 = vmatprep.subr.mxu0 0.0
    %3351 = vmatpush1.msra.mxu0 0.0
    %3352 = vmatprep.subr.mxu0 0.0
    %3353 = vmatpush1.msra.mxu0 0.0
    %3354 = vmatprep.subr.mxu0 0.0
    %3355 = vmatpush1.msra.mxu0 0.0
    %3356 = vmatprep.subr.mxu0 0.0
    %3357 = vmatpush1.msra.mxu0 0.0
    %3358 = vmatprep.subr.mxu0 0.0
    %3359 = vmatpush1.msra.mxu0 0.0
    %3360 = vmatprep.subr.mxu0 0.0
    %3361 = vmatpush1.msra.mxu0 0.0
    %3362 = vmatprep.subr.mxu0 0.0
    %3363 = vmatpush1.msra.mxu0 0.0
    %3364 = vmatprep.subr.mxu0 0.0
    %3365 = vmatpush1.msra.mxu0 0.0
    %3366 = vmatprep.subr.mxu0 0.0
    %3367 = vmatpush1.msra.mxu0 0.0
    %3368 = vmatprep.subr.mxu0 0.0
    %3369 = vmatpush1.msra.mxu0 0.0
    %3370 = vmatprep.subr.mxu0 0.0
    %3371 = vmatpush1.msra.mxu0 0.0
    %3372 = vmatprep.subr.mxu0 0.0
    %3373 = vmatpush1.msra.mxu0 0.0
    %3374 = vmatprep.subr.mxu0 0.0
    %3375 = vmatpush1.msra.mxu0 0.0
    %3376 = vmatprep.subr.mxu0 0.0
    %3377 = vmatpush1.msra.mxu0 0.0
    %3378 = vmatprep.subr.mxu0 0.0
    %3379 = vmatpush1.msra.mxu0 0.0
    %3380 = vmatprep.subr.mxu0 0.0
    %3381 = vmatpush1.msra.mxu0 0.0
    %3382 = vmatprep.mubr.f32.mxu0 0.0
    %3383 = vmatmul.mubr.f32.gmra.mrb[0].mxu0 %v3313
    %v3384 = vpop.f32.mrb[0].mxu0
    %v3385 = vadd.f32 %v3304, %v3384
    %v3386 = vpop.f32.mrb[0].mxu0
    %3387 = vmatprep.mubr.f32.mxu0 0.0
    %3388 = vmatmul.mubr.f32.gmra.mrb[0].mxu0 %v3316
    %v3389 = vpop.f32.mrb[0].mxu0
    %v3390 = vadd.f32 %v3309, %v3389
    %v3391 = vpop.f32.mrb[0].mxu0
    %3392 = vdwg.mxu0
    %3393 = vmatprep.subr.mxu0 0.0
    %3394 = vmatpush1.msra.mxu0 %v3151
    %3395 = vmatprep.subr.mxu0 0.0
    %3396 = vmatpush1.msra.mxu0 %v3152
    %3397 = vmatprep.subr.mxu0 0.0
    %3398 = vmatpush1.msra.mxu0 0.0
    %3399 = vmatprep.subr.mxu0 0.0
    %3400 = vmatpush1.msra.mxu0 0.0
    %3401 = vmatprep.subr.mxu0 0.0
    %3402 = vmatpush1.msra.mxu0 0.0
    %3403 = vmatprep.subr.mxu0 0.0
    %3404 = vmatpush1.msra.mxu0 0.0
    %3405 = vmatprep.subr.mxu0 0.0
    %3406 = vmatpush1.msra.mxu0 0.0
    %3407 = vmatprep.subr.mxu0 0.0
    %3408 = vmatpush1.msra.mxu0 0.0
    %3409 = vmatprep.subr.mxu0 0.0
    %3410 = vmatpush1.msra.mxu0 0.0
    %3411 = vmatprep.subr.mxu0 0.0
    %3412 = vmatpush1.msra.mxu0 0.0
    %3413 = vmatprep.subr.mxu0 0.0
    %3414 = vmatpush1.msra.mxu0 0.0
    %3415 = vmatprep.subr.mxu0 0.0
    %3416 = vmatpush1.msra.mxu0 0.0
    %3417 = vmatprep.subr.mxu0 0.0
    %3418 = vmatpush1.msra.mxu0 0.0
    %3419 = vmatprep.subr.mxu0 0.0
    %3420 = vmatpush1.msra.mxu0 0.0
    %3421 = vmatprep.subr.mxu0 0.0
    %3422 = vmatpush1.msra.mxu0 0.0
    %3423 = vmatprep.subr.mxu0 0.0
    %3424 = vmatpush1.msra.mxu0 0.0
    %3425 = vmatprep.subr.mxu0 0.0
    %3426 = vmatpush1.msra.mxu0 0.0
    %3427 = vmatprep.subr.mxu0 0.0
    %3428 = vmatpush1.msra.mxu0 0.0
    %3429 = vmatprep.subr.mxu0 0.0
    %3430 = vmatpush1.msra.mxu0 0.0
    %3431 = vmatprep.subr.mxu0 0.0
    %3432 = vmatpush1.msra.mxu0 0.0
    %3433 = vmatprep.subr.mxu0 0.0
    %3434 = vmatpush1.msra.mxu0 0.0
    %3435 = vmatprep.subr.mxu0 0.0
    %3436 = vmatpush1.msra.mxu0 0.0
    %3437 = vmatprep.subr.mxu0 0.0
    %3438 = vmatpush1.msra.mxu0 0.0
    %3439 = vmatprep.subr.mxu0 0.0
    %3440 = vmatpush1.msra.mxu0 0.0
    %3441 = vmatprep.subr.mxu0 0.0
    %3442 = vmatpush1.msra.mxu0 0.0
    %3443 = vmatprep.subr.mxu0 0.0
    %3444 = vmatpush1.msra.mxu0 0.0
    %3445 = vmatprep.subr.mxu0 0.0
    %3446 = vmatpush1.msra.mxu0 0.0
    %3447 = vmatprep.subr.mxu0 0.0
    %3448 = vmatpush1.msra.mxu0 0.0
    %3449 = vmatprep.subr.mxu0 0.0
    %3450 = vmatpush1.msra.mxu0 0.0
    %3451 = vmatprep.subr.mxu0 0.0
    %3452 = vmatpush1.msra.mxu0 0.0
    %3453 = vmatprep.subr.mxu0 0.0
    %3454 = vmatpush1.msra.mxu0 0.0
    %3455 = vmatprep.subr.mxu0 0.0
    %3456 = vmatpush1.msra.mxu0 0.0
    %3457 = vmatprep.mubr.f32.mxu0 0.0
    %3458 = vmatmul.mubr.f32.gmra.mrb[0].mxu0 %v1245
    %v3459 = vpop.f32.mrb[0].mxu0
    %v3460 = vadd.f32 0.0, %v3459
    %v3461 = vpop.f32.mrb[0].mxu0
    %3462 = vmatprep.mubr.f32.mxu0 0.0
    %3463 = vmatmul.mubr.f32.gmra.mrb[0].mxu0 %v1248
    %v3464 = vpop.f32.mrb[0].mxu0
    %v3465 = vadd.f32 0.0, %v3464
    %v3466 = vpop.f32.mrb[0].mxu0
    %3467 = vdwg.mxu0
    %s3468 = scalar_lea.vmem %s59, 16
    %v3469 = vld [vmem:[%s3468] sm:$0xff]
    %v3471 = vsel %vm341, %v3460, 0
    %v3474 = vsel %vm341, %v3465, 0
    %3476 = vmatprep.subr.mxu0 0.0
    %3477 = vmatpush1.msra.mxu0 %v3469
    %3478 = vmatprep.subr.mxu0 0.0
    %3479 = vmatpush1.msra.mxu0 0.0
    %3480 = vmatprep.subr.mxu0 0.0
    %3481 = vmatpush1.msra.mxu0 0.0
    %3482 = vmatprep.subr.mxu0 0.0
    %3483 = vmatpush1.msra.mxu0 0.0
    %3484 = vmatprep.subr.mxu0 0.0
    %3485 = vmatpush1.msra.mxu0 0.0
    %3486 = vmatprep.subr.mxu0 0.0
    %3487 = vmatpush1.msra.mxu0 0.0
    %3488 = vmatprep.subr.mxu0 0.0
    %3489 = vmatpush1.msra.mxu0 0.0
    %3490 = vmatprep.subr.mxu0 0.0
    %3491 = vmatpush1.msra.mxu0 0.0
    %3492 = vmatprep.subr.mxu0 0.0
    %3493 = vmatpush1.msra.mxu0 0.0
    %3494 = vmatprep.subr.mxu0 0.0
    %3495 = vmatpush1.msra.mxu0 0.0
    %3496 = vmatprep.subr.mxu0 0.0
    %3497 = vmatpush1.msra.mxu0 0.0
    %3498 = vmatprep.subr.mxu0 0.0
    %3499 = vmatpush1.msra.mxu0 0.0
    %3500 = vmatprep.subr.mxu0 0.0
    %3501 = vmatpush1.msra.mxu0 0.0
    %3502 = vmatprep.subr.mxu0 0.0
    %3503 = vmatpush1.msra.mxu0 0.0
    %3504 = vmatprep.subr.mxu0 0.0
    %3505 = vmatpush1.msra.mxu0 0.0
    %3506 = vmatprep.subr.mxu0 0.0
    %3507 = vmatpush1.msra.mxu0 0.0
    %3508 = vmatprep.subr.mxu0 0.0
    %3509 = vmatpush1.msra.mxu0 0.0
    %3510 = vmatprep.subr.mxu0 0.0
    %3511 = vmatpush1.msra.mxu0 0.0
    %3512 = vmatprep.subr.mxu0 0.0
    %3513 = vmatpush1.msra.mxu0 0.0
    %3514 = vmatprep.subr.mxu0 0.0
    %3515 = vmatpush1.msra.mxu0 0.0
    %3516 = vmatprep.subr.mxu0 0.0
    %3517 = vmatpush1.msra.mxu0 0.0
    %3518 = vmatprep.subr.mxu0 0.0
    %3519 = vmatpush1.msra.mxu0 0.0
    %3520 = vmatprep.subr.mxu0 0.0
    %3521 = vmatpush1.msra.mxu0 0.0
    %3522 = vmatprep.subr.mxu0 0.0
    %3523 = vmatpush1.msra.mxu0 0.0
    %3524 = vmatprep.subr.mxu0 0.0
    %3525 = vmatpush1.msra.mxu0 0.0
    %3526 = vmatprep.subr.mxu0 0.0
    %3527 = vmatpush1.msra.mxu0 0.0
    %3528 = vmatprep.subr.mxu0 0.0
    %3529 = vmatpush1.msra.mxu0 0.0
    %3530 = vmatprep.subr.mxu0 0.0
    %3531 = vmatpush1.msra.mxu0 0.0
    %3532 = vmatprep.subr.mxu0 0.0
    %3533 = vmatpush1.msra.mxu0 0.0
    %3534 = vmatprep.subr.mxu0 0.0
    %3535 = vmatpush1.msra.mxu0 0.0
    %3536 = vmatprep.subr.mxu0 0.0
    %3537 = vmatpush1.msra.mxu0 0.0
    %3538 = vmatprep.subr.mxu0 0.0
    %3539 = vmatpush1.msra.mxu0 0.0
    %3540 = vmatprep.mubr.f32.mxu0 0.0
    %3541 = vmatmul.mubr.f32.gmra.mrb[0].mxu0 %v3471
    %v3542 = vpop.f32.mrb[0].mxu0
    %v3543 = vadd.f32 0.0, %v3542
    %v3544 = vpop.f32.mrb[0].mxu0
    %3545 = vmatprep.mubr.f32.mxu0 0.0
    %3546 = vmatmul.mubr.f32.gmra.mrb[0].mxu0 %v3474
    %v3547 = vpop.f32.mrb[0].mxu0
    %v3548 = vadd.f32 0.0, %v3547
    %v3549 = vpop.f32.mrb[0].mxu0
    %3550 = vdwg.mxu0
    %v3551 = vadd.f32 %v3385, %v3543
    %v3552 = vadd.f32 %v3390, %v3548
    %v3553 = vld [vmem:[#allocation9] sm:$0x1]
    %v3555 = vlaneseq
    %v3556 = vshrl.u32 %v3555, 7
    %v3557 = vsub.s32 0, %v3556
    %v3558 = vrot.slane %v3553, %v3557
    %v3560 = vadd.f32 %v3551, %v3558
    %v3561 = vadd.f32 %v3552, %v3558
    %v3562 = vld [vmem:[%s63] sm:$0xff]
    %v3563 = vld [vmem:[#allocation10] sm:$0x1]
    %v3565 = vlaneseq
    %v3566 = vshrl.u32 %v3565, 7
    %v3567 = vsub.s32 0, %v3566
    %v3568 = vrot.slane %v3563, %v3567
    %v3571 = vsel %vm341, %v3560, 0
    %v3574 = vsel %vm341, %v3561, 0
    %3576 = vmatprep.subr.mxu0 0.0
    %3577 = vmatpush1.msra.mxu0 %v3562
    %3578 = vmatprep.subr.mxu0 0.0
    %3579 = vmatpush1.msra.mxu0 0.0
    %3580 = vmatprep.subr.mxu0 0.0
    %3581 = vmatpush1.msra.mxu0 0.0
    %3582 = vmatprep.subr.mxu0 0.0
    %3583 = vmatpush1.msra.mxu0 0.0
    %3584 = vmatprep.subr.mxu0 0.0
    %3585 = vmatpush1.msra.mxu0 0.0
    %3586 = vmatprep.subr.mxu0 0.0
    %3587 = vmatpush1.msra.mxu0 0.0
    %3588 = vmatprep.subr.mxu0 0.0
    %3589 = vmatpush1.msra.mxu0 0.0
    %3590 = vmatprep.subr.mxu0 0.0
    %3591 = vmatpush1.msra.mxu0 0.0
    %3592 = vmatprep.subr.mxu0 0.0
    %3593 = vmatpush1.msra.mxu0 0.0
    %3594 = vmatprep.subr.mxu0 0.0
    %3595 = vmatpush1.msra.mxu0 0.0
    %3596 = vmatprep.subr.mxu0 0.0
    %3597 = vmatpush1.msra.mxu0 0.0
    %3598 = vmatprep.subr.mxu0 0.0
    %3599 = vmatpush1.msra.mxu0 0.0
    %3600 = vmatprep.subr.mxu0 0.0
    %3601 = vmatpush1.msra.mxu0 0.0
    %3602 = vmatprep.subr.mxu0 0.0
    %3603 = vmatpush1.msra.mxu0 0.0
    %3604 = vmatprep.subr.mxu0 0.0
    %3605 = vmatpush1.msra.mxu0 0.0
    %3606 = vmatprep.subr.mxu0 0.0
    %3607 = vmatpush1.msra.mxu0 0.0
    %3608 = vmatprep.subr.mxu0 0.0
    %3609 = vmatpush1.msra.mxu0 0.0
    %3610 = vmatprep.subr.mxu0 0.0
    %3611 = vmatpush1.msra.mxu0 0.0
    %3612 = vmatprep.subr.mxu0 0.0
    %3613 = vmatpush1.msra.mxu0 0.0
    %3614 = vmatprep.subr.mxu0 0.0
    %3615 = vmatpush1.msra.mxu0 0.0
    %3616 = vmatprep.subr.mxu0 0.0
    %3617 = vmatpush1.msra.mxu0 0.0
    %3618 = vmatprep.subr.mxu0 0.0
    %3619 = vmatpush1.msra.mxu0 0.0
    %3620 = vmatprep.subr.mxu0 0.0
    %3621 = vmatpush1.msra.mxu0 0.0
    %3622 = vmatprep.subr.mxu0 0.0
    %3623 = vmatpush1.msra.mxu0 0.0
    %3624 = vmatprep.subr.mxu0 0.0
    %3625 = vmatpush1.msra.mxu0 0.0
    %3626 = vmatprep.subr.mxu0 0.0
    %3627 = vmatpush1.msra.mxu0 0.0
    %3628 = vmatprep.subr.mxu0 0.0
    %3629 = vmatpush1.msra.mxu0 0.0
    %3630 = vmatprep.subr.mxu0 0.0
    %3631 = vmatpush1.msra.mxu0 0.0
    %3632 = vmatprep.subr.mxu0 0.0
    %3633 = vmatpush1.msra.mxu0 0.0
    %3634 = vmatprep.subr.mxu0 0.0
    %3635 = vmatpush1.msra.mxu0 0.0
    %3636 = vmatprep.subr.mxu0 0.0
    %3637 = vmatpush1.msra.mxu0 0.0
    %3638 = vmatprep.subr.mxu0 0.0
    %3639 = vmatpush1.msra.mxu0 0.0
    %3640 = vmatprep.mubr.f32.mxu0 0.0
    %3641 = vmatmul.mubr.f32.gmra.mrb[0].mxu0 %v3571
    %v3642 = vpop.f32.mrb[0].mxu0
    %v3643 = vadd.f32 %v3568, %v3642
    %v3644 = vpop.f32.mrb[0].mxu0
    %3645 = vmatprep.mubr.f32.mxu0 0.0
    %3646 = vmatmul.mubr.f32.gmra.mrb[0].mxu0 %v3574
    %v3647 = vpop.f32.mrb[0].mxu0
    %v3648 = vadd.f32 %v3568, %v3647
    %v3649 = vpop.f32.mrb[0].mxu0
    %3650 = vdwg.mxu0
    %v3651 = vsel %vm2772, %v3643, -inf
    %3652 = vmax.xlane.f32.xlu0 %v3651
    %v3653 = vpop.xlane.xlu0 %3652
    %v3654 = vsel %vm2772, %v3648, -inf
    %3655 = vmax.xlane.f32.xlu0 %v3654
    %v3656 = vpop.xlane.xlu0 %3655
    %v3657 = vsub.f32 %v3643, %v3653
    %v3658 = vsub.f32 %v3648, %v3656
    %v3659 = vmul.f32 %v3657, 1.442695
    %v3660 = vpow.pop %v3659
    %v3661 = vmul.f32 %v3658, 1.442695
    %v3662 = vpow.pop %v3661
    %v3663 = vsel %vm2772, %v3660, 0.0
    %3664 = vadd.xlane.f32.xlu0 %v3663
    %v3665 = vpop.xlane.xlu0 %3664
    %v3666 = vsel %vm2772, %v3662, 0.0
    %3667 = vadd.xlane.f32.xlu0 %v3666
    %v3668 = vpop.xlane.xlu0 %3667
    %v3669 = vrcp.pop %v3665
    %v3670 = vrcp.pop %v3668
    %v3671 = vmul.f32 %v3660, %v3669
    %v3672 = vmul.f32 %v3662, %v3670
    %v3673 = vld [vmem:[%s67] sm:$0xff]
    %v3674 = vld [vmem:[%s67 + $0x8] sm:$0xff]
    %v3675 = vld [vmem:[%s67 + $0x10] sm:$0xff]
    %v3676 = vld [vmem:[%s67 + $0x18] sm:$0xff]
    %v3678 = vsel %vm999, %v3673, 0
    %v3681 = vsel %vm999, %v3674, 0
    %v3684 = vsel %vm999, %v3675, 0
    %v3687 = vsel %vm999, %v3676, 0
    %3689 = vmatprep.subr.mxu0 0.0
    %3690 = vmatpush1.msra.mxu0 %v3671
    %3691 = vmatprep.subr.mxu0 0.0
    %3692 = vmatpush1.msra.mxu0 %v3672
    %3693 = vmatprep.subr.mxu0 0.0
    %3694 = vmatpush1.msra.mxu0 0.0
    %3695 = vmatprep.subr.mxu0 0.0
    %3696 = vmatpush1.msra.mxu0 0.0
    %3697 = vmatprep.subr.mxu0 0.0
    %3698 = vmatpush1.msra.mxu0 0.0
    %3699 = vmatprep.subr.mxu0 0.0
    %3700 = vmatpush1.msra.mxu0 0.0
    %3701 = vmatprep.subr.mxu0 0.0
    %3702 = vmatpush1.msra.mxu0 0.0
    %3703 = vmatprep.subr.mxu0 0.0
    %3704 = vmatpush1.msra.mxu0 0.0
    %3705 = vmatprep.subr.mxu0 0.0
    %3706 = vmatpush1.msra.mxu0 0.0
    %3707 = vmatprep.subr.mxu0 0.0
    %3708 = vmatpush1.msra.mxu0 0.0
    %3709 = vmatprep.subr.mxu0 0.0
    %3710 = vmatpush1.msra.mxu0 0.0
    %3711 = vmatprep.subr.mxu0 0.0
    %3712 = vmatpush1.msra.mxu0 0.0
    %3713 = vmatprep.subr.mxu0 0.0
    %3714 = vmatpush1.msra.mxu0 0.0
    %3715 = vmatprep.subr.mxu0 0.0
    %3716 = vmatpush1.msra.mxu0 0.0
    %3717 = vmatprep.subr.mxu0 0.0
    %3718 = vmatpush1.msra.mxu0 0.0
    %3719 = vmatprep.subr.mxu0 0.0
    %3720 = vmatpush1.msra.mxu0 0.0
    %3721 = vmatprep.subr.mxu0 0.0
    %3722 = vmatpush1.msra.mxu0 0.0
    %3723 = vmatprep.subr.mxu0 0.0
    %3724 = vmatpush1.msra.mxu0 0.0
    %3725 = vmatprep.subr.mxu0 0.0
    %3726 = vmatpush1.msra.mxu0 0.0
    %3727 = vmatprep.subr.mxu0 0.0
    %3728 = vmatpush1.msra.mxu0 0.0
    %3729 = vmatprep.subr.mxu0 0.0
    %3730 = vmatpush1.msra.mxu0 0.0
    %3731 = vmatprep.subr.mxu0 0.0
    %3732 = vmatpush1.msra.mxu0 0.0
    %3733 = vmatprep.subr.mxu0 0.0
    %3734 = vmatpush1.msra.mxu0 0.0
    %3735 = vmatprep.subr.mxu0 0.0
    %3736 = vmatpush1.msra.mxu0 0.0
    %3737 = vmatprep.subr.mxu0 0.0
    %3738 = vmatpush1.msra.mxu0 0.0
    %3739 = vmatprep.subr.mxu0 0.0
    %3740 = vmatpush1.msra.mxu0 0.0
    %3741 = vmatprep.subr.mxu0 0.0
    %3742 = vmatpush1.msra.mxu0 0.0
    %3743 = vmatprep.subr.mxu0 0.0
    %3744 = vmatpush1.msra.mxu0 0.0
    %3745 = vmatprep.subr.mxu0 0.0
    %3746 = vmatpush1.msra.mxu0 0.0
    %3747 = vmatprep.subr.mxu0 0.0
    %3748 = vmatpush1.msra.mxu0 0.0
    %3749 = vmatprep.subr.mxu0 0.0
    %3750 = vmatpush1.msra.mxu0 0.0
    %3751 = vmatprep.subr.mxu0 0.0
    %3752 = vmatpush1.msra.mxu0 0.0
    %3753 = vmatprep.mubr.f32.mxu0 0.0
    %3754 = vmatmul.mubr.f32.gmra.mrb[0].mxu0 %v3678
    %v3755 = vpop.f32.mrb[0].mxu0
    %v3756 = vadd.f32 0.0, %v3755
    %v3757 = vpop.f32.mrb[0].mxu0
    %3758 = vmatprep.mubr.f32.mxu0 0.0
    %3759 = vmatmul.mubr.f32.gmra.mrb[0].mxu0 %v3681
    %v3760 = vpop.f32.mrb[0].mxu0
    %v3761 = vadd.f32 0.0, %v3760
    %v3762 = vpop.f32.mrb[0].mxu0
    %3763 = vmatprep.mubr.f32.mxu0 0.0
    %3764 = vmatmul.mubr.f32.gmra.mrb[0].mxu0 %v3684
    %v3765 = vpop.f32.mrb[0].mxu0
    %v3766 = vadd.f32 0.0, %v3765
    %v3767 = vpop.f32.mrb[0].mxu0
    %3768 = vmatprep.mubr.f32.mxu0 0.0
    %3769 = vmatmul.mubr.f32.gmra.mrb[0].mxu0 %v3687
    %v3770 = vpop.f32.mrb[0].mxu0
    %v3771 = vadd.f32 0.0, %v3770
    %v3772 = vpop.f32.mrb[0].mxu0
    %3773 = vdwg.mxu0
    %v3774 = vadd.f32 %v2967, %v3756
    %v3775 = vadd.f32 %v2972, %v3761
    %v3776 = vadd.f32 %v2977, %v3766
    %v3777 = vadd.f32 %v2982, %v3771
    %v3778 = vld [vmem:[%s69] sm:$0xff]
    %v3779 = vld [vmem:[%s69 + $0x8] sm:$0xff]
    %v3780 = vld [vmem:[%s69 + $0x10] sm:$0xff]
    %v3781 = vld [vmem:[%s69 + $0x18] sm:$0xff]
    %v3783 = vsel %vm999, %v3778, 0
    %v3786 = vsel %vm999, %v3779, 0
    %v3789 = vsel %vm999, %v3780, 0
    %v3792 = vsel %vm999, %v3781, 0
    %3794 = vmatprep.subr.mxu0 0.0
    %3795 = vmatpush1.msra.mxu0 %v3560
    %3796 = vmatprep.subr.mxu0 0.0
    %3797 = vmatpush1.msra.mxu0 %v3561
    %3798 = vmatprep.subr.mxu0 0.0
    %3799 = vmatpush1.msra.mxu0 0.0
    %3800 = vmatprep.subr.mxu0 0.0
    %3801 = vmatpush1.msra.mxu0 0.0
    %3802 = vmatprep.subr.mxu0 0.0
    %3803 = vmatpush1.msra.mxu0 0.0
    %3804 = vmatprep.subr.mxu0 0.0
    %3805 = vmatpush1.msra.mxu0 0.0
    %3806 = vmatprep.subr.mxu0 0.0
    %3807 = vmatpush1.msra.mxu0 0.0
    %3808 = vmatprep.subr.mxu0 0.0
    %3809 = vmatpush1.msra.mxu0 0.0
    %3810 = vmatprep.subr.mxu0 0.0
    %3811 = vmatpush1.msra.mxu0 0.0
    %3812 = vmatprep.subr.mxu0 0.0
    %3813 = vmatpush1.msra.mxu0 0.0
    %3814 = vmatprep.subr.mxu0 0.0
    %3815 = vmatpush1.msra.mxu0 0.0
    %3816 = vmatprep.subr.mxu0 0.0
    %3817 = vmatpush1.msra.mxu0 0.0
    %3818 = vmatprep.subr.mxu0 0.0
    %3819 = vmatpush1.msra.mxu0 0.0
    %3820 = vmatprep.subr.mxu0 0.0
    %3821 = vmatpush1.msra.mxu0 0.0
    %3822 = vmatprep.subr.mxu0 0.0
    %3823 = vmatpush1.msra.mxu0 0.0
    %3824 = vmatprep.subr.mxu0 0.0
    %3825 = vmatpush1.msra.mxu0 0.0
    %3826 = vmatprep.subr.mxu0 0.0
    %3827 = vmatpush1.msra.mxu0 0.0
    %3828 = vmatprep.subr.mxu0 0.0
    %3829 = vmatpush1.msra.mxu0 0.0
    %3830 = vmatprep.subr.mxu0 0.0
    %3831 = vmatpush1.msra.mxu0 0.0
    %3832 = vmatprep.subr.mxu0 0.0
    %3833 = vmatpush1.msra.mxu0 0.0
    %3834 = vmatprep.subr.mxu0 0.0
    %3835 = vmatpush1.msra.mxu0 0.0
    %3836 = vmatprep.subr.mxu0 0.0
    %3837 = vmatpush1.msra.mxu0 0.0
    %3838 = vmatprep.subr.mxu0 0.0
    %3839 = vmatpush1.msra.mxu0 0.0
    %3840 = vmatprep.subr.mxu0 0.0
    %3841 = vmatpush1.msra.mxu0 0.0
    %3842 = vmatprep.subr.mxu0 0.0
    %3843 = vmatpush1.msra.mxu0 0.0
    %3844 = vmatprep.subr.mxu0 0.0
    %3845 = vmatpush1.msra.mxu0 0.0
    %3846 = vmatprep.subr.mxu0 0.0
    %3847 = vmatpush1.msra.mxu0 0.0
    %3848 = vmatprep.subr.mxu0 0.0
    %3849 = vmatpush1.msra.mxu0 0.0
    %3850 = vmatprep.subr.mxu0 0.0
    %3851 = vmatpush1.msra.mxu0 0.0
    %3852 = vmatprep.subr.mxu0 0.0
    %3853 = vmatpush1.msra.mxu0 0.0
    %3854 = vmatprep.subr.mxu0 0.0
    %3855 = vmatpush1.msra.mxu0 0.0
    %3856 = vmatprep.subr.mxu0 0.0
    %3857 = vmatpush1.msra.mxu0 0.0
    %3858 = vmatprep.mubr.f32.mxu0 0.0
    %3859 = vmatmul.mubr.f32.gmra.mrb[0].mxu0 %v3783
    %v3860 = vpop.f32.mrb[0].mxu0
    %v3861 = vadd.f32 0.0, %v3860
    %v3862 = vpop.f32.mrb[0].mxu0
    %3863 = vmatprep.mubr.f32.mxu0 0.0
    %3864 = vmatmul.mubr.f32.gmra.mrb[0].mxu0 %v3786
    %v3865 = vpop.f32.mrb[0].mxu0
    %v3866 = vadd.f32 0.0, %v3865
    %v3867 = vpop.f32.mrb[0].mxu0
    %3868 = vmatprep.mubr.f32.mxu0 0.0
    %3869 = vmatmul.mubr.f32.gmra.mrb[0].mxu0 %v3789
    %v3870 = vpop.f32.mrb[0].mxu0
    %v3871 = vadd.f32 0.0, %v3870
    %v3872 = vpop.f32.mrb[0].mxu0
    %3873 = vmatprep.mubr.f32.mxu0 0.0
    %3874 = vmatmul.mubr.f32.gmra.mrb[0].mxu0 %v3792
    %v3875 = vpop.f32.mrb[0].mxu0
    %v3876 = vadd.f32 0.0, %v3875
    %v3877 = vpop.f32.mrb[0].mxu0
    %3878 = vdwg.mxu0
    %s3879 = scalar_lea.vmem %s71, 8
    %v3880 = vld [vmem:[%s3879] sm:$0xff]
    %3881 = vmatprep.subr.mxu0 0.0
    %3882 = vmatpush1.msra.mxu0 %v3861
    %3883 = vmatprep.subr.mxu0 0.0
    %3884 = vmatpush1.msra.mxu0 %v3866
    %3885 = vmatprep.subr.mxu0 0.0
    %3886 = vmatpush1.msra.mxu0 %v3871
    %3887 = vmatprep.subr.mxu0 0.0
    %3888 = vmatpush1.msra.mxu0 %v3876
    %3889 = vmatprep.subr.mxu0 0.0
    %3890 = vmatpush1.msra.mxu0 0.0
    %3891 = vmatprep.subr.mxu0 0.0
    %3892 = vmatpush1.msra.mxu0 0.0
    %3893 = vmatprep.subr.mxu0 0.0
    %3894 = vmatpush1.msra.mxu0 0.0
    %3895 = vmatprep.subr.mxu0 0.0
    %3896 = vmatpush1.msra.mxu0 0.0
    %3897 = vmatprep.subr.mxu0 0.0
    %3898 = vmatpush1.msra.mxu0 0.0
    %3899 = vmatprep.subr.mxu0 0.0
    %3900 = vmatpush1.msra.mxu0 0.0
    %3901 = vmatprep.subr.mxu0 0.0
    %3902 = vmatpush1.msra.mxu0 0.0
    %3903 = vmatprep.subr.mxu0 0.0
    %3904 = vmatpush1.msra.mxu0 0.0
    %3905 = vmatprep.subr.mxu0 0.0
    %3906 = vmatpush1.msra.mxu0 0.0
    %3907 = vmatprep.subr.mxu0 0.0
    %3908 = vmatpush1.msra.mxu0 0.0
    %3909 = vmatprep.subr.mxu0 0.0
    %3910 = vmatpush1.msra.mxu0 0.0
    %3911 = vmatprep.subr.mxu0 0.0
    %3912 = vmatpush1.msra.mxu0 0.0
    %3913 = vmatprep.subr.mxu0 0.0
    %3914 = vmatpush1.msra.mxu0 0.0
    %3915 = vmatprep.subr.mxu0 0.0
    %3916 = vmatpush1.msra.mxu0 0.0
    %3917 = vmatprep.subr.mxu0 0.0
    %3918 = vmatpush1.msra.mxu0 0.0
    %3919 = vmatprep.subr.mxu0 0.0
    %3920 = vmatpush1.msra.mxu0 0.0
    %3921 = vmatprep.subr.mxu0 0.0
    %3922 = vmatpush1.msra.mxu0 0.0
    %3923 = vmatprep.subr.mxu0 0.0
    %3924 = vmatpush1.msra.mxu0 0.0
    %3925 = vmatprep.subr.mxu0 0.0
    %3926 = vmatpush1.msra.mxu0 0.0
    %3927 = vmatprep.subr.mxu0 0.0
    %3928 = vmatpush1.msra.mxu0 0.0
    %3929 = vmatprep.subr.mxu0 0.0
    %3930 = vmatpush1.msra.mxu0 0.0
    %3931 = vmatprep.subr.mxu0 0.0
    %3932 = vmatpush1.msra.mxu0 0.0
    %3933 = vmatprep.subr.mxu0 0.0
    %3934 = vmatpush1.msra.mxu0 0.0
    %3935 = vmatprep.subr.mxu0 0.0
    %3936 = vmatpush1.msra.mxu0 0.0
    %3937 = vmatprep.subr.mxu0 0.0
    %3938 = vmatpush1.msra.mxu0 0.0
    %3939 = vmatprep.subr.mxu0 0.0
    %3940 = vmatpush1.msra.mxu0 0.0
    %3941 = vmatprep.subr.mxu0 0.0
    %3942 = vmatpush1.msra.mxu0 0.0
    %3943 = vmatprep.subr.mxu0 0.0
    %3944 = vmatpush1.msra.mxu0 0.0
    %3945 = vmatprep.mubr.f32.mxu0 0.0
    %3946 = vmatmul.mubr.f32.gmra.mrb[0].mxu0 %v244
    %v3947 = vpop.f32.mrb[0].mxu0
    %v3948 = vadd.f32 0.0, %v3947
    %v3949 = vpop.f32.mrb[0].mxu0
    %3950 = vmatprep.mubr.f32.mxu0 0.0
    %3951 = vmatmul.mubr.f32.gmra.mrb[0].mxu0 %v247
    %v3952 = vpop.f32.mrb[0].mxu0
    %v3953 = vadd.f32 0.0, %v3952
    %v3954 = vpop.f32.mrb[0].mxu0
    %3955 = vmatprep.mubr.f32.mxu0 0.0
    %3956 = vmatmul.mubr.f32.gmra.mrb[0].mxu0 %v250
    %v3957 = vpop.f32.mrb[0].mxu0
    %v3958 = vadd.f32 0.0, %v3957
    %v3959 = vpop.f32.mrb[0].mxu0
    %3960 = vmatprep.mubr.f32.mxu0 0.0
    %3961 = vmatmul.mubr.f32.gmra.mrb[0].mxu0 %v253
    %v3962 = vpop.f32.mrb[0].mxu0
    %v3963 = vadd.f32 0.0, %v3962
    %v3964 = vpop.f32.mrb[0].mxu0
    %3965 = vdwg.mxu0
    %v3966 = vld [vmem:[%s71] sm:$0xff]
    %v3968 = vsel %vm341, %v3948, 0
    %v3971 = vsel %vm341, %v3953, 0
    %v3974 = vsel %vm341, %v3958, 0
    %v3977 = vsel %vm341, %v3963, 0
    %3979 = vmatprep.subr.mxu0 0.0
    %3980 = vmatpush1.msra.mxu0 %v3966
    %3981 = vmatprep.subr.mxu0 0.0
    %3982 = vmatpush1.msra.mxu0 0.0
    %3983 = vmatprep.subr.mxu0 0.0
    %3984 = vmatpush1.msra.mxu0 0.0
    %3985 = vmatprep.subr.mxu0 0.0
    %3986 = vmatpush1.msra.mxu0 0.0
    %3987 = vmatprep.subr.mxu0 0.0
    %3988 = vmatpush1.msra.mxu0 0.0
    %3989 = vmatprep.subr.mxu0 0.0
    %3990 = vmatpush1.msra.mxu0 0.0
    %3991 = vmatprep.subr.mxu0 0.0
    %3992 = vmatpush1.msra.mxu0 0.0
    %3993 = vmatprep.subr.mxu0 0.0
    %3994 = vmatpush1.msra.mxu0 0.0
    %3995 = vmatprep.subr.mxu0 0.0
    %3996 = vmatpush1.msra.mxu0 0.0
    %3997 = vmatprep.subr.mxu0 0.0
    %3998 = vmatpush1.msra.mxu0 0.0
    %3999 = vmatprep.subr.mxu0 0.0
    %4000 = vmatpush1.msra.mxu0 0.0
    %4001 = vmatprep.subr.mxu0 0.0
    %4002 = vmatpush1.msra.mxu0 0.0
    %4003 = vmatprep.subr.mxu0 0.0
    %4004 = vmatpush1.msra.mxu0 0.0
    %4005 = vmatprep.subr.mxu0 0.0
    %4006 = vmatpush1.msra.mxu0 0.0
    %4007 = vmatprep.subr.mxu0 0.0
    %4008 = vmatpush1.msra.mxu0 0.0
    %4009 = vmatprep.subr.mxu0 0.0
    %4010 = vmatpush1.msra.mxu0 0.0
    %4011 = vmatprep.subr.mxu0 0.0
    %4012 = vmatpush1.msra.mxu0 0.0
    %4013 = vmatprep.subr.mxu0 0.0
    %4014 = vmatpush1.msra.mxu0 0.0
    %4015 = vmatprep.subr.mxu0 0.0
    %4016 = vmatpush1.msra.mxu0 0.0
    %4017 = vmatprep.subr.mxu0 0.0
    %4018 = vmatpush1.msra.mxu0 0.0
    %4019 = vmatprep.subr.mxu0 0.0
    %4020 = vmatpush1.msra.mxu0 0.0
    %4021 = vmatprep.subr.mxu0 0.0
    %4022 = vmatpush1.msra.mxu0 0.0
    %4023 = vmatprep.subr.mxu0 0.0
    %4024 = vmatpush1.msra.mxu0 0.0
    %4025 = vmatprep.subr.mxu0 0.0
    %4026 = vmatpush1.msra.mxu0 0.0
    %4027 = vmatprep.subr.mxu0 0.0
    %4028 = vmatpush1.msra.mxu0 0.0
    %4029 = vmatprep.subr.mxu0 0.0
    %4030 = vmatpush1.msra.mxu0 0.0
    %4031 = vmatprep.subr.mxu0 0.0
    %4032 = vmatpush1.msra.mxu0 0.0
    %4033 = vmatprep.subr.mxu0 0.0
    %4034 = vmatpush1.msra.mxu0 0.0
    %4035 = vmatprep.subr.mxu0 0.0
    %4036 = vmatpush1.msra.mxu0 0.0
    %4037 = vmatprep.subr.mxu0 0.0
    %4038 = vmatpush1.msra.mxu0 0.0
    %4039 = vmatprep.subr.mxu0 0.0
    %4040 = vmatpush1.msra.mxu0 0.0
    %4041 = vmatprep.subr.mxu0 0.0
    %4042 = vmatpush1.msra.mxu0 0.0
    %4043 = vmatprep.mubr.f32.mxu0 0.0
    %4044 = vmatmul.mubr.f32.gmra.mrb[0].mxu0 %v3968
    %v4045 = vpop.f32.mrb[0].mxu0
    %v4046 = vadd.f32 0.0, %v4045
    %v4047 = vpop.f32.mrb[0].mxu0
    %4048 = vmatprep.mubr.f32.mxu0 0.0
    %4049 = vmatmul.mubr.f32.gmra.mrb[0].mxu0 %v3971
    %v4050 = vpop.f32.mrb[0].mxu0
    %v4051 = vadd.f32 0.0, %v4050
    %v4052 = vpop.f32.mrb[0].mxu0
    %4053 = vmatprep.mubr.f32.mxu0 0.0
    %4054 = vmatmul.mubr.f32.gmra.mrb[0].mxu0 %v3974
    %v4055 = vpop.f32.mrb[0].mxu0
    %v4056 = vadd.f32 0.0, %v4055
    %v4057 = vpop.f32.mrb[0].mxu0
    %4058 = vmatprep.mubr.f32.mxu0 0.0
    %4059 = vmatmul.mubr.f32.gmra.mrb[0].mxu0 %v3977
    %v4060 = vpop.f32.mrb[0].mxu0
    %v4061 = vadd.f32 0.0, %v4060
    %v4062 = vpop.f32.mrb[0].mxu0
    %4063 = vdwg.mxu0
    %v4065 = vsel %vm341, %v3861, 0
    %v4068 = vsel %vm341, %v3866, 0
    %v4071 = vsel %vm341, %v3871, 0
    %v4074 = vsel %vm341, %v3876, 0
    %4076 = vmatprep.subr.mxu0 0.0
    %4077 = vmatpush1.msra.mxu0 %v3880
    %4078 = vmatprep.subr.mxu0 0.0
    %4079 = vmatpush1.msra.mxu0 0.0
    %4080 = vmatprep.subr.mxu0 0.0
    %4081 = vmatpush1.msra.mxu0 0.0
    %4082 = vmatprep.subr.mxu0 0.0
    %4083 = vmatpush1.msra.mxu0 0.0
    %4084 = vmatprep.subr.mxu0 0.0
    %4085 = vmatpush1.msra.mxu0 0.0
    %4086 = vmatprep.subr.mxu0 0.0
    %4087 = vmatpush1.msra.mxu0 0.0
    %4088 = vmatprep.subr.mxu0 0.0
    %4089 = vmatpush1.msra.mxu0 0.0
    %4090 = vmatprep.subr.mxu0 0.0
    %4091 = vmatpush1.msra.mxu0 0.0
    %4092 = vmatprep.subr.mxu0 0.0
    %4093 = vmatpush1.msra.mxu0 0.0
    %4094 = vmatprep.subr.mxu0 0.0
    %4095 = vmatpush1.msra.mxu0 0.0
    %4096 = vmatprep.subr.mxu0 0.0
    %4097 = vmatpush1.msra.mxu0 0.0
    %4098 = vmatprep.subr.mxu0 0.0
    %4099 = vmatpush1.msra.mxu0 0.0
    %4100 = vmatprep.subr.mxu0 0.0
    %4101 = vmatpush1.msra.mxu0 0.0
    %4102 = vmatprep.subr.mxu0 0.0
    %4103 = vmatpush1.msra.mxu0 0.0
    %4104 = vmatprep.subr.mxu0 0.0
    %4105 = vmatpush1.msra.mxu0 0.0
    %4106 = vmatprep.subr.mxu0 0.0
    %4107 = vmatpush1.msra.mxu0 0.0
    %4108 = vmatprep.subr.mxu0 0.0
    %4109 = vmatpush1.msra.mxu0 0.0
    %4110 = vmatprep.subr.mxu0 0.0
    %4111 = vmatpush1.msra.mxu0 0.0
    %4112 = vmatprep.subr.mxu0 0.0
    %4113 = vmatpush1.msra.mxu0 0.0
    %4114 = vmatprep.subr.mxu0 0.0
    %4115 = vmatpush1.msra.mxu0 0.0
    %4116 = vmatprep.subr.mxu0 0.0
    %4117 = vmatpush1.msra.mxu0 0.0
    %4118 = vmatprep.subr.mxu0 0.0
    %4119 = vmatpush1.msra.mxu0 0.0
    %4120 = vmatprep.subr.mxu0 0.0
    %4121 = vmatpush1.msra.mxu0 0.0
    %4122 = vmatprep.subr.mxu0 0.0
    %4123 = vmatpush1.msra.mxu0 0.0
    %4124 = vmatprep.subr.mxu0 0.0
    %4125 = vmatpush1.msra.mxu0 0.0
    %4126 = vmatprep.subr.mxu0 0.0
    %4127 = vmatpush1.msra.mxu0 0.0
    %4128 = vmatprep.subr.mxu0 0.0
    %4129 = vmatpush1.msra.mxu0 0.0
    %4130 = vmatprep.subr.mxu0 0.0
    %4131 = vmatpush1.msra.mxu0 0.0
    %4132 = vmatprep.subr.mxu0 0.0
    %4133 = vmatpush1.msra.mxu0 0.0
    %4134 = vmatprep.subr.mxu0 0.0
    %4135 = vmatpush1.msra.mxu0 0.0
    %4136 = vmatprep.subr.mxu0 0.0
    %4137 = vmatpush1.msra.mxu0 0.0
    %4138 = vmatprep.subr.mxu0 0.0
    %4139 = vmatpush1.msra.mxu0 0.0
    %4140 = vmatprep.mubr.f32.mxu0 0.0
    %4141 = vmatmul.mubr.f32.gmra.mrb[0].mxu0 %v4065
    %v4142 = vpop.f32.mrb[0].mxu0
    %v4143 = vadd.f32 %v4046, %v4142
    %v4144 = vpop.f32.mrb[0].mxu0
    %4145 = vmatprep.mubr.f32.mxu0 0.0
    %4146 = vmatmul.mubr.f32.gmra.mrb[0].mxu0 %v4068
    %v4147 = vpop.f32.mrb[0].mxu0
    %v4148 = vadd.f32 %v4051, %v4147
    %v4149 = vpop.f32.mrb[0].mxu0
    %4150 = vmatprep.mubr.f32.mxu0 0.0
    %4151 = vmatmul.mubr.f32.gmra.mrb[0].mxu0 %v4071
    %v4152 = vpop.f32.mrb[0].mxu0
    %v4153 = vadd.f32 %v4056, %v4152
    %v4154 = vpop.f32.mrb[0].mxu0
    %4155 = vmatprep.mubr.f32.mxu0 0.0
    %4156 = vmatmul.mubr.f32.gmra.mrb[0].mxu0 %v4074
    %v4157 = vpop.f32.mrb[0].mxu0
    %v4158 = vadd.f32 %v4061, %v4157
    %v4159 = vpop.f32.mrb[0].mxu0
    %4160 = vdwg.mxu0
    %4161 = vmatprep.subr.mxu0 0.0
    %4162 = vmatpush1.msra.mxu0 %v3861
    %4163 = vmatprep.subr.mxu0 0.0
    %4164 = vmatpush1.msra.mxu0 %v3866
    %4165 = vmatprep.subr.mxu0 0.0
    %4166 = vmatpush1.msra.mxu0 %v3871
    %4167 = vmatprep.subr.mxu0 0.0
    %4168 = vmatpush1.msra.mxu0 %v3876
    %4169 = vmatprep.subr.mxu0 0.0
    %4170 = vmatpush1.msra.mxu0 0.0
    %4171 = vmatprep.subr.mxu0 0.0
    %4172 = vmatpush1.msra.mxu0 0.0
    %4173 = vmatprep.subr.mxu0 0.0
    %4174 = vmatpush1.msra.mxu0 0.0
    %4175 = vmatprep.subr.mxu0 0.0
    %4176 = vmatpush1.msra.mxu0 0.0
    %4177 = vmatprep.subr.mxu0 0.0
    %4178 = vmatpush1.msra.mxu0 0.0
    %4179 = vmatprep.subr.mxu0 0.0
    %4180 = vmatpush1.msra.mxu0 0.0
    %4181 = vmatprep.subr.mxu0 0.0
    %4182 = vmatpush1.msra.mxu0 0.0
    %4183 = vmatprep.subr.mxu0 0.0
    %4184 = vmatpush1.msra.mxu0 0.0
    %4185 = vmatprep.subr.mxu0 0.0
    %4186 = vmatpush1.msra.mxu0 0.0
    %4187 = vmatprep.subr.mxu0 0.0
    %4188 = vmatpush1.msra.mxu0 0.0
    %4189 = vmatprep.subr.mxu0 0.0
    %4190 = vmatpush1.msra.mxu0 0.0
    %4191 = vmatprep.subr.mxu0 0.0
    %4192 = vmatpush1.msra.mxu0 0.0
    %4193 = vmatprep.subr.mxu0 0.0
    %4194 = vmatpush1.msra.mxu0 0.0
    %4195 = vmatprep.subr.mxu0 0.0
    %4196 = vmatpush1.msra.mxu0 0.0
    %4197 = vmatprep.subr.mxu0 0.0
    %4198 = vmatpush1.msra.mxu0 0.0
    %4199 = vmatprep.subr.mxu0 0.0
    %4200 = vmatpush1.msra.mxu0 0.0
    %4201 = vmatprep.subr.mxu0 0.0
    %4202 = vmatpush1.msra.mxu0 0.0
    %4203 = vmatprep.subr.mxu0 0.0
    %4204 = vmatpush1.msra.mxu0 0.0
    %4205 = vmatprep.subr.mxu0 0.0
    %4206 = vmatpush1.msra.mxu0 0.0
    %4207 = vmatprep.subr.mxu0 0.0
    %4208 = vmatpush1.msra.mxu0 0.0
    %4209 = vmatprep.subr.mxu0 0.0
    %4210 = vmatpush1.msra.mxu0 0.0
    %4211 = vmatprep.subr.mxu0 0.0
    %4212 = vmatpush1.msra.mxu0 0.0
    %4213 = vmatprep.subr.mxu0 0.0
    %4214 = vmatpush1.msra.mxu0 0.0
    %4215 = vmatprep.subr.mxu0 0.0
    %4216 = vmatpush1.msra.mxu0 0.0
    %4217 = vmatprep.subr.mxu0 0.0
    %4218 = vmatpush1.msra.mxu0 0.0
    %4219 = vmatprep.subr.mxu0 0.0
    %4220 = vmatpush1.msra.mxu0 0.0
    %4221 = vmatprep.subr.mxu0 0.0
    %4222 = vmatpush1.msra.mxu0 0.0
    %4223 = vmatprep.subr.mxu0 0.0
    %4224 = vmatpush1.msra.mxu0 0.0
    %4225 = vmatprep.mubr.f32.mxu0 0.0
    %4226 = vmatmul.mubr.f32.gmra.mrb[0].mxu0 %v541
    %v4227 = vpop.f32.mrb[0].mxu0
    %v4228 = vadd.f32 0.0, %v4227
    %v4229 = vpop.f32.mrb[0].mxu0
    %4230 = vmatprep.mubr.f32.mxu0 0.0
    %4231 = vmatmul.mubr.f32.gmra.mrb[0].mxu0 %v544
    %v4232 = vpop.f32.mrb[0].mxu0
    %v4233 = vadd.f32 0.0, %v4232
    %v4234 = vpop.f32.mrb[0].mxu0
    %4235 = vmatprep.mubr.f32.mxu0 0.0
    %4236 = vmatmul.mubr.f32.gmra.mrb[0].mxu0 %v547
    %v4237 = vpop.f32.mrb[0].mxu0
    %v4238 = vadd.f32 0.0, %v4237
    %v4239 = vpop.f32.mrb[0].mxu0
    %4240 = vmatprep.mubr.f32.mxu0 0.0
    %4241 = vmatmul.mubr.f32.gmra.mrb[0].mxu0 %v550
    %v4242 = vpop.f32.mrb[0].mxu0
    %v4243 = vadd.f32 0.0, %v4242
    %v4244 = vpop.f32.mrb[0].mxu0
    %4245 = vdwg.mxu0
    %s4246 = scalar_lea.vmem %s71, 16
    %v4247 = vld [vmem:[%s4246] sm:$0xff]
    %v4249 = vsel %vm341, %v4228, 0
    %v4252 = vsel %vm341, %v4233, 0
    %v4255 = vsel %vm341, %v4238, 0
    %v4258 = vsel %vm341, %v4243, 0
    %4260 = vmatprep.subr.mxu0 0.0
    %4261 = vmatpush1.msra.mxu0 %v4247
    %4262 = vmatprep.subr.mxu0 0.0
    %4263 = vmatpush1.msra.mxu0 0.0
    %4264 = vmatprep.subr.mxu0 0.0
    %4265 = vmatpush1.msra.mxu0 0.0
    %4266 = vmatprep.subr.mxu0 0.0
    %4267 = vmatpush1.msra.mxu0 0.0
    %4268 = vmatprep.subr.mxu0 0.0
    %4269 = vmatpush1.msra.mxu0 0.0
    %4270 = vmatprep.subr.mxu0 0.0
    %4271 = vmatpush1.msra.mxu0 0.0
    %4272 = vmatprep.subr.mxu0 0.0
    %4273 = vmatpush1.msra.mxu0 0.0
    %4274 = vmatprep.subr.mxu0 0.0
    %4275 = vmatpush1.msra.mxu0 0.0
    %4276 = vmatprep.subr.mxu0 0.0
    %4277 = vmatpush1.msra.mxu0 0.0
    %4278 = vmatprep.subr.mxu0 0.0
    %4279 = vmatpush1.msra.mxu0 0.0
    %4280 = vmatprep.subr.mxu0 0.0
    %4281 = vmatpush1.msra.mxu0 0.0
    %4282 = vmatprep.subr.mxu0 0.0
    %4283 = vmatpush1.msra.mxu0 0.0
    %4284 = vmatprep.subr.mxu0 0.0
    %4285 = vmatpush1.msra.mxu0 0.0
    %4286 = vmatprep.subr.mxu0 0.0
    %4287 = vmatpush1.msra.mxu0 0.0
    %4288 = vmatprep.subr.mxu0 0.0
    %4289 = vmatpush1.msra.mxu0 0.0
    %4290 = vmatprep.subr.mxu0 0.0
    %4291 = vmatpush1.msra.mxu0 0.0
    %4292 = vmatprep.subr.mxu0 0.0
    %4293 = vmatpush1.msra.mxu0 0.0
    %4294 = vmatprep.subr.mxu0 0.0
    %4295 = vmatpush1.msra.mxu0 0.0
    %4296 = vmatprep.subr.mxu0 0.0
    %4297 = vmatpush1.msra.mxu0 0.0
    %4298 = vmatprep.subr.mxu0 0.0
    %4299 = vmatpush1.msra.mxu0 0.0
    %4300 = vmatprep.subr.mxu0 0.0
    %4301 = vmatpush1.msra.mxu0 0.0
    %4302 = vmatprep.subr.mxu0 0.0
    %4303 = vmatpush1.msra.mxu0 0.0
    %4304 = vmatprep.subr.mxu0 0.0
    %4305 = vmatpush1.msra.mxu0 0.0
    %4306 = vmatprep.subr.mxu0 0.0
    %4307 = vmatpush1.msra.mxu0 0.0
    %4308 = vmatprep.subr.mxu0 0.0
    %4309 = vmatpush1.msra.mxu0 0.0
    %4310 = vmatprep.subr.mxu0 0.0
    %4311 = vmatpush1.msra.mxu0 0.0
    %4312 = vmatprep.subr.mxu0 0.0
    %4313 = vmatpush1.msra.mxu0 0.0
    %4314 = vmatprep.subr.mxu0 0.0
    %4315 = vmatpush1.msra.mxu0 0.0
    %4316 = vmatprep.subr.mxu0 0.0
    %4317 = vmatpush1.msra.mxu0 0.0
    %4318 = vmatprep.subr.mxu0 0.0
    %4319 = vmatpush1.msra.mxu0 0.0
    %4320 = vmatprep.subr.mxu0 0.0
    %4321 = vmatpush1.msra.mxu0 0.0
    %4322 = vmatprep.subr.mxu0 0.0
    %4323 = vmatpush1.msra.mxu0 0.0
    %4324 = vmatprep.mubr.f32.mxu0 0.0
    %4325 = vmatmul.mubr.f32.gmra.mrb[0].mxu0 %v4249
    %v4326 = vpop.f32.mrb[0].mxu0
    %v4327 = vadd.f32 0.0, %v4326
    %v4328 = vpop.f32.mrb[0].mxu0
    %4329 = vmatprep.mubr.f32.mxu0 0.0
    %4330 = vmatmul.mubr.f32.gmra.mrb[0].mxu0 %v4252
    %v4331 = vpop.f32.mrb[0].mxu0
    %v4332 = vadd.f32 0.0, %v4331
    %v4333 = vpop.f32.mrb[0].mxu0
    %4334 = vmatprep.mubr.f32.mxu0 0.0
    %4335 = vmatmul.mubr.f32.gmra.mrb[0].mxu0 %v4255
    %v4336 = vpop.f32.mrb[0].mxu0
    %v4337 = vadd.f32 0.0, %v4336
    %v4338 = vpop.f32.mrb[0].mxu0
    %4339 = vmatprep.mubr.f32.mxu0 0.0
    %4340 = vmatmul.mubr.f32.gmra.mrb[0].mxu0 %v4258
    %v4341 = vpop.f32.mrb[0].mxu0
    %v4342 = vadd.f32 0.0, %v4341
    %v4343 = vpop.f32.mrb[0].mxu0
    %4344 = vdwg.mxu0
    %v4345 = vadd.f32 %v4143, %v4327
    %v4346 = vadd.f32 %v4148, %v4332
    %v4347 = vadd.f32 %v4153, %v4337
    %v4348 = vadd.f32 %v4158, %v4342
    %v4349 = vld [vmem:[%s73] sm:$0x1]
    %v4351 = vlaneseq
    %v4352 = vshrl.u32 %v4351, 7
    %v4353 = vsub.s32 0, %v4352
    %v4354 = vrot.slane %v4349, %v4353
    %v4356 = vadd.f32 %v4345, %v4354
    %v4357 = vadd.f32 %v4346, %v4354
    %v4358 = vadd.f32 %v4347, %v4354
    %v4359 = vadd.f32 %v4348, %v4354
    %v4360 = vld [vmem:[%s75] sm:$0xff]
    %v4361 = vld [vmem:[%s77] sm:$0x1]
    %v4363 = vlaneseq
    %v4364 = vshrl.u32 %v4363, 7
    %v4365 = vsub.s32 0, %v4364
    %v4366 = vrot.slane %v4361, %v4365
    %v4369 = vsel %vm341, %v4356, 0
    %v4372 = vsel %vm341, %v4357, 0
    %v4375 = vsel %vm341, %v4358, 0
    %v4378 = vsel %vm341, %v4359, 0
    %4380 = vmatprep.subr.mxu0 0.0
    %4381 = vmatpush1.msra.mxu0 %v4360
    %4382 = vmatprep.subr.mxu0 0.0
    %4383 = vmatpush1.msra.mxu0 0.0
    %4384 = vmatprep.subr.mxu0 0.0
    %4385 = vmatpush1.msra.mxu0 0.0
    %4386 = vmatprep.subr.mxu0 0.0
    %4387 = vmatpush1.msra.mxu0 0.0
    %4388 = vmatprep.subr.mxu0 0.0
    %4389 = vmatpush1.msra.mxu0 0.0
    %4390 = vmatprep.subr.mxu0 0.0
    %4391 = vmatpush1.msra.mxu0 0.0
    %4392 = vmatprep.subr.mxu0 0.0
    %4393 = vmatpush1.msra.mxu0 0.0
    %4394 = vmatprep.subr.mxu0 0.0
    %4395 = vmatpush1.msra.mxu0 0.0
    %4396 = vmatprep.subr.mxu0 0.0
    %4397 = vmatpush1.msra.mxu0 0.0
    %4398 = vmatprep.subr.mxu0 0.0
    %4399 = vmatpush1.msra.mxu0 0.0
    %4400 = vmatprep.subr.mxu0 0.0
    %4401 = vmatpush1.msra.mxu0 0.0
    %4402 = vmatprep.subr.mxu0 0.0
    %4403 = vmatpush1.msra.mxu0 0.0
    %4404 = vmatprep.subr.mxu0 0.0
    %4405 = vmatpush1.msra.mxu0 0.0
    %4406 = vmatprep.subr.mxu0 0.0
    %4407 = vmatpush1.msra.mxu0 0.0
    %4408 = vmatprep.subr.mxu0 0.0
    %4409 = vmatpush1.msra.mxu0 0.0
    %4410 = vmatprep.subr.mxu0 0.0
    %4411 = vmatpush1.msra.mxu0 0.0
    %4412 = vmatprep.subr.mxu0 0.0
    %4413 = vmatpush1.msra.mxu0 0.0
    %4414 = vmatprep.subr.mxu0 0.0
    %4415 = vmatpush1.msra.mxu0 0.0
    %4416 = vmatprep.subr.mxu0 0.0
    %4417 = vmatpush1.msra.mxu0 0.0
    %4418 = vmatprep.subr.mxu0 0.0
    %4419 = vmatpush1.msra.mxu0 0.0
    %4420 = vmatprep.subr.mxu0 0.0
    %4421 = vmatpush1.msra.mxu0 0.0
    %4422 = vmatprep.subr.mxu0 0.0
    %4423 = vmatpush1.msra.mxu0 0.0
    %4424 = vmatprep.subr.mxu0 0.0
    %4425 = vmatpush1.msra.mxu0 0.0
    %4426 = vmatprep.subr.mxu0 0.0
    %4427 = vmatpush1.msra.mxu0 0.0
    %4428 = vmatprep.subr.mxu0 0.0
    %4429 = vmatpush1.msra.mxu0 0.0
    %4430 = vmatprep.subr.mxu0 0.0
    %4431 = vmatpush1.msra.mxu0 0.0
    %4432 = vmatprep.subr.mxu0 0.0
    %4433 = vmatpush1.msra.mxu0 0.0
    %4434 = vmatprep.subr.mxu0 0.0
    %4435 = vmatpush1.msra.mxu0 0.0
    %4436 = vmatprep.subr.mxu0 0.0
    %4437 = vmatpush1.msra.mxu0 0.0
    %4438 = vmatprep.subr.mxu0 0.0
    %4439 = vmatpush1.msra.mxu0 0.0
    %4440 = vmatprep.subr.mxu0 0.0
    %4441 = vmatpush1.msra.mxu0 0.0
    %4442 = vmatprep.subr.mxu0 0.0
    %4443 = vmatpush1.msra.mxu0 0.0
    %4444 = vmatprep.mubr.f32.mxu0 0.0
    %4445 = vmatmul.mubr.f32.gmra.mrb[0].mxu0 %v4369
    %v4446 = vpop.f32.mrb[0].mxu0
    %v4447 = vadd.f32 %v4366, %v4446
    %v4448 = vpop.f32.mrb[0].mxu0
    %4449 = vmatprep.mubr.f32.mxu0 0.0
    %4450 = vmatmul.mubr.f32.gmra.mrb[0].mxu0 %v4372
    %v4451 = vpop.f32.mrb[0].mxu0
    %v4452 = vadd.f32 %v4366, %v4451
    %v4453 = vpop.f32.mrb[0].mxu0
    %4454 = vmatprep.mubr.f32.mxu0 0.0
    %4455 = vmatmul.mubr.f32.gmra.mrb[0].mxu0 %v4375
    %v4456 = vpop.f32.mrb[0].mxu0
    %v4457 = vadd.f32 %v4366, %v4456
    %v4458 = vpop.f32.mrb[0].mxu0
    %4459 = vmatprep.mubr.f32.mxu0 0.0
    %4460 = vmatmul.mubr.f32.gmra.mrb[0].mxu0 %v4378
    %v4461 = vpop.f32.mrb[0].mxu0
    %v4462 = vadd.f32 %v4366, %v4461
    %v4463 = vpop.f32.mrb[0].mxu0
    %4464 = vdwg.mxu0
    %v4465 = vsel %vm2772, %v4447, -inf
    %4466 = vmax.xlane.f32.xlu0 %v4465
    %v4467 = vpop.xlane.xlu0 %4466
    %v4468 = vsel %vm2772, %v4452, -inf
    %4469 = vmax.xlane.f32.xlu0 %v4468
    %v4470 = vpop.xlane.xlu0 %4469
    %v4471 = vsel %vm2772, %v4457, -inf
    %4472 = vmax.xlane.f32.xlu0 %v4471
    %v4473 = vpop.xlane.xlu0 %4472
    %v4474 = vsel %vm2772, %v4462, -inf
    %4475 = vmax.xlane.f32.xlu0 %v4474
    %v4476 = vpop.xlane.xlu0 %4475
    %v4477 = vsub.f32 %v4447, %v4467
    %v4478 = vsub.f32 %v4452, %v4470
    %v4479 = vsub.f32 %v4457, %v4473
    %v4480 = vsub.f32 %v4462, %v4476
    %v4481 = vmul.f32 %v4477, 1.442695
    %v4482 = vpow.pop %v4481
    %v4483 = vmul.f32 %v4478, 1.442695
    %v4484 = vpow.pop %v4483
    %v4485 = vmul.f32 %v4479, 1.442695
    %v4486 = vpow.pop %v4485
    %v4487 = vmul.f32 %v4480, 1.442695
    %v4488 = vpow.pop %v4487
    %v4489 = vsel %vm2772, %v4482, 0.0
    %4490 = vadd.xlane.f32.xlu0 %v4489
    %v4491 = vpop.xlane.xlu0 %4490
    %v4492 = vsel %vm2772, %v4484, 0.0
    %4493 = vadd.xlane.f32.xlu0 %v4492
    %v4494 = vpop.xlane.xlu0 %4493
    %v4495 = vsel %vm2772, %v4486, 0.0
    %4496 = vadd.xlane.f32.xlu0 %v4495
    %v4497 = vpop.xlane.xlu0 %4496
    %v4498 = vsel %vm2772, %v4488, 0.0
    %4499 = vadd.xlane.f32.xlu0 %v4498
    %v4500 = vpop.xlane.xlu0 %4499
    %v4501 = vrcp.pop %v4491
    %v4502 = vrcp.pop %v4494
    %v4503 = vrcp.pop %v4497
    %v4504 = vrcp.pop %v4500
    %v4505 = vmul.f32 %v4482, %v4501
    %v4506 = vmul.f32 %v4484, %v4502
    %v4507 = vmul.f32 %v4486, %v4503
    %v4508 = vmul.f32 %v4488, %v4504
    %v4509 = vadd.f32 %v3774, %v4505
    %v4510 = vadd.f32 %v3775, %v4506
    %v4511 = vadd.f32 %v3776, %v4507
    %v4512 = vadd.f32 %v3777, %v4508
    %v4513 = vmul.f32 %v4509, 0.25
    %v4514 = vmul.f32 %v4510, 0.25
    %v4515 = vmul.f32 %v4511, 0.25
    %v4516 = vmul.f32 %v4512, 0.25
    %4517 = vst.msk [vmem:[%s79] sm:$0xff] %vm2772, %v4513
    %4518 = vst.msk [vmem:[%s79 + $0x8] sm:$0xff] %vm2772, %v4514
    %4519 = vst.msk [vmem:[%s79 + $0x10] sm:$0xff] %vm2772, %v4515
    %4520 = vst.msk [vmem:[%s79 + $0x18] sm:$0xff] %vm2772, %v4516
    // Predicated region
    $region182: #{tcfpn_forward.1} parent=1 // pred_check
      _
    $region183: #{tcfpn_forward.1} parent=1 // pred_check_branch
      %4522 = sbr.rel (0) target = $region185
    $region184: #{tcfpn_forward.1} parent=1 // pred_region
      _
    $region185: #{tcfpn_forward.1} parent=1 // pred_fallthru
      _
    // Predicated region
    $region186: #{tcfpn_forward.1} parent=1 // pred_check
      _
    $region187: #{tcfpn_forward.1} parent=1 // pred_check_branch
      %4524 = sbr.rel (0) target = $region189
    $region188: #{tcfpn_forward.1} parent=1 // pred_region
      _
    $region189: #{tcfpn_forward.1} parent=1 // pred_fallthru
      _
    %4525 = vsyncpa [#allocation3], 1
    %4526 = vsyncpa [#allocation5], 1
    %4527 = vsyncpa [#allocation8], 1
    %4528 = vsyncpa [#allocation11], 1

</llo_original>
